<compile_context>
chip_gen: v5e
topology: v5e:2x2
jax: 0.10.0
libtpu: 0.0.40
codegen_flags: <defaults>
</compile_context>

<pallas_src>
import functools

import jax
import jax.numpy as jnp
from jax import lax
from jax.experimental import pallas as pl
from jax.experimental.pallas import tpu as pltpu

_LEAKY_SLOPE = 0.1                  # supar convention (nn.LeakyReLU default is 0.01)
_LANE = 128
_N_TRI = 9                          # 3 triaffine scorers x 3 factors
_TRI_NAMES = (("sib", "a"), ("sib", "b"), ("sib", "c"),
              ("grd1", "a"), ("grd1", "b"), ("grd1", "c"),
              ("grd2", "a"), ("grd2", "b"), ("grd2", "c"))


def _round_up(x, m):
    return ((x + m - 1) // m) * m


def _vmem_limit_bytes():
    """~3/4 of physical VMEM, capped at 100 MiB (≈96 MiB v5e/v6e, ≈48 MiB v7x)."""
    phys = 64 * 1024 * 1024
    try:
        info = pltpu.get_tpu_info()
        phys = int(getattr(info, "vmem_capacity_bytes", phys))
    except Exception:
        pass
    return min(100 * 1024 * 1024, (phys * 3) // 4)


def _pick_tm(m, tm):
    """Pick an M-tile: <= m, divisible by 8 (or full), and >=2 grid steps if possible."""
    tm = min(tm, m)
    if m > 8 and pl.cdiv(m, tm) < 2:          # give both v7x TensorCores work
        tm = _round_up(pl.cdiv(m, 2), 8)
    if tm != m and tm % 8 != 0:
        tm = _round_up(tm, 8)
    return tm


def _invariant_spec(shape, index_map, single_buffer):
    """BlockSpec for a grid-invariant operand; single-buffer it when supported."""
    if single_buffer:
        try:
            return pl.BlockSpec(shape, index_map, pipeline_mode=pl.Buffered(1))
        except Exception:      # pipeline_mode/Buffered unavailable on this jax
            pass
    return pl.BlockSpec(shape, index_map)


# ----------------------------------------------------------------------------
# Kernel 1: fused MLP heads (+ triaffine rank projections), tiled over M = B*N
# ----------------------------------------------------------------------------
def _fused_mlp_kernel(x_ref, w_ref, b_ref, u_ref,
                      hrel_ref, harc_ref, stri_ref, *,
                      n_rel_cols, n_arc_cols, hp_tri, inv_tri_scale, cdt):
    x = x_ref[...].astype(cdt)                                   # in-kernel cast
    h = jnp.dot(x, w_ref[...], preferred_element_type=jnp.float32)
    h = h + b_ref[...]                                           # f32 bias (ones cols folded in)
    h = jnp.where(h > 0, h, _LEAKY_SLOPE * h)                    # LeakyReLU, f32

    # All column offsets below are multiples of 128 -> free slices (no relayout).
    hrel_ref[...] = h[:, :n_rel_cols].astype(hrel_ref.dtype)
    harc_ref[...] = h[:, n_rel_cols:n_rel_cols + n_arc_cols].astype(harc_ref.dtype)

    tri_off = n_rel_cols + n_arc_cols
    parts = []
    for f in range(_N_TRI):
        h_f = h[:, tri_off + f * hp_tri: tri_off + (f + 1) * hp_tri].astype(cdt)
        parts.append(jnp.dot(h_f, u_ref[f], preferred_element_type=jnp.float32))
    # Single lane-dense store instead of 9 narrow (rank-wide) masked stores.
    stri_ref[...] = (jnp.concatenate(parts, axis=-1) * inv_tri_scale).astype(stri_ref.dtype)


def pallas_fused_mlp(x2d, w_all, b_all, u_core, *, hp_rel, hp_arc, hp_tri, rank,
                     inv_tri_scale, compute_dtype, tm=1024,
                     single_buffer_weights=True):
    M, D = x2d.shape
    H_total = w_all.shape[1]
    tm = _pick_tm(M, tm)
    n_rel_cols, n_arc_cols = 2 * hp_rel, 2 * hp_arc

    kernel = functools.partial(
        _fused_mlp_kernel, n_rel_cols=n_rel_cols, n_arc_cols=n_arc_cols,
        hp_tri=hp_tri, inv_tri_scale=inv_tri_scale, cdt=compute_dtype)

    cbytes = jnp.dtype(compute_dtype).itemsize
    flops = 2 * M * D * H_total + 2 * M * _N_TRI * hp_tri * rank
    bytes_acc = (M * D * 4 + D * H_total * cbytes + H_total * 4
                 + _N_TRI * hp_tri * rank * cbytes
                 + M * (n_rel_cols + n_arc_cols) * cbytes + M * _N_TRI * rank * 4)

    return pl.pallas_call(
        kernel,
        out_shape=(
            jax.ShapeDtypeStruct((M, n_rel_cols), compute_dtype),
            jax.ShapeDtypeStruct((M, n_arc_cols), compute_dtype),
            jax.ShapeDtypeStruct((M, _N_TRI * rank), jnp.float32),
        ),
        grid=(pl.cdiv(M, tm),),
        in_specs=[
            pl.BlockSpec((tm, D), lambda i: (i, 0)),
            _invariant_spec((D, H_total), lambda i: (0, 0), single_buffer_weights),
            _invariant_spec((1, H_total), lambda i: (0, 0), single_buffer_weights),
            _invariant_spec((_N_TRI, hp_tri, rank), lambda i: (0, 0, 0),
                            single_buffer_weights),
        ],
        out_specs=(
            pl.BlockSpec((tm, n_rel_cols), lambda i: (i, 0)),
            pl.BlockSpec((tm, n_arc_cols), lambda i: (i, 0)),
            pl.BlockSpec((tm, _N_TRI * rank), lambda i: (i, 0)),
        ),
        compiler_params=pltpu.CompilerParams(
            dimension_semantics=("parallel",),
            vmem_limit_bytes=_vmem_limit_bytes()),
        cost_estimate=pl.CostEstimate(flops=int(flops), transcendentals=0,
                                      bytes_accessed=int(bytes_acc)),
    )(x2d, w_all, b_all, u_core)


# ----------------------------------------------------------------------------
# Kernel 2: biaffine scorer, grid = (B, n_out), output emitted as [B, O, N, N]
# ----------------------------------------------------------------------------
def _biaffine_kernel(h_ref, w_ref, o_ref, *, hp, inv_scale, cdt):
    h = h_ref[0]                          # [N, 2*Hp] (cdt), ones cols already folded in
    hx = h[:, :hp]
    hy = h[:, hp:]
    t = jnp.dot(hx, w_ref[0], preferred_element_type=jnp.float32)   # [N, Hp]
    # Single last-last contraction per grid step (hy relayout happens once).
    # TODO(synk): t is re-quantized to bf16 for the second MXU matmul; revisit
    # the numeric error at realistic H (~500) if tighter precision is needed.
    s = lax.dot_general(t.astype(cdt), hy, (((1,), (1,)), ((), ())),
                        preferred_element_type=jnp.float32)          # [N, N]
    o_ref[0, 0] = (s * inv_scale).astype(o_ref.dtype)


def pallas_biaffine(h3, w_pad, *, hp, scale, compute_dtype,
                    score_dtype=jnp.float32):
    """h3: [B, N, 2*Hp] laid out as [hx_pad | hy_pad] -> scores [B, O, N, N]."""
    B, N, two_hp = h3.shape
    n_out = w_pad.shape[0]
    kernel = functools.partial(_biaffine_kernel, hp=hp, inv_scale=1.0 / scale,
                               cdt=compute_dtype)

    cbytes = jnp.dtype(compute_dtype).itemsize
    sbytes = jnp.dtype(score_dtype).itemsize
    flops = 2 * B * n_out * (N * hp * hp + N * N * hp)
    bytes_acc = (B * N * two_hp * cbytes + B * n_out * hp * hp * cbytes
                 + B * n_out * N * N * sbytes)

    # TODO(synk): for large N also tile the query rows; for small N pack several
    # batch elements per step so the first matmul's M dim fills the MXU.
    return pl.pallas_call(
        kernel,
        out_shape=jax.ShapeDtypeStruct((B, n_out, N, N), score_dtype),
        grid=(B, n_out),
        in_specs=[
            pl.BlockSpec((1, N, two_hp), lambda b, o: (b, 0, 0)),   # constant in o -> fetched once per b
            pl.BlockSpec((1, hp, hp), lambda b, o: (o, 0, 0)),
        ],
        out_specs=pl.BlockSpec((1, 1, N, N), lambda b, o: (b, o, 0, 0)),
        compiler_params=pltpu.CompilerParams(
            dimension_semantics=("parallel", "parallel"),
            vmem_limit_bytes=_vmem_limit_bytes()),
        cost_estimate=pl.CostEstimate(flops=int(flops), transcendentals=0,
                                      bytes_accessed=int(bytes_acc)),
    )(h3, w_pad)


# ----------------------------------------------------------------------------
# Parameter construction (deterministic, synthetic)
# ----------------------------------------------------------------------------
def _init_linear(key, d_in, d_out):
    kw, kb = jax.random.split(key)
    w = jax.random.normal(kw, (d_in, d_out), jnp.float32) * (1.0 / jnp.sqrt(d_in))
    b = jax.random.normal(kb, (d_out,), jnp.float32) * 0.01
    return w, b


def init_params(key, *, input_dim, n_mlp_rel, n_mlp_arc, n_rels, rank):
    keys = jax.random.split(key, 32)
    p = {}
    p["rel_mlp_x"] = _init_linear(keys[0], input_dim, n_mlp_rel)
    p["rel_mlp_y"] = _init_linear(keys[1], input_dim, n_mlp_rel)
    p["rel_W"] = jax.random.normal(
        keys[2], (n_rels, n_mlp_rel + 1, n_mlp_rel + 1), jnp.float32) * 0.05
    p["arc_mlp_x"] = _init_linear(keys[3], input_dim, n_mlp_arc)
    p["arc_mlp_y"] = _init_linear(keys[4], input_dim, n_mlp_arc)
    p["arc_W"] = jax.random.normal(
        keys[5], (1, n_mlp_arc + 1, n_mlp_arc + 1), jnp.float32) * 0.05
    k = 6
    for name in ("sib", "grd1", "grd2"):
        for f in ("a", "b", "c"):
            p[f"{name}_mlp_{f}"] = _init_linear(keys[k], input_dim, n_mlp_rel)
            k += 1
            p[f"{name}_U_{f}"] = jax.random.normal(
                keys[k], (n_mlp_rel + 1, rank), jnp.float32) * 0.05
            k += 1
    return p


# ----------------------------------------------------------------------------
# Forward pass
# ----------------------------------------------------------------------------
def mf_second_order_dp_scorer(params, encoded_emb, *, n_mlp_rel, n_mlp_arc,
                              scaling, compute_dtype=jnp.bfloat16,
                              score_dtype=jnp.float32,
                              single_buffer_weights=True):
    """Returns the ctx dict produced by MF_SecondOrderDPScorer.forward.

    s_rel is emitted in [B, n_rels, N, N] layout (the biaffine kernel's native,
    lane-dense layout); the downstream consumer should index it as
    s_rel[b, o, i, j] instead of a permuted [B, N, N, n_rels] view.
    """
    x = encoded_emb[:, :-1]                               # [B, N, D]
    B, N, D = x.shape
    M = B * N
    x2d = x.reshape(M, D)                                 # f32; cast happens in-kernel

    rank = params["sib_U_a"].shape[1]
    rel_scale = float(n_mlp_rel) ** scaling
    arc_scale = float(n_mlp_arc) ** scaling
    tri_scale = rel_scale ** (1.0 / 3.0)

    # 128-lane padded head widths; +1 guarantees a free column for the folded
    # ones column even when n_mlp is already a multiple of 128.
    hp_rel = _round_up(n_mlp_rel + 1, _LANE)
    hp_arc = _round_up(n_mlp_arc + 1, _LANE)
    hp_tri = hp_rel

    # Pad each head to hp columns; put bias=1 at column n_mlp so that
    # LeakyReLU(1) == 1 reproduces the appended "ones" column exactly.
    def pad_head(wb, h, hp):
        w, b = wb
        wp = jnp.zeros((D, hp), jnp.float32).at[:, :h].set(w)
        bp = jnp.zeros((hp,), jnp.float32).at[:h].set(b).at[h].set(1.0)
        return wp, bp

    heads = ([("rel_mlp_x", n_mlp_rel, hp_rel), ("rel_mlp_y", n_mlp_rel, hp_rel),
              ("arc_mlp_x", n_mlp_arc, hp_arc), ("arc_mlp_y", n_mlp_arc, hp_arc)]
             + [(f"{n}_mlp_{f}", n_mlp_rel, hp_tri) for n, f in _TRI_NAMES])
    padded = [pad_head(params[k], h, hp) for k, h, hp in heads]
    w_all = jnp.concatenate([w for w, _ in padded], axis=1).astype(compute_dtype)
    b_all = jnp.concatenate([b for _, b in padded], axis=0).reshape(1, -1)  # f32

    # Triaffine U: [H+1, R] zero-padded to [hp_tri, R]; the U bias row stays at
    # row n_mlp_rel where the folded ones column of h lands.
    u_core = jnp.stack(
        [jnp.zeros((hp_tri, rank), jnp.float32)
         .at[:n_mlp_rel + 1].set(params[f"{n}_U_{f}"]) for n, f in _TRI_NAMES]
    ).astype(compute_dtype)                               # [9, hp_tri, R]

    h_rel, h_arc, s_tri = pallas_fused_mlp(
        x2d, w_all, b_all, u_core,
        hp_rel=hp_rel, hp_arc=hp_arc, hp_tri=hp_tri, rank=rank,
        inv_tri_scale=1.0 / tri_scale, compute_dtype=compute_dtype,
        single_buffer_weights=single_buffer_weights)

    # Biaffine W: [O, H+1, H+1] zero-padded to [O, hp, hp]; its bias row/col at
    # index H lines up with the folded ones column of hx/hy.
    def pad_biaffine(W, hp):
        n_out, h1, _ = W.shape
        return (jnp.zeros((n_out, hp, hp), jnp.float32)
                .at[:, :h1, :h1].set(W).astype(compute_dtype))

    ctx = {}
    s_rel = pallas_biaffine(h_rel.reshape(B, N, 2 * hp_rel),
                            pad_biaffine(params["rel_W"], hp_rel),
                            hp=hp_rel, scale=rel_scale,
                            compute_dtype=compute_dtype, score_dtype=score_dtype)
    ctx["s_rel"] = s_rel                                  # [B, n_rels, N, N], no transpose

    s_arc = pallas_biaffine(h_arc.reshape(B, N, 2 * hp_arc),
                            pad_biaffine(params["arc_W"], hp_arc),
                            hp=hp_arc, scale=arc_scale,
                            compute_dtype=compute_dtype, score_dtype=score_dtype)
    ctx["s_arc"] = s_arc[:, 0]                            # [B, N, N]

    # ---- decomposed triaffine factors: each [B, N, rank] ----
    s_tri3 = s_tri.reshape(B, N, _N_TRI * rank)
    for idx, (name, f) in enumerate(_TRI_NAMES):
        ctx[f"s_{name}_{f}"] = s_tri3[:, :, idx * rank:(idx + 1) * rank]
    return ctx


# ----------------------------------------------------------------------------
# Pure-JAX reference (f32, HIGHEST precision) for correctness checks
# ----------------------------------------------------------------------------
def _ref_leaky_mlp(x, w, b):
    h = jnp.dot(x, w, precision=lax.Precision.HIGHEST) + b
    return jnp.where(h > 0, h, _LEAKY_SLOPE * h)


def _ref_biaffine(x, wx_b, wy_b, W, scale):
    hx, hy = _ref_leaky_mlp(x, *wx_b), _ref_leaky_mlp(x, *wy_b)
    ones = jnp.ones(hx.shape[:-1] + (1,), hx.dtype)
    hx = jnp.concatenate([hx, ones], -1)
    hy = jnp.concatenate([hy, ones], -1)
    return jnp.einsum("bxi,oij,byj->boxy", hx, W, hy,
                      precision=lax.Precision.HIGHEST) / scale


def _ref_tri_factor(x, w_b, U, scale):
    h = _ref_leaky_mlp(x, *w_b)
    ones = jnp.ones(h.shape[:-1] + (1,), h.dtype)
    h = jnp.concatenate([h, ones], -1)
    return jnp.einsum("bnd,dr->bnr", h, U,
                      precision=lax.Precision.HIGHEST) / scale


def main():
    # Small, deterministic config (N = T-1 = 8 keeps all tiles cleanly shaped).
    B, T, D = 2, 9, 32
    n_mlp_rel, n_mlp_arc, n_rels, rank, scaling = 32, 32, 4, 8, 0.5
    N = T - 1

    key = jax.random.PRNGKey(0)
    k_emb, k_par = jax.random.split(key)
    encoded_emb = jax.random.normal(k_emb, (B, T, D), jnp.float32)
    params = init_params(k_par, input_dim=D, n_mlp_rel=n_mlp_rel,
                         n_mlp_arc=n_mlp_arc, n_rels=n_rels, rank=rank)

    def run(single_buffer):
        fwd = jax.jit(functools.partial(
            mf_second_order_dp_scorer, n_mlp_rel=n_mlp_rel, n_mlp_arc=n_mlp_arc,
            scaling=scaling, compute_dtype=jnp.bfloat16,
            score_dtype=jnp.float32, single_buffer_weights=single_buffer))
        out = fwd(params, encoded_emb)
        return jax.tree_util.tree_map(jax.block_until_ready, out)

    try:
        ctx = run(True)
    except Exception:
        # TODO(synk): pipeline_mode=pl.Buffered(1) unsupported on this jax
        # version -> fall back to default double-buffered weight blocks.
        ctx = run(False)

    # Shape checks.
    assert ctx["s_rel"].shape == (B, n_rels, N, N)
    assert ctx["s_arc"].shape == (B, N, N)
    for k in ("s_sib_a", "s_sib_b", "s_sib_c",
              "s_grd1_a", "s_grd1_b", "s_grd1_c",
              "s_grd2_a", "s_grd2_b", "s_grd2_c"):
        assert ctx[k].shape == (B, N, rank)

    # Numeric sanity checks (bf16 kernel path vs f32 HIGHEST reference).
    x = encoded_emb[:, :-1]
    rel_scale = float(n_mlp_rel) ** scaling
    arc_scale = float(n_mlp_arc) ** scaling
    tri_scale = rel_scale ** (1.0 / 3.0)

    ref_arc = _ref_biaffine(x, params["arc_mlp_x"], params["arc_mlp_y"],
                            params["arc_W"], arc_scale)[:, 0]
    assert jnp.allclose(ctx["s_arc"], ref_arc, atol=5e-2, rtol=5e-2)

    ref_rel = _ref_biaffine(x, params["rel_mlp_x"], params["rel_mlp_y"],
                            params["rel_W"], rel_scale)
    assert jnp.allclose(ctx["s_rel"], ref_rel, atol=5e-2, rtol=5e-2)

    ref_sib_a = _ref_tri_factor(x, params["sib_mlp_a"], params["sib_U_a"],
                                tri_scale)
    assert jnp.allclose(ctx["s_sib_a"], ref_sib_a, atol=5e-2, rtol=5e-2)

    ref_grd2_c = _ref_tri_factor(x, params["grd2_mlp_c"], params["grd2_U_c"],
                                 tri_scale)
    assert jnp.allclose(ctx["s_grd2_c"], ref_grd2_c, atol=5e-2, rtol=5e-2)

    print("KERNEL_OK")


if __name__ == "__main__":
    main()
</pallas_src>

<mosaic_0001>
module attributes {stable_mosaic.version = 11 : i64} {
  func.func @_fused_mlp_kernel(%arg0: i32, %arg1: memref<8x32xf32, #tpu.memory_space<vmem>>, %arg2: memref<32x1664xbf16, #tpu.memory_space<vmem>>, %arg3: memref<1x1664xf32, #tpu.memory_space<vmem>>, %arg4: memref<9x128x8xbf16, #tpu.memory_space<vmem>>, %arg5: memref<8x256xbf16, #tpu.memory_space<vmem>>, %arg6: memref<8x256xbf16, #tpu.memory_space<vmem>>, %arg7: memref<8x72xf32, #tpu.memory_space<vmem>>) attributes {dimension_semantics = [#tpu.dimension_semantics<parallel>], iteration_bounds = array<i64: 2>, scalar_prefetch = 0 : i64, scratch_operands = 0 : i64, tpu.core_type = #tpu.core_type<tc>, window_params = [{transform_indices = @transform_0, window_bounds = array<i64: 8, 32>}, {pipeline_mode = #tpu.pipeline_mode<synchronous>, transform_indices = @transform_1, window_bounds = array<i64: 32, 1664>}, {pipeline_mode = #tpu.pipeline_mode<synchronous>, transform_indices = @transform_2, window_bounds = array<i64: 1, 1664>}, {pipeline_mode = #tpu.pipeline_mode<synchronous>, transform_indices = @transform_3, window_bounds = array<i64: 9, 128, 8>}, {transform_indices = @transform_4, window_bounds = array<i64: 8, 256>}, {transform_indices = @transform_5, window_bounds = array<i64: 8, 256>}, {transform_indices = @transform_6, window_bounds = array<i64: 8, 72>}]} {
    %c0 = arith.constant 0 : index
    %c0_0 = arith.constant 0 : index
    %0 = vector.load %arg1[%c0, %c0_0] : memref<8x32xf32, #tpu.memory_space<vmem>>, vector<8x32xf32>
    %1 = arith.truncf %0 : vector<8x32xf32> to vector<8x32xbf16>
    %c0_1 = arith.constant 0 : index
    %c0_2 = arith.constant 0 : index
    %2 = vector.load %arg2[%c0_1, %c0_2] : memref<32x1664xbf16, #tpu.memory_space<vmem>>, vector<32x1664xbf16>
    %cst = arith.constant dense<0.000000e+00> : vector<8x1664xf32>
    %3 = tpu.matmul %1, %2, %cst {dimension_numbers = #tpu.dot_dimension_numbers<[1], [0], [0], [1], [0, 0, 1, 1], [], []>} : vector<8x32xbf16>, vector<32x1664xbf16>, vector<8x1664xf32> -> vector<8x1664xf32>
    %c0_3 = arith.constant 0 : index
    %c0_4 = arith.constant 0 : index
    %4 = vector.load %arg3[%c0_3, %c0_4] : memref<1x1664xf32, #tpu.memory_space<vmem>>, vector<1x1664xf32>
    %5 = vector.broadcast %4 : vector<1x1664xf32> to vector<8x1664xf32>
    %6 = arith.addf %3, %5 : vector<8x1664xf32>
    %cst_5 = arith.constant 0.000000e+00 : f32
    %7 = vector.broadcast %cst_5 : f32 to vector<8x1664xf32>
    %8 = arith.cmpf ogt, %6, %7 : vector<8x1664xf32>
    %cst_6 = arith.constant 1.000000e-01 : f32
    %9 = vector.broadcast %cst_6 : f32 to vector<8x1664xf32>
    %10 = arith.mulf %9, %6 : vector<8x1664xf32>
    %11 = arith.select %8, %6, %10 : vector<8x1664xi1>, vector<8x1664xf32>
    %12 = vector.extract_strided_slice %11 {offsets = [0, 0], sizes = [8, 256], strides = [1, 1]} : vector<8x1664xf32> to vector<8x256xf32>
    %13 = arith.truncf %12 : vector<8x256xf32> to vector<8x256xbf16>
    %c0_7 = arith.constant 0 : index
    %c0_8 = arith.constant 0 : index
    %14 = vector.load %arg5[%c0_7, %c0_8] : memref<8x256xbf16, #tpu.memory_space<vmem>>, vector<8x256xbf16>
    tpu.vector_store %arg5[%c0_7, %c0_8], %13 {strides = array<i32>} : memref<8x256xbf16, #tpu.memory_space<vmem>>, vector<8x256xbf16>,
    %15 = vector.extract_strided_slice %11 {offsets = [0, 256], sizes = [8, 256], strides = [1, 1]} : vector<8x1664xf32> to vector<8x256xf32>
    %16 = arith.truncf %15 : vector<8x256xf32> to vector<8x256xbf16>
    %c0_9 = arith.constant 0 : index
    %c0_10 = arith.constant 0 : index
    %17 = vector.load %arg6[%c0_9, %c0_10] : memref<8x256xbf16, #tpu.memory_space<vmem>>, vector<8x256xbf16>
    tpu.vector_store %arg6[%c0_9, %c0_10], %16 {strides = array<i32>} : memref<8x256xbf16, #tpu.memory_space<vmem>>, vector<8x256xbf16>,
    %18 = vector.extract_strided_slice %11 {offsets = [0, 512], sizes = [8, 128], strides = [1, 1]} : vector<8x1664xf32> to vector<8x128xf32>
    %19 = arith.truncf %18 : vector<8x128xf32> to vector<8x128xbf16>
    %c0_11 = arith.constant 0 : index
    %c0_12 = arith.constant 0 : index
    %c0_13 = arith.constant 0 : index
    %20 = vector.load %arg4[%c0_11, %c0_12, %c0_13] : memref<9x128x8xbf16, #tpu.memory_space<vmem>>, vector<1x128x8xbf16>
    %21 = vector.shape_cast %20 : vector<1x128x8xbf16> to vector<128x8xbf16>
    %cst_14 = arith.constant dense<0.000000e+00> : vector<8x8xf32>
    %22 = tpu.matmul %19, %21, %cst_14 {dimension_numbers = #tpu.dot_dimension_numbers<[1], [0], [0], [1], [0, 0, 1, 1], [], []>} : vector<8x128xbf16>, vector<128x8xbf16>, vector<8x8xf32> -> vector<8x8xf32>
    %23 = vector.extract_strided_slice %11 {offsets = [0, 640], sizes = [8, 128], strides = [1, 1]} : vector<8x1664xf32> to vector<8x128xf32>
    %24 = arith.truncf %23 : vector<8x128xf32> to vector<8x128xbf16>
    %c1 = arith.constant 1 : index
    %c0_15 = arith.constant 0 : index
    %c0_16 = arith.constant 0 : index
    %25 = vector.load %arg4[%c1, %c0_15, %c0_16] : memref<9x128x8xbf16, #tpu.memory_space<vmem>>, vector<1x128x8xbf16>
    %26 = vector.shape_cast %25 : vector<1x128x8xbf16> to vector<128x8xbf16>
    %cst_17 = arith.constant dense<0.000000e+00> : vector<8x8xf32>
    %27 = tpu.matmul %24, %26, %cst_17 {dimension_numbers = #tpu.dot_dimension_numbers<[1], [0], [0], [1], [0, 0, 1, 1], [], []>} : vector<8x128xbf16>, vector<128x8xbf16>, vector<8x8xf32> -> vector<8x8xf32>
    %28 = vector.extract_strided_slice %11 {offsets = [0, 768], sizes = [8, 128], strides = [1, 1]} : vector<8x1664xf32> to vector<8x128xf32>
    %29 = arith.truncf %28 : vector<8x128xf32> to vector<8x128xbf16>
    %c2 = arith.constant 2 : index
    %c0_18 = arith.constant 0 : index
    %c0_19 = arith.constant 0 : index
    %30 = vector.load %arg4[%c2, %c0_18, %c0_19] : memref<9x128x8xbf16, #tpu.memory_space<vmem>>, vector<1x128x8xbf16>
    %31 = vector.shape_cast %30 : vector<1x128x8xbf16> to vector<128x8xbf16>
    %cst_20 = arith.constant dense<0.000000e+00> : vector<8x8xf32>
    %32 = tpu.matmul %29, %31, %cst_20 {dimension_numbers = #tpu.dot_dimension_numbers<[1], [0], [0], [1], [0, 0, 1, 1], [], []>} : vector<8x128xbf16>, vector<128x8xbf16>, vector<8x8xf32> -> vector<8x8xf32>
    %33 = vector.extract_strided_slice %11 {offsets = [0, 896], sizes = [8, 128], strides = [1, 1]} : vector<8x1664xf32> to vector<8x128xf32>
    %34 = arith.truncf %33 : vector<8x128xf32> to vector<8x128xbf16>
    %c3 = arith.constant 3 : index
    %c0_21 = arith.constant 0 : index
    %c0_22 = arith.constant 0 : index
    %35 = vector.load %arg4[%c3, %c0_21, %c0_22] : memref<9x128x8xbf16, #tpu.memory_space<vmem>>, vector<1x128x8xbf16>
    %36 = vector.shape_cast %35 : vector<1x128x8xbf16> to vector<128x8xbf16>
    %cst_23 = arith.constant dense<0.000000e+00> : vector<8x8xf32>
    %37 = tpu.matmul %34, %36, %cst_23 {dimension_numbers = #tpu.dot_dimension_numbers<[1], [0], [0], [1], [0, 0, 1, 1], [], []>} : vector<8x128xbf16>, vector<128x8xbf16>, vector<8x8xf32> -> vector<8x8xf32>
    %38 = vector.extract_strided_slice %11 {offsets = [0, 1024], sizes = [8, 128], strides = [1, 1]} : vector<8x1664xf32> to vector<8x128xf32>
    %39 = arith.truncf %38 : vector<8x128xf32> to vector<8x128xbf16>
    %c4 = arith.constant 4 : index
    %c0_24 = arith.constant 0 : index
    %c0_25 = arith.constant 0 : index
    %40 = vector.load %arg4[%c4, %c0_24, %c0_25] : memref<9x128x8xbf16, #tpu.memory_space<vmem>>, vector<1x128x8xbf16>
    %41 = vector.shape_cast %40 : vector<1x128x8xbf16> to vector<128x8xbf16>
    %cst_26 = arith.constant dense<0.000000e+00> : vector<8x8xf32>
    %42 = tpu.matmul %39, %41, %cst_26 {dimension_numbers = #tpu.dot_dimension_numbers<[1], [0], [0], [1], [0, 0, 1, 1], [], []>} : vector<8x128xbf16>, vector<128x8xbf16>, vector<8x8xf32> -> vector<8x8xf32>
    %43 = vector.extract_strided_slice %11 {offsets = [0, 1152], sizes = [8, 128], strides = [1, 1]} : vector<8x1664xf32> to vector<8x128xf32>
    %44 = arith.truncf %43 : vector<8x128xf32> to vector<8x128xbf16>
    %c5 = arith.constant 5 : index
    %c0_27 = arith.constant 0 : index
    %c0_28 = arith.constant 0 : index
    %45 = vector.load %arg4[%c5, %c0_27, %c0_28] : memref<9x128x8xbf16, #tpu.memory_space<vmem>>, vector<1x128x8xbf16>
    %46 = vector.shape_cast %45 : vector<1x128x8xbf16> to vector<128x8xbf16>
    %cst_29 = arith.constant dense<0.000000e+00> : vector<8x8xf32>
    %47 = tpu.matmul %44, %46, %cst_29 {dimension_numbers = #tpu.dot_dimension_numbers<[1], [0], [0], [1], [0, 0, 1, 1], [], []>} : vector<8x128xbf16>, vector<128x8xbf16>, vector<8x8xf32> -> vector<8x8xf32>
    %48 = vector.extract_strided_slice %11 {offsets = [0, 1280], sizes = [8, 128], strides = [1, 1]} : vector<8x1664xf32> to vector<8x128xf32>
    %49 = arith.truncf %48 : vector<8x128xf32> to vector<8x128xbf16>
    %c6 = arith.constant 6 : index
    %c0_30 = arith.constant 0 : index
    %c0_31 = arith.constant 0 : index
    %50 = vector.load %arg4[%c6, %c0_30, %c0_31] : memref<9x128x8xbf16, #tpu.memory_space<vmem>>, vector<1x128x8xbf16>
    %51 = vector.shape_cast %50 : vector<1x128x8xbf16> to vector<128x8xbf16>
    %cst_32 = arith.constant dense<0.000000e+00> : vector<8x8xf32>
    %52 = tpu.matmul %49, %51, %cst_32 {dimension_numbers = #tpu.dot_dimension_numbers<[1], [0], [0], [1], [0, 0, 1, 1], [], []>} : vector<8x128xbf16>, vector<128x8xbf16>, vector<8x8xf32> -> vector<8x8xf32>
    %53 = vector.extract_strided_slice %11 {offsets = [0, 1408], sizes = [8, 128], strides = [1, 1]} : vector<8x1664xf32> to vector<8x128xf32>
    %54 = arith.truncf %53 : vector<8x128xf32> to vector<8x128xbf16>
    %c7 = arith.constant 7 : index
    %c0_33 = arith.constant 0 : index
    %c0_34 = arith.constant 0 : index
    %55 = vector.load %arg4[%c7, %c0_33, %c0_34] : memref<9x128x8xbf16, #tpu.memory_space<vmem>>, vector<1x128x8xbf16>
    %56 = vector.shape_cast %55 : vector<1x128x8xbf16> to vector<128x8xbf16>
    %cst_35 = arith.constant dense<0.000000e+00> : vector<8x8xf32>
    %57 = tpu.matmul %54, %56, %cst_35 {dimension_numbers = #tpu.dot_dimension_numbers<[1], [0], [0], [1], [0, 0, 1, 1], [], []>} : vector<8x128xbf16>, vector<128x8xbf16>, vector<8x8xf32> -> vector<8x8xf32>
    %58 = vector.extract_strided_slice %11 {offsets = [0, 1536], sizes = [8, 128], strides = [1, 1]} : vector<8x1664xf32> to vector<8x128xf32>
    %59 = arith.truncf %58 : vector<8x128xf32> to vector<8x128xbf16>
    %c8 = arith.constant 8 : index
    %c0_36 = arith.constant 0 : index
    %c0_37 = arith.constant 0 : index
    %60 = vector.load %arg4[%c8, %c0_36, %c0_37] : memref<9x128x8xbf16, #tpu.memory_space<vmem>>, vector<1x128x8xbf16>
    %61 = vector.shape_cast %60 : vector<1x128x8xbf16> to vector<128x8xbf16>
    %cst_38 = arith.constant dense<0.000000e+00> : vector<8x8xf32>
    %62 = tpu.matmul %59, %61, %cst_38 {dimension_numbers = #tpu.dot_dimension_numbers<[1], [0], [0], [1], [0, 0, 1, 1], [], []>} : vector<8x128xbf16>, vector<128x8xbf16>, vector<8x8xf32> -> vector<8x8xf32>
    %63 = tpu.concatenate %22, %27, %32, %37, %42, %47, %52, %57, %62 in 1 : vector<8x8xf32>, vector<8x8xf32>, vector<8x8xf32>, vector<8x8xf32>, vector<8x8xf32>, vector<8x8xf32>, vector<8x8xf32>, vector<8x8xf32>, vector<8x8xf32> -> vector<8x72xf32>
    %cst_39 = arith.constant 5.612310e-01 : f32
    %64 = vector.broadcast %cst_39 : f32 to vector<8x72xf32>
    %65 = arith.mulf %63, %64 : vector<8x72xf32>
    %c0_40 = arith.constant 0 : index
    %c0_41 = arith.constant 0 : index
    %66 = vector.load %arg7[%c0_40, %c0_41] : memref<8x72xf32, #tpu.memory_space<vmem>>, vector<8x72xf32>
    tpu.vector_store %arg7[%c0_40, %c0_41], %65 {strides = array<i32>} : memref<8x72xf32, #tpu.memory_space<vmem>>, vector<8x72xf32>,
    return
  }
  func.func @transform_0(%arg0: i32) -> (i32, i32) {
    %c0_i32 = arith.constant 0 : i32
    %c0_i32_0 = arith.constant 0 : i32
    return %arg0, %c0_i32 : i32, i32
  }
  func.func @transform_1(%arg0: i32) -> (i32, i32) {
    %c0_i32 = arith.constant 0 : i32
    %c0_i32_0 = arith.constant 0 : i32
    %c0_i32_1 = arith.constant 0 : i32
    return %c0_i32, %c0_i32_0 : i32, i32
  }
  func.func @transform_2(%arg0: i32) -> (i32, i32) {
    %c0_i32 = arith.constant 0 : i32
    %c0_i32_0 = arith.constant 0 : i32
    %c0_i32_1 = arith.constant 0 : i32
    return %c0_i32, %c0_i32_0 : i32, i32
  }
  func.func @transform_3(%arg0: i32) -> (i32, i32, i32) {
    %c0_i32 = arith.constant 0 : i32
    %c0_i32_0 = arith.constant 0 : i32
    %c0_i32_1 = arith.constant 0 : i32
    %c0_i32_2 = arith.constant 0 : i32
    return %c0_i32, %c0_i32_0, %c0_i32_1 : i32, i32, i32
  }
  func.func @transform_4(%arg0: i32) -> (i32, i32) {
    %c0_i32 = arith.constant 0 : i32
    %c0_i32_0 = arith.constant 0 : i32
    return %arg0, %c0_i32 : i32, i32
  }
  func.func @transform_5(%arg0: i32) -> (i32, i32) {
    %c0_i32 = arith.constant 0 : i32
    %c0_i32_0 = arith.constant 0 : i32
    return %arg0, %c0_i32 : i32, i32
  }
  func.func @transform_6(%arg0: i32) -> (i32, i32) {
    %c0_i32 = arith.constant 0 : i32
    %c0_i32_0 = arith.constant 0 : i32
    return %arg0, %c0_i32 : i32, i32
  }
}

module attributes {stable_mosaic.version = 11 : i64} {
  func.func @_biaffine_kernel(%arg0: i32, %arg1: i32, %arg2: memref<1x8x256xbf16, #tpu.memory_space<vmem>>, %arg3: memref<1x128x128xbf16, #tpu.memory_space<vmem>>, %arg4: memref<1x1x8x8xf32, #tpu.memory_space<vmem>>) attributes {dimension_semantics = [#tpu.dimension_semantics<parallel>, #tpu.dimension_semantics<parallel>], iteration_bounds = array<i64: 2, 4>, scalar_prefetch = 0 : i64, scratch_operands = 0 : i64, tpu.core_type = #tpu.core_type<tc>, window_params = [{transform_indices = @transform_0, window_bounds = array<i64: 1, 8, 256>}, {transform_indices = @transform_1, window_bounds = array<i64: 1, 128, 128>}, {transform_indices = @transform_2, window_bounds = array<i64: 1, 1, 8, 8>}]} {
    %c0 = arith.constant 0 : index
    %c0_0 = arith.constant 0 : index
    %c0_1 = arith.constant 0 : index
    %0 = vector.load %arg2[%c0, %c0_0, %c0_1] : memref<1x8x256xbf16, #tpu.memory_space<vmem>>, vector<1x8x256xbf16>
    %1 = vector.shape_cast %0 : vector<1x8x256xbf16> to vector<8x256xbf16>
    %2 = vector.extract_strided_slice %1 {offsets = [0, 0], sizes = [8, 128], strides = [1, 1]} : vector<8x256xbf16> to vector<8x128xbf16>
    %3 = vector.extract_strided_slice %1 {offsets = [0, 128], sizes = [8, 128], strides = [1, 1]} : vector<8x256xbf16> to vector<8x128xbf16>
    %c0_2 = arith.constant 0 : index
    %c0_3 = arith.constant 0 : index
    %c0_4 = arith.constant 0 : index
    %4 = vector.load %arg3[%c0_2, %c0_3, %c0_4] : memref<1x128x128xbf16, #tpu.memory_space<vmem>>, vector<1x128x128xbf16>
    %5 = vector.shape_cast %4 : vector<1x128x128xbf16> to vector<128x128xbf16>
    %cst = arith.constant dense<0.000000e+00> : vector<8x128xf32>
    %6 = tpu.matmul %2, %5, %cst {dimension_numbers = #tpu.dot_dimension_numbers<[1], [0], [0], [1], [0, 0, 1, 1], [], []>} : vector<8x128xbf16>, vector<128x128xbf16>, vector<8x128xf32> -> vector<8x128xf32>
    %7 = arith.truncf %6 : vector<8x128xf32> to vector<8x128xbf16>
    %cst_5 = arith.constant dense<0.000000e+00> : vector<8x8xf32>
    %8 = tpu.matmul %7, %3, %cst_5 {dimension_numbers = #tpu.dot_dimension_numbers<[1], [1], [0], [0], [0, 0, 1, 0], [], []>} : vector<8x128xbf16>, vector<8x128xbf16>, vector<8x8xf32> -> vector<8x8xf32>
    %cst_6 = arith.constant 0.176776692 : f32
    %9 = vector.broadcast %cst_6 : f32 to vector<8x8xf32>
    %10 = arith.mulf %8, %9 : vector<8x8xf32>
    %c0_7 = arith.constant 0 : index
    %c0_8 = arith.constant 0 : index
    %c0_9 = arith.constant 0 : index
    %c0_10 = arith.constant 0 : index
    %11 = vector.load %arg4[%c0_7, %c0_8, %c0_9, %c0_10] : memref<1x1x8x8xf32, #tpu.memory_space<vmem>>, vector<1x1x8x8xf32>
    %12 = vector.shape_cast %11 : vector<1x1x8x8xf32> to vector<8x8xf32>
    %13 = vector.shape_cast %10 : vector<8x8xf32> to vector<1x1x8x8xf32>
    tpu.vector_store %arg4[%c0_7, %c0_8, %c0_9, %c0_10], %13 {strides = array<i32>} : memref<1x1x8x8xf32, #tpu.memory_space<vmem>>, vector<1x1x8x8xf32>,
    return
  }
  func.func @transform_0(%arg0: i32, %arg1: i32) -> (i32, i32, i32) {
    %c0_i32 = arith.constant 0 : i32
    %c0_i32_0 = arith.constant 0 : i32
    %c0_i32_1 = arith.constant 0 : i32
    return %arg0, %c0_i32, %c0_i32_0 : i32, i32, i32
  }
  func.func @transform_1(%arg0: i32, %arg1: i32) -> (i32, i32, i32) {
    %c0_i32 = arith.constant 0 : i32
    %c0_i32_0 = arith.constant 0 : i32
    %c0_i32_1 = arith.constant 0 : i32
    return %arg1, %c0_i32, %c0_i32_0 : i32, i32, i32
  }
  func.func @transform_2(%arg0: i32, %arg1: i32) -> (i32, i32, i32, i32) {
    %c0_i32 = arith.constant 0 : i32
    %c0_i32_0 = arith.constant 0 : i32
    %c0_i32_1 = arith.constant 0 : i32
    return %arg0, %arg1, %c0_i32, %c0_i32_0 : i32, i32, i32, i32
  }
}

module attributes {stable_mosaic.version = 11 : i64} {
  func.func @_biaffine_kernel(%arg0: i32, %arg1: i32, %arg2: memref<1x8x256xbf16, #tpu.memory_space<vmem>>, %arg3: memref<1x128x128xbf16, #tpu.memory_space<vmem>>, %arg4: memref<1x1x8x8xf32, #tpu.memory_space<vmem>>) attributes {dimension_semantics = [#tpu.dimension_semantics<parallel>, #tpu.dimension_semantics<parallel>], iteration_bounds = array<i64: 2, 1>, scalar_prefetch = 0 : i64, scratch_operands = 0 : i64, tpu.core_type = #tpu.core_type<tc>, window_params = [{transform_indices = @transform_0, window_bounds = array<i64: 1, 8, 256>}, {transform_indices = @transform_1, window_bounds = array<i64: 1, 128, 128>}, {transform_indices = @transform_2, window_bounds = array<i64: 1, 1, 8, 8>}]} {
    %c0 = arith.constant 0 : index
    %c0_0 = arith.constant 0 : index
    %c0_1 = arith.constant 0 : index
    %0 = vector.load %arg2[%c0, %c0_0, %c0_1] : memref<1x8x256xbf16, #tpu.memory_space<vmem>>, vector<1x8x256xbf16>
    %1 = vector.shape_cast %0 : vector<1x8x256xbf16> to vector<8x256xbf16>
    %2 = vector.extract_strided_slice %1 {offsets = [0, 0], sizes = [8, 128], strides = [1, 1]} : vector<8x256xbf16> to vector<8x128xbf16>
    %3 = vector.extract_strided_slice %1 {offsets = [0, 128], sizes = [8, 128], strides = [1, 1]} : vector<8x256xbf16> to vector<8x128xbf16>
    %c0_2 = arith.constant 0 : index
    %c0_3 = arith.constant 0 : index
    %c0_4 = arith.constant 0 : index
    %4 = vector.load %arg3[%c0_2, %c0_3, %c0_4] : memref<1x128x128xbf16, #tpu.memory_space<vmem>>, vector<1x128x128xbf16>
    %5 = vector.shape_cast %4 : vector<1x128x128xbf16> to vector<128x128xbf16>
    %cst = arith.constant dense<0.000000e+00> : vector<8x128xf32>
    %6 = tpu.matmul %2, %5, %cst {dimension_numbers = #tpu.dot_dimension_numbers<[1], [0], [0], [1], [0, 0, 1, 1], [], []>} : vector<8x128xbf16>, vector<128x128xbf16>, vector<8x128xf32> -> vector<8x128xf32>
    %7 = arith.truncf %6 : vector<8x128xf32> to vector<8x128xbf16>
    %cst_5 = arith.constant dense<0.000000e+00> : vector<8x8xf32>
    %8 = tpu.matmul %7, %3, %cst_5 {dimension_numbers = #tpu.dot_dimension_numbers<[1], [1], [0], [0], [0, 0, 1, 0], [], []>} : vector<8x128xbf16>, vector<8x128xbf16>, vector<8x8xf32> -> vector<8x8xf32>
    %cst_6 = arith.constant 0.176776692 : f32
    %9 = vector.broadcast %cst_6 : f32 to vector<8x8xf32>
    %10 = arith.mulf %8, %9 : vector<8x8xf32>
    %c0_7 = arith.constant 0 : index
    %c0_8 = arith.constant 0 : index
    %c0_9 = arith.constant 0 : index
    %c0_10 = arith.constant 0 : index
    %11 = vector.load %arg4[%c0_7, %c0_8, %c0_9, %c0_10] : memref<1x1x8x8xf32, #tpu.memory_space<vmem>>, vector<1x1x8x8xf32>
    %12 = vector.shape_cast %11 : vector<1x1x8x8xf32> to vector<8x8xf32>
    %13 = vector.shape_cast %10 : vector<8x8xf32> to vector<1x1x8x8xf32>
    tpu.vector_store %arg4[%c0_7, %c0_8, %c0_9, %c0_10], %13 {strides = array<i32>} : memref<1x1x8x8xf32, #tpu.memory_space<vmem>>, vector<1x1x8x8xf32>,
    return
  }
  func.func @transform_0(%arg0: i32, %arg1: i32) -> (i32, i32, i32) {
    %c0_i32 = arith.constant 0 : i32
    %c0_i32_0 = arith.constant 0 : i32
    %c0_i32_1 = arith.constant 0 : i32
    return %arg0, %c0_i32, %c0_i32_0 : i32, i32, i32
  }
  func.func @transform_1(%arg0: i32, %arg1: i32) -> (i32, i32, i32) {
    %c0_i32 = arith.constant 0 : i32
    %c0_i32_0 = arith.constant 0 : i32
    %c0_i32_1 = arith.constant 0 : i32
    return %arg1, %c0_i32, %c0_i32_0 : i32, i32, i32
  }
  func.func @transform_2(%arg0: i32, %arg1: i32) -> (i32, i32, i32, i32) {
    %c0_i32 = arith.constant 0 : i32
    %c0_i32_0 = arith.constant 0 : i32
    %c0_i32_1 = arith.constant 0 : i32
    return %arg0, %arg1, %c0_i32, %c0_i32_0 : i32, i32, i32, i32
  }
}

module attributes {stable_mosaic.version = 11 : i64} {
  func.func @_fused_mlp_kernel(%arg0: i32, %arg1: memref<8x32xf32, #tpu.memory_space<vmem>>, %arg2: memref<32x1664xbf16, #tpu.memory_space<vmem>>, %arg3: memref<1x1664xf32, #tpu.memory_space<vmem>>, %arg4: memref<9x128x8xbf16, #tpu.memory_space<vmem>>, %arg5: memref<8x256xbf16, #tpu.memory_space<vmem>>, %arg6: memref<8x256xbf16, #tpu.memory_space<vmem>>, %arg7: memref<8x72xf32, #tpu.memory_space<vmem>>) attributes {dimension_semantics = [#tpu.dimension_semantics<parallel>], iteration_bounds = array<i64: 2>, scalar_prefetch = 0 : i64, scratch_operands = 0 : i64, tpu.core_type = #tpu.core_type<tc>, window_params = [{transform_indices = @transform_0, window_bounds = array<i64: 8, 32>}, {pipeline_mode = #tpu.pipeline_mode<synchronous>, transform_indices = @transform_1, window_bounds = array<i64: 32, 1664>}, {pipeline_mode = #tpu.pipeline_mode<synchronous>, transform_indices = @transform_2, window_bounds = array<i64: 1, 1664>}, {pipeline_mode = #tpu.pipeline_mode<synchronous>, transform_indices = @transform_3, window_bounds = array<i64: 9, 128, 8>}, {transform_indices = @transform_4, window_bounds = array<i64: 8, 256>}, {transform_indices = @transform_5, window_bounds = array<i64: 8, 256>}, {transform_indices = @transform_6, window_bounds = array<i64: 8, 72>}]} {
    %c0 = arith.constant 0 : index
    %c0_0 = arith.constant 0 : index
    %0 = vector.load %arg1[%c0, %c0_0] : memref<8x32xf32, #tpu.memory_space<vmem>>, vector<8x32xf32>
    %1 = arith.truncf %0 : vector<8x32xf32> to vector<8x32xbf16>
    %c0_1 = arith.constant 0 : index
    %c0_2 = arith.constant 0 : index
    %2 = vector.load %arg2[%c0_1, %c0_2] : memref<32x1664xbf16, #tpu.memory_space<vmem>>, vector<32x1664xbf16>
    %cst = arith.constant dense<0.000000e+00> : vector<8x1664xf32>
    %3 = tpu.matmul %1, %2, %cst {dimension_numbers = #tpu.dot_dimension_numbers<[1], [0], [0], [1], [0, 0, 1, 1], [], []>} : vector<8x32xbf16>, vector<32x1664xbf16>, vector<8x1664xf32> -> vector<8x1664xf32>
    %c0_3 = arith.constant 0 : index
    %c0_4 = arith.constant 0 : index
    %4 = vector.load %arg3[%c0_3, %c0_4] : memref<1x1664xf32, #tpu.memory_space<vmem>>, vector<1x1664xf32>
    %5 = vector.broadcast %4 : vector<1x1664xf32> to vector<8x1664xf32>
    %6 = arith.addf %3, %5 : vector<8x1664xf32>
    %cst_5 = arith.constant 0.000000e+00 : f32
    %7 = vector.broadcast %cst_5 : f32 to vector<8x1664xf32>
    %8 = arith.cmpf ogt, %6, %7 : vector<8x1664xf32>
    %cst_6 = arith.constant 1.000000e-01 : f32
    %9 = vector.broadcast %cst_6 : f32 to vector<8x1664xf32>
    %10 = arith.mulf %9, %6 : vector<8x1664xf32>
    %11 = arith.select %8, %6, %10 : vector<8x1664xi1>, vector<8x1664xf32>
    %12 = vector.extract_strided_slice %11 {offsets = [0, 0], sizes = [8, 256], strides = [1, 1]} : vector<8x1664xf32> to vector<8x256xf32>
    %13 = arith.truncf %12 : vector<8x256xf32> to vector<8x256xbf16>
    %c0_7 = arith.constant 0 : index
    %c0_8 = arith.constant 0 : index
    %14 = vector.load %arg5[%c0_7, %c0_8] : memref<8x256xbf16, #tpu.memory_space<vmem>>, vector<8x256xbf16>
    tpu.vector_store %arg5[%c0_7, %c0_8], %13 {strides = array<i32>} : memref<8x256xbf16, #tpu.memory_space<vmem>>, vector<8x256xbf16>,
    %15 = vector.extract_strided_slice %11 {offsets = [0, 256], sizes = [8, 256], strides = [1, 1]} : vector<8x1664xf32> to vector<8x256xf32>
    %16 = arith.truncf %15 : vector<8x256xf32> to vector<8x256xbf16>
    %c0_9 = arith.constant 0 : index
    %c0_10 = arith.constant 0 : index
    %17 = vector.load %arg6[%c0_9, %c0_10] : memref<8x256xbf16, #tpu.memory_space<vmem>>, vector<8x256xbf16>
    tpu.vector_store %arg6[%c0_9, %c0_10], %16 {strides = array<i32>} : memref<8x256xbf16, #tpu.memory_space<vmem>>, vector<8x256xbf16>,
    %18 = vector.extract_strided_slice %11 {offsets = [0, 512], sizes = [8, 128], strides = [1, 1]} : vector<8x1664xf32> to vector<8x128xf32>
    %19 = arith.truncf %18 : vector<8x128xf32> to vector<8x128xbf16>
    %c0_11 = arith.constant 0 : index
    %c0_12 = arith.constant 0 : index
    %c0_13 = arith.constant 0 : index
    %20 = vector.load %arg4[%c0_11, %c0_12, %c0_13] : memref<9x128x8xbf16, #tpu.memory_space<vmem>>, vector<1x128x8xbf16>
    %21 = vector.shape_cast %20 : vector<1x128x8xbf16> to vector<128x8xbf16>
    %cst_14 = arith.constant dense<0.000000e+00> : vector<8x8xf32>
    %22 = tpu.matmul %19, %21, %cst_14 {dimension_numbers = #tpu.dot_dimension_numbers<[1], [0], [0], [1], [0, 0, 1, 1], [], []>} : vector<8x128xbf16>, vector<128x8xbf16>, vector<8x8xf32> -> vector<8x8xf32>
    %23 = vector.extract_strided_slice %11 {offsets = [0, 640], sizes = [8, 128], strides = [1, 1]} : vector<8x1664xf32> to vector<8x128xf32>
    %24 = arith.truncf %23 : vector<8x128xf32> to vector<8x128xbf16>
    %c1 = arith.constant 1 : index
    %c0_15 = arith.constant 0 : index
    %c0_16 = arith.constant 0 : index
    %25 = vector.load %arg4[%c1, %c0_15, %c0_16] : memref<9x128x8xbf16, #tpu.memory_space<vmem>>, vector<1x128x8xbf16>
    %26 = vector.shape_cast %25 : vector<1x128x8xbf16> to vector<128x8xbf16>
    %cst_17 = arith.constant dense<0.000000e+00> : vector<8x8xf32>
    %27 = tpu.matmul %24, %26, %cst_17 {dimension_numbers = #tpu.dot_dimension_numbers<[1], [0], [0], [1], [0, 0, 1, 1], [], []>} : vector<8x128xbf16>, vector<128x8xbf16>, vector<8x8xf32> -> vector<8x8xf32>
    %28 = vector.extract_strided_slice %11 {offsets = [0, 768], sizes = [8, 128], strides = [1, 1]} : vector<8x1664xf32> to vector<8x128xf32>
    %29 = arith.truncf %28 : vector<8x128xf32> to vector<8x128xbf16>
    %c2 = arith.constant 2 : index
    %c0_18 = arith.constant 0 : index
    %c0_19 = arith.constant 0 : index
    %30 = vector.load %arg4[%c2, %c0_18, %c0_19] : memref<9x128x8xbf16, #tpu.memory_space<vmem>>, vector<1x128x8xbf16>
    %31 = vector.shape_cast %30 : vector<1x128x8xbf16> to vector<128x8xbf16>
    %cst_20 = arith.constant dense<0.000000e+00> : vector<8x8xf32>
    %32 = tpu.matmul %29, %31, %cst_20 {dimension_numbers = #tpu.dot_dimension_numbers<[1], [0], [0], [1], [0, 0, 1, 1], [], []>} : vector<8x128xbf16>, vector<128x8xbf16>, vector<8x8xf32> -> vector<8x8xf32>
    %33 = vector.extract_strided_slice %11 {offsets = [0, 896], sizes = [8, 128], strides = [1, 1]} : vector<8x1664xf32> to vector<8x128xf32>
    %34 = arith.truncf %33 : vector<8x128xf32> to vector<8x128xbf16>
    %c3 = arith.constant 3 : index
    %c0_21 = arith.constant 0 : index
    %c0_22 = arith.constant 0 : index
    %35 = vector.load %arg4[%c3, %c0_21, %c0_22] : memref<9x128x8xbf16, #tpu.memory_space<vmem>>, vector<1x128x8xbf16>
    %36 = vector.shape_cast %35 : vector<1x128x8xbf16> to vector<128x8xbf16>
    %cst_23 = arith.constant dense<0.000000e+00> : vector<8x8xf32>
    %37 = tpu.matmul %34, %36, %cst_23 {dimension_numbers = #tpu.dot_dimension_numbers<[1], [0], [0], [1], [0, 0, 1, 1], [], []>} : vector<8x128xbf16>, vector<128x8xbf16>, vector<8x8xf32> -> vector<8x8xf32>
    %38 = vector.extract_strided_slice %11 {offsets = [0, 1024], sizes = [8, 128], strides = [1, 1]} : vector<8x1664xf32> to vector<8x128xf32>
    %39 = arith.truncf %38 : vector<8x128xf32> to vector<8x128xbf16>
    %c4 = arith.constant 4 : index
    %c0_24 = arith.constant 0 : index
    %c0_25 = arith.constant 0 : index
    %40 = vector.load %arg4[%c4, %c0_24, %c0_25] : memref<9x128x8xbf16, #tpu.memory_space<vmem>>, vector<1x128x8xbf16>
    %41 = vector.shape_cast %40 : vector<1x128x8xbf16> to vector<128x8xbf16>
    %cst_26 = arith.constant dense<0.000000e+00> : vector<8x8xf32>
    %42 = tpu.matmul %39, %41, %cst_26 {dimension_numbers = #tpu.dot_dimension_numbers<[1], [0], [0], [1], [0, 0, 1, 1], [], []>} : vector<8x128xbf16>, vector<128x8xbf16>, vector<8x8xf32> -> vector<8x8xf32>
    %43 = vector.extract_strided_slice %11 {offsets = [0, 1152], sizes = [8, 128], strides = [1, 1]} : vector<8x1664xf32> to vector<8x128xf32>
    %44 = arith.truncf %43 : vector<8x128xf32> to vector<8x128xbf16>
    %c5 = arith.constant 5 : index
    %c0_27 = arith.constant 0 : index
    %c0_28 = arith.constant 0 : index
    %45 = vector.load %arg4[%c5, %c0_27, %c0_28] : memref<9x128x8xbf16, #tpu.memory_space<vmem>>, vector<1x128x8xbf16>
    %46 = vector.shape_cast %45 : vector<1x128x8xbf16> to vector<128x8xbf16>
    %cst_29 = arith.constant dense<0.000000e+00> : vector<8x8xf32>
    %47 = tpu.matmul %44, %46, %cst_29 {dimension_numbers = #tpu.dot_dimension_numbers<[1], [0], [0], [1], [0, 0, 1, 1], [], []>} : vector<8x128xbf16>, vector<128x8xbf16>, vector<8x8xf32> -> vector<8x8xf32>
    %48 = vector.extract_strided_slice %11 {offsets = [0, 1280], sizes = [8, 128], strides = [1, 1]} : vector<8x1664xf32> to vector<8x128xf32>
    %49 = arith.truncf %48 : vector<8x128xf32> to vector<8x128xbf16>
    %c6 = arith.constant 6 : index
    %c0_30 = arith.constant 0 : index
    %c0_31 = arith.constant 0 : index
    %50 = vector.load %arg4[%c6, %c0_30, %c0_31] : memref<9x128x8xbf16, #tpu.memory_space<vmem>>, vector<1x128x8xbf16>
    %51 = vector.shape_cast %50 : vector<1x128x8xbf16> to vector<128x8xbf16>
    %cst_32 = arith.constant dense<0.000000e+00> : vector<8x8xf32>
    %52 = tpu.matmul %49, %51, %cst_32 {dimension_numbers = #tpu.dot_dimension_numbers<[1], [0], [0], [1], [0, 0, 1, 1], [], []>} : vector<8x128xbf16>, vector<128x8xbf16>, vector<8x8xf32> -> vector<8x8xf32>
    %53 = vector.extract_strided_slice %11 {offsets = [0, 1408], sizes = [8, 128], strides = [1, 1]} : vector<8x1664xf32> to vector<8x128xf32>
    %54 = arith.truncf %53 : vector<8x128xf32> to vector<8x128xbf16>
    %c7 = arith.constant 7 : index
    %c0_33 = arith.constant 0 : index
    %c0_34 = arith.constant 0 : index
    %55 = vector.load %arg4[%c7, %c0_33, %c0_34] : memref<9x128x8xbf16, #tpu.memory_space<vmem>>, vector<1x128x8xbf16>
    %56 = vector.shape_cast %55 : vector<1x128x8xbf16> to vector<128x8xbf16>
    %cst_35 = arith.constant dense<0.000000e+00> : vector<8x8xf32>
    %57 = tpu.matmul %54, %56, %cst_35 {dimension_numbers = #tpu.dot_dimension_numbers<[1], [0], [0], [1], [0, 0, 1, 1], [], []>} : vector<8x128xbf16>, vector<128x8xbf16>, vector<8x8xf32> -> vector<8x8xf32>
    %58 = vector.extract_strided_slice %11 {offsets = [0, 1536], sizes = [8, 128], strides = [1, 1]} : vector<8x1664xf32> to vector<8x128xf32>
    %59 = arith.truncf %58 : vector<8x128xf32> to vector<8x128xbf16>
    %c8 = arith.constant 8 : index
    %c0_36 = arith.constant 0 : index
    %c0_37 = arith.constant 0 : index
    %60 = vector.load %arg4[%c8, %c0_36, %c0_37] : memref<9x128x8xbf16, #tpu.memory_space<vmem>>, vector<1x128x8xbf16>
    %61 = vector.shape_cast %60 : vector<1x128x8xbf16> to vector<128x8xbf16>
    %cst_38 = arith.constant dense<0.000000e+00> : vector<8x8xf32>
    %62 = tpu.matmul %59, %61, %cst_38 {dimension_numbers = #tpu.dot_dimension_numbers<[1], [0], [0], [1], [0, 0, 1, 1], [], []>} : vector<8x128xbf16>, vector<128x8xbf16>, vector<8x8xf32> -> vector<8x8xf32>
    %63 = tpu.concatenate %22, %27, %32, %37, %42, %47, %52, %57, %62 in 1 : vector<8x8xf32>, vector<8x8xf32>, vector<8x8xf32>, vector<8x8xf32>, vector<8x8xf32>, vector<8x8xf32>, vector<8x8xf32>, vector<8x8xf32>, vector<8x8xf32> -> vector<8x72xf32>
    %cst_39 = arith.constant 5.612310e-01 : f32
    %64 = vector.broadcast %cst_39 : f32 to vector<8x72xf32>
    %65 = arith.mulf %63, %64 : vector<8x72xf32>
    %c0_40 = arith.constant 0 : index
    %c0_41 = arith.constant 0 : index
    %66 = vector.load %arg7[%c0_40, %c0_41] : memref<8x72xf32, #tpu.memory_space<vmem>>, vector<8x72xf32>
    tpu.vector_store %arg7[%c0_40, %c0_41], %65 {strides = array<i32>} : memref<8x72xf32, #tpu.memory_space<vmem>>, vector<8x72xf32>,
    return
  }
  func.func @transform_0(%arg0: i32) -> (i32, i32) {
    %c0_i32 = arith.constant 0 : i32
    %c0_i32_0 = arith.constant 0 : i32
    return %arg0, %c0_i32 : i32, i32
  }
  func.func @transform_1(%arg0: i32) -> (i32, i32) {
    %c0_i32 = arith.constant 0 : i32
    %c0_i32_0 = arith.constant 0 : i32
    %c0_i32_1 = arith.constant 0 : i32
    return %c0_i32, %c0_i32_0 : i32, i32
  }
  func.func @transform_2(%arg0: i32) -> (i32, i32) {
    %c0_i32 = arith.constant 0 : i32
    %c0_i32_0 = arith.constant 0 : i32
    %c0_i32_1 = arith.constant 0 : i32
    return %c0_i32, %c0_i32_0 : i32, i32
  }
  func.func @transform_3(%arg0: i32) -> (i32, i32, i32) {
    %c0_i32 = arith.constant 0 : i32
    %c0_i32_0 = arith.constant 0 : i32
    %c0_i32_1 = arith.constant 0 : i32
    %c0_i32_2 = arith.constant 0 : i32
    return %c0_i32, %c0_i32_0, %c0_i32_1 : i32, i32, i32
  }
  func.func @transform_4(%arg0: i32) -> (i32, i32) {
    %c0_i32 = arith.constant 0 : i32
    %c0_i32_0 = arith.constant 0 : i32
    return %arg0, %c0_i32 : i32, i32
  }
  func.func @transform_5(%arg0: i32) -> (i32, i32) {
    %c0_i32 = arith.constant 0 : i32
    %c0_i32_0 = arith.constant 0 : i32
    return %arg0, %c0_i32 : i32, i32
  }
  func.func @transform_6(%arg0: i32) -> (i32, i32) {
    %c0_i32 = arith.constant 0 : i32
    %c0_i32_0 = arith.constant 0 : i32
    return %arg0, %c0_i32 : i32, i32
  }
}

module attributes {stable_mosaic.version = 11 : i64} {
  func.func @_biaffine_kernel(%arg0: i32, %arg1: i32, %arg2: memref<1x8x256xbf16, #tpu.memory_space<vmem>>, %arg3: memref<1x128x128xbf16, #tpu.memory_space<vmem>>, %arg4: memref<1x1x8x8xf32, #tpu.memory_space<vmem>>) attributes {dimension_semantics = [#tpu.dimension_semantics<parallel>, #tpu.dimension_semantics<parallel>], iteration_bounds = array<i64: 2, 1>, scalar_prefetch = 0 : i64, scratch_operands = 0 : i64, tpu.core_type = #tpu.core_type<tc>, window_params = [{transform_indices = @transform_0, window_bounds = array<i64: 1, 8, 256>}, {transform_indices = @transform_1, window_bounds = array<i64: 1, 128, 128>}, {transform_indices = @transform_2, window_bounds = array<i64: 1, 1, 8, 8>}]} {
    %c0 = arith.constant 0 : index
    %c0_0 = arith.constant 0 : index
    %c0_1 = arith.constant 0 : index
    %0 = vector.load %arg2[%c0, %c0_0, %c0_1] : memref<1x8x256xbf16, #tpu.memory_space<vmem>>, vector<1x8x256xbf16>
    %1 = vector.shape_cast %0 : vector<1x8x256xbf16> to vector<8x256xbf16>
    %2 = vector.extract_strided_slice %1 {offsets = [0, 0], sizes = [8, 128], strides = [1, 1]} : vector<8x256xbf16> to vector<8x128xbf16>
    %3 = vector.extract_strided_slice %1 {offsets = [0, 128], sizes = [8, 128], strides = [1, 1]} : vector<8x256xbf16> to vector<8x128xbf16>
    %c0_2 = arith.constant 0 : index
    %c0_3 = arith.constant 0 : index
    %c0_4 = arith.constant 0 : index
    %4 = vector.load %arg3[%c0_2, %c0_3, %c0_4] : memref<1x128x128xbf16, #tpu.memory_space<vmem>>, vector<1x128x128xbf16>
    %5 = vector.shape_cast %4 : vector<1x128x128xbf16> to vector<128x128xbf16>
    %cst = arith.constant dense<0.000000e+00> : vector<8x128xf32>
    %6 = tpu.matmul %2, %5, %cst {dimension_numbers = #tpu.dot_dimension_numbers<[1], [0], [0], [1], [0, 0, 1, 1], [], []>} : vector<8x128xbf16>, vector<128x128xbf16>, vector<8x128xf32> -> vector<8x128xf32>
    %7 = arith.truncf %6 : vector<8x128xf32> to vector<8x128xbf16>
    %cst_5 = arith.constant dense<0.000000e+00> : vector<8x8xf32>
    %8 = tpu.matmul %7, %3, %cst_5 {dimension_numbers = #tpu.dot_dimension_numbers<[1], [1], [0], [0], [0, 0, 1, 0], [], []>} : vector<8x128xbf16>, vector<8x128xbf16>, vector<8x8xf32> -> vector<8x8xf32>
    %cst_6 = arith.constant 0.176776692 : f32
    %9 = vector.broadcast %cst_6 : f32 to vector<8x8xf32>
    %10 = arith.mulf %8, %9 : vector<8x8xf32>
    %c0_7 = arith.constant 0 : index
    %c0_8 = arith.constant 0 : index
    %c0_9 = arith.constant 0 : index
    %c0_10 = arith.constant 0 : index
    %11 = vector.load %arg4[%c0_7, %c0_8, %c0_9, %c0_10] : memref<1x1x8x8xf32, #tpu.memory_space<vmem>>, vector<1x1x8x8xf32>
    %12 = vector.shape_cast %11 : vector<1x1x8x8xf32> to vector<8x8xf32>
    %13 = vector.shape_cast %10 : vector<8x8xf32> to vector<1x1x8x8xf32>
    tpu.vector_store %arg4[%c0_7, %c0_8, %c0_9, %c0_10], %13 {strides = array<i32>} : memref<1x1x8x8xf32, #tpu.memory_space<vmem>>, vector<1x1x8x8xf32>,
    return
  }
  func.func @transform_0(%arg0: i32, %arg1: i32) -> (i32, i32, i32) {
    %c0_i32 = arith.constant 0 : i32
    %c0_i32_0 = arith.constant 0 : i32
    %c0_i32_1 = arith.constant 0 : i32
    return %arg0, %c0_i32, %c0_i32_0 : i32, i32, i32
  }
  func.func @transform_1(%arg0: i32, %arg1: i32) -> (i32, i32, i32) {
    %c0_i32 = arith.constant 0 : i32
    %c0_i32_0 = arith.constant 0 : i32
    %c0_i32_1 = arith.constant 0 : i32
    return %arg1, %c0_i32, %c0_i32_0 : i32, i32, i32
  }
  func.func @transform_2(%arg0: i32, %arg1: i32) -> (i32, i32, i32, i32) {
    %c0_i32 = arith.constant 0 : i32
    %c0_i32_0 = arith.constant 0 : i32
    %c0_i32_1 = arith.constant 0 : i32
    return %arg0, %arg1, %c0_i32, %c0_i32_0 : i32, i32, i32, i32
  }
}

module attributes {stable_mosaic.version = 11 : i64} {
  func.func @_biaffine_kernel(%arg0: i32, %arg1: i32, %arg2: memref<1x8x256xbf16, #tpu.memory_space<vmem>>, %arg3: memref<1x128x128xbf16, #tpu.memory_space<vmem>>, %arg4: memref<1x1x8x8xf32, #tpu.memory_space<vmem>>) attributes {dimension_semantics = [#tpu.dimension_semantics<parallel>, #tpu.dimension_semantics<parallel>], iteration_bounds = array<i64: 2, 4>, scalar_prefetch = 0 : i64, scratch_operands = 0 : i64, tpu.core_type = #tpu.core_type<tc>, window_params = [{transform_indices = @transform_0, window_bounds = array<i64: 1, 8, 256>}, {transform_indices = @transform_1, window_bounds = array<i64: 1, 128, 128>}, {transform_indices = @transform_2, window_bounds = array<i64: 1, 1, 8, 8>}]} {
    %c0 = arith.constant 0 : index
    %c0_0 = arith.constant 0 : index
    %c0_1 = arith.constant 0 : index
    %0 = vector.load %arg2[%c0, %c0_0, %c0_1] : memref<1x8x256xbf16, #tpu.memory_space<vmem>>, vector<1x8x256xbf16>
    %1 = vector.shape_cast %0 : vector<1x8x256xbf16> to vector<8x256xbf16>
    %2 = vector.extract_strided_slice %1 {offsets = [0, 0], sizes = [8, 128], strides = [1, 1]} : vector<8x256xbf16> to vector<8x128xbf16>
    %3 = vector.extract_strided_slice %1 {offsets = [0, 128], sizes = [8, 128], strides = [1, 1]} : vector<8x256xbf16> to vector<8x128xbf16>
    %c0_2 = arith.constant 0 : index
    %c0_3 = arith.constant 0 : index
    %c0_4 = arith.constant 0 : index
    %4 = vector.load %arg3[%c0_2, %c0_3, %c0_4] : memref<1x128x128xbf16, #tpu.memory_space<vmem>>, vector<1x128x128xbf16>
    %5 = vector.shape_cast %4 : vector<1x128x128xbf16> to vector<128x128xbf16>
    %cst = arith.constant dense<0.000000e+00> : vector<8x128xf32>
    %6 = tpu.matmul %2, %5, %cst {dimension_numbers = #tpu.dot_dimension_numbers<[1], [0], [0], [1], [0, 0, 1, 1], [], []>} : vector<8x128xbf16>, vector<128x128xbf16>, vector<8x128xf32> -> vector<8x128xf32>
    %7 = arith.truncf %6 : vector<8x128xf32> to vector<8x128xbf16>
    %cst_5 = arith.constant dense<0.000000e+00> : vector<8x8xf32>
    %8 = tpu.matmul %7, %3, %cst_5 {dimension_numbers = #tpu.dot_dimension_numbers<[1], [1], [0], [0], [0, 0, 1, 0], [], []>} : vector<8x128xbf16>, vector<8x128xbf16>, vector<8x8xf32> -> vector<8x8xf32>
    %cst_6 = arith.constant 0.176776692 : f32
    %9 = vector.broadcast %cst_6 : f32 to vector<8x8xf32>
    %10 = arith.mulf %8, %9 : vector<8x8xf32>
    %c0_7 = arith.constant 0 : index
    %c0_8 = arith.constant 0 : index
    %c0_9 = arith.constant 0 : index
    %c0_10 = arith.constant 0 : index
    %11 = vector.load %arg4[%c0_7, %c0_8, %c0_9, %c0_10] : memref<1x1x8x8xf32, #tpu.memory_space<vmem>>, vector<1x1x8x8xf32>
    %12 = vector.shape_cast %11 : vector<1x1x8x8xf32> to vector<8x8xf32>
    %13 = vector.shape_cast %10 : vector<8x8xf32> to vector<1x1x8x8xf32>
    tpu.vector_store %arg4[%c0_7, %c0_8, %c0_9, %c0_10], %13 {strides = array<i32>} : memref<1x1x8x8xf32, #tpu.memory_space<vmem>>, vector<1x1x8x8xf32>,
    return
  }
  func.func @transform_0(%arg0: i32, %arg1: i32) -> (i32, i32, i32) {
    %c0_i32 = arith.constant 0 : i32
    %c0_i32_0 = arith.constant 0 : i32
    %c0_i32_1 = arith.constant 0 : i32
    return %arg0, %c0_i32, %c0_i32_0 : i32, i32, i32
  }
  func.func @transform_1(%arg0: i32, %arg1: i32) -> (i32, i32, i32) {
    %c0_i32 = arith.constant 0 : i32
    %c0_i32_0 = arith.constant 0 : i32
    %c0_i32_1 = arith.constant 0 : i32
    return %arg1, %c0_i32, %c0_i32_0 : i32, i32, i32
  }
  func.func @transform_2(%arg0: i32, %arg1: i32) -> (i32, i32, i32, i32) {
    %c0_i32 = arith.constant 0 : i32
    %c0_i32_0 = arith.constant 0 : i32
    %c0_i32_1 = arith.constant 0 : i32
    return %arg0, %arg1, %c0_i32, %c0_i32_0 : i32, i32, i32, i32
  }
}

</mosaic_0001>

<llo_original>
// kernel: custom-call.1
$region0: #{custom-call.1}
  %s0 = inlined_call_operand.vmem [shape: f32[1664], index: 0, kind: output, shape index: {}]

// kernel: mf_second_order_dp_scorer.4
$region0: #{mf_second_order_dp_scorer.4}
  #allocation0 [shape = 'u32[]', space=smem, size = 0x4, offset = 0x4, fixed_abs, tag = 'smem constant byte address 0x4 - core index']
  #allocation1 [shape = 'u32[72,128]{1,0:T(1,128)}', space=vmem, size = 0x9000, scoped, tag = 'internal scratch']
  %s0 = inlined_call_operand.vmem [shape: bf16[2,8,256], index: 0, kind: input, shape index: {}]
  %s1 = inlined_call_operand.vmem [shape: bf16[4,128,128], index: 1, kind: input, shape index: {}]
  %s2 = inlined_call_operand.hbm [shape: f32[2,4,8,8], index: 2, kind: output, shape index: {}]
  %s3 = sld [smem:[#allocation0]]
  $region41: #{mf_second_order_dp_scorer.4} parent=0
    _
  %s5 = ssub.s32 1, %s3
  %s6 = scalar_select 0, %s5, %s3
  $region1: #{mf_second_order_dp_scorer.4} parent=0
    #allocation2 [shape = 'u8[8192]{0}', space=vmem, size = 0x2000, scoped, tag = 'output window, operand 0']
    #allocation3 [shape = 's32[2]{0}', space=sflag, size = 0x8, scoped, tag = 'scoped memory for mf_second_order_dp_scorer.4']
    %7 = vsyncpa [#allocation3], 0
    %s8 = scalar_lea.sflag [#allocation3], 1
    %9 = vsyncpa %s8, 0
    loop: start=0, step=1, limit=10
    $region2: #{mf_second_order_dp_scorer.4} parent=1 // loop_pre_header
      _
    $region3: #{mf_second_order_dp_scorer.4} parent=1 // loop_header
      %s11 = sphi 0, %s15
      %p12 = scmp.ge.s32.totalorder %s11, 10
      %s18 = sphi 0, %s30
      %s19 = sphi 0, %s26
      %s20 = sphi 0, %s18
      %s21 = sphi 0, %s19
      %s22 = sphi 0, %s20
      %s23 = sphi 0, %s21
      %s33 = sphi 0, %s35
      %s36 = sphi 0, %s33
      %s37 = sphi 0, %s36
      %s53 = sphi 0, %s37
      %s59 = sphi 0, %s61
      %s62 = sphi 0, %s59
      %s63 = sphi 0, %s62
      %s79 = sphi 0, %s63
      %s87 = sphi 0, %s89
      %s90 = sphi 0, %s87
      %s91 = sphi 0, %s90
      %s107 = sphi 0, %s91
    $region4: #{mf_second_order_dp_scorer.4} parent=1 // loop_header_branch
      %14 = sbr.rel (%p12) target = $region8
    $region5: #{mf_second_order_dp_scorer.4} parent=1 // loop_body
      %s16 = ssub.s32 %s11, 1
      %s17 = ssub.s32 %s11, 2
      %s24 = sadd.s32 1, %s19
      %p25 = scmp.ge.s32.totalorder %s24, 4
      %s26 = scalar_select %p25, 0, %s24
      %s27 = sadd.s32 1, %s18
      %s28 = scalar_select %p25, %s27, %s18
      %p29 = scmp.ge.s32.totalorder %s28, 2
      %s30 = scalar_select %p29, 0, %s28
      %s31 = ssub.s32 %s18, %s30
      %p32 = scmp.eq.s32.totalorder %s31, 0
      %s34 = sadd.s32 %s33, 1
      %s35 = scalar_select %p32, %s33, %s34
      %p38 = pneg %p32
      %p39 = scmp.eq.s32.totalorder %s11, 7
      %p40 = por %p38, %p39
      %p41 = scmp.ne.s32.totalorder %s33, %s36
      %p42 = scmp.eq.s32.totalorder %s11, 0
      %p43 = por %p41, %p42
      %p44 = scmp.ne.s32.totalorder %s33, %s36
      %p45 = scmp.eq.s32.totalorder %s16, 7
      %p46 = por %p44, %p45
      %p47 = scmp.ne.s32.totalorder %s36, %s37
      %p48 = scmp.eq.s32.totalorder %s16, 0
      %p49 = por %p47, %p48
      %p50 = scmp.ne.s32.totalorder %s36, %s37
      %p51 = scmp.eq.s32.totalorder %s17, 7
      %p52 = por %p50, %p51
      %p54 = scmp.ne.s32.totalorder %s37, %s53
      %p55 = scmp.eq.s32.totalorder %s17, 0
      %p56 = por %p54, %p55
      %s57 = ssub.s32 %s19, %s26
      %p58 = scmp.eq.s32.totalorder %s57, 0
      %s60 = sadd.s32 %s59, 1
      %s61 = scalar_select %p58, %s59, %s60
      %p64 = pneg %p58
      %p65 = scmp.eq.s32.totalorder %s11, 7
      %p66 = por %p64, %p65
      %p67 = scmp.ne.s32.totalorder %s59, %s62
      %p68 = scmp.eq.s32.totalorder %s11, 0
      %p69 = por %p67, %p68
      %p70 = scmp.ne.s32.totalorder %s59, %s62
      %p71 = scmp.eq.s32.totalorder %s16, 7
      %p72 = por %p70, %p71
      %p73 = scmp.ne.s32.totalorder %s62, %s63
      %p74 = scmp.eq.s32.totalorder %s16, 0
      %p75 = por %p73, %p74
      %p76 = scmp.ne.s32.totalorder %s62, %s63
      %p77 = scmp.eq.s32.totalorder %s17, 7
      %p78 = por %p76, %p77
      %p80 = scmp.ne.s32.totalorder %s63, %s79
      %p81 = scmp.eq.s32.totalorder %s17, 0
      %p82 = por %p80, %p81
      %s83 = ssub.s32 %s18, %s30
      %s84 = ssub.s32 %s19, %s26
      %s85 = sor.u32 %s83, %s84
      %p86 = scmp.eq.s32.totalorder %s85, 0
      %s88 = sadd.s32 %s87, 1
      %s89 = scalar_select %p86, %s87, %s88
      %p92 = pneg %p86
      %p93 = scmp.eq.s32.totalorder %s11, 7
      %p94 = por %p92, %p93
      %p95 = scmp.ne.s32.totalorder %s87, %s90
      %p96 = scmp.eq.s32.totalorder %s11, 0
      %p97 = por %p95, %p96
      %p98 = scmp.ne.s32.totalorder %s87, %s90
      %p99 = scmp.eq.s32.totalorder %s16, 7
      %p100 = por %p98, %p99
      %p101 = scmp.ne.s32.totalorder %s90, %s91
      %p102 = scmp.eq.s32.totalorder %s16, 0
      %p103 = por %p101, %p102
      %p104 = scmp.ne.s32.totalorder %s90, %s91
      %p105 = scmp.eq.s32.totalorder %s17, 7
      %p106 = por %p104, %p105
      %p108 = scmp.ne.s32.totalorder %s91, %s107
      %p109 = scmp.eq.s32.totalorder %s17, 0
      %p110 = por %p108, %p109
      %p111 = scmp.le.s32.totalorder 1, %s11
      %p112 = scmp.lt.s32.totalorder %s11, 9
      %p113 = pnand %p111, %p112
      %p114 = pneg %p113
      // Predicated region
      $region9: #{mf_second_order_dp_scorer.4} parent=5 // pred_check
        _
      $region10: #{mf_second_order_dp_scorer.4} parent=5 // pred_check_branch
        %116 = sbr.rel (%p113) target = $region12
      $region11: #{mf_second_order_dp_scorer.4} parent=5 // pred_region
        %s117 = ssub.s32 %s11, 1
      $region12: #{mf_second_order_dp_scorer.4} parent=5 // pred_fallthru
        _
      %p118 = scmp.lt.s32.totalorder %s11, 8
      // Predicated region
      $region13: #{mf_second_order_dp_scorer.4} parent=5 // pred_check
        %p119 = pneg %p118
      $region14: #{mf_second_order_dp_scorer.4} parent=5 // pred_check_branch
        %121 = sbr.rel (%p119) target = $region16
      $region15: #{mf_second_order_dp_scorer.4} parent=5 // pred_region
        // Predicated region
        $region17: #{mf_second_order_dp_scorer.4} parent=15 // pred_check
          %p122 = pneg %p43
        $region18: #{mf_second_order_dp_scorer.4} parent=15 // pred_check_branch
          %124 = sbr.rel (%p122) target = $region20
        $region19: #{mf_second_order_dp_scorer.4} parent=15 // pred_region
          %p125 = scmp.lt.s32.totalorder %s18, 1
          %s126 = scalar_select %p125, %s18, 1
          %s127 = smul.addr %s126, 2
          %s128 = smul.addr %s127, 4
          %s129 = scalar_lea.vmem %s0, %s128
        $region20: #{mf_second_order_dp_scorer.4} parent=15 // pred_fallthru
          _
        // Predicated region
        $region21: #{mf_second_order_dp_scorer.4} parent=15 // pred_check
          %p130 = pneg %p69
        $region22: #{mf_second_order_dp_scorer.4} parent=15 // pred_check_branch
          %132 = sbr.rel (%p130) target = $region24
        $region23: #{mf_second_order_dp_scorer.4} parent=15 // pred_region
          %p133 = scmp.lt.s32.totalorder %s19, 3
          %s134 = scalar_select %p133, %s19, 3
          %s135 = smul.addr %s134, 16
          %s136 = smul.addr %s135, 4
          %s137 = scalar_lea.vmem %s1, %s136
        $region24: #{mf_second_order_dp_scorer.4} parent=15 // pred_fallthru
          _
      $region16: #{mf_second_order_dp_scorer.4} parent=5 // pred_fallthru
        _
      %p138 = scmp.le.s32.totalorder 1, %s11
      %p139 = scmp.lt.s32.totalorder %s11, 9
      %p140 = pnand %p138, %p139
      %p141 = pneg %p140
      // Predicated region
      $region25: #{mf_second_order_dp_scorer.4} parent=5 // pred_check
        _
      $region26: #{mf_second_order_dp_scorer.4} parent=5 // pred_check_branch
        %143 = sbr.rel (%p140) target = $region28
      $region27: #{mf_second_order_dp_scorer.4} parent=5 // pred_region
        %s144 = ssub.s32 %s11, 1
        %p145 = scmp.lt.s32.totalorder %s20, 1
        %s146 = scalar_select %p145, %s20, 1
        %s147 = smul.addr %s146, 2
        %s148 = smul.addr %s147, 4
        %s149 = scalar_lea.vmem %s0, %s148
        %p150 = pneg %p49
        %p151 = pneg %p46
        %p152 = scmp.lt.s32.totalorder %s21, 3
        %s153 = scalar_select %p152, %s21, 3
        %s154 = smul.addr %s153, 16
        %s155 = smul.addr %s154, 4
        %s156 = scalar_lea.vmem %s1, %s155
        %p157 = pneg %p75
        %p158 = pneg %p72
        %p159 = pneg %p103
        %p160 = pneg %p100
        %s161 = sand.u32 %s90, 1
        %s162 = scalar_lea.sflag [#allocation3], %s161
        %s163 = sand.u32 %s90, 1
        %s164 = smul.addr %s163, 8
        %s165 = scalar_lea.vmem [#allocation2], %s164
        %p166 = scmp.lt.s32.totalorder %s20, 1
        %s167 = scalar_select %p166, %s20, 1
        %s168 = smul.addr %s167, 2
        %s169 = smul.addr %s168, 4
        %s170 = scalar_lea.vmem %s0, %s169
        %p171 = scmp.lt.s32.totalorder %s21, 3
        %s172 = scalar_select %p171, %s21, 3
        %s173 = smul.addr %s172, 16
        %s174 = smul.addr %s173, 4
        %s175 = scalar_lea.vmem %s1, %s174
        %v177 = vld [vmem:[%s170] sm:$0xff]
        %v178 = vld [vmem:[%s175] sm:$0xf]
        %v179 = vld [vmem:[%s175 + $0x4] sm:$0xf]
        %v180 = vld [vmem:[%s175 + $0x8] sm:$0xf]
        %v181 = vld [vmem:[%s175 + $0xc] sm:$0xf]
        %v182 = vld [vmem:[%s175 + $0x10] sm:$0xf]
        %v183 = vld [vmem:[%s175 + $0x14] sm:$0xf]
        %v184 = vld [vmem:[%s175 + $0x18] sm:$0xf]
        %v185 = vld [vmem:[%s175 + $0x1c] sm:$0xf]
        %v186 = vld [vmem:[%s175 + $0x20] sm:$0xf]
        %v187 = vld [vmem:[%s175 + $0x24] sm:$0xf]
        %v188 = vld [vmem:[%s175 + $0x28] sm:$0xf]
        %v189 = vld [vmem:[%s175 + $0x2c] sm:$0xf]
        %v190 = vld [vmem:[%s175 + $0x30] sm:$0xf]
        %v191 = vld [vmem:[%s175 + $0x34] sm:$0xf]
        %v192 = vld [vmem:[%s175 + $0x38] sm:$0xf]
        %v193 = vld [vmem:[%s175 + $0x3c] sm:$0xf]
        %v210 = vunpack.c.l.b16 %v178
        %v211 = vunpack.c.l.b16 %v179
        %v212 = vunpack.c.l.b16 %v180
        %v213 = vunpack.c.l.b16 %v181
        %v214 = vunpack.c.l.b16 %v182
        %v215 = vunpack.c.l.b16 %v183
        %v216 = vunpack.c.l.b16 %v184
        %v217 = vunpack.c.l.b16 %v185
        %v218 = vunpack.c.l.b16 %v186
        %v219 = vunpack.c.l.b16 %v187
        %v220 = vunpack.c.l.b16 %v188
        %v221 = vunpack.c.l.b16 %v189
        %v222 = vunpack.c.l.b16 %v190
        %v223 = vunpack.c.l.b16 %v191
        %v224 = vunpack.c.l.b16 %v192
        %v225 = vunpack.c.l.b16 %v193
        %v226 = vpack.c.b16 %v211, %v210
        %v227 = vpack.c.b16 %v213, %v212
        %v228 = vpack.c.b16 %v215, %v214
        %v229 = vpack.c.b16 %v217, %v216
        %v230 = vpack.c.b16 %v219, %v218
        %v231 = vpack.c.b16 %v221, %v220
        %v232 = vpack.c.b16 %v223, %v222
        %v233 = vpack.c.b16 %v225, %v224
        %242 = vmatpush.bf16.msra.mxu0 %v233
        %243 = vmatpush.bf16.msra.mxu0 %v232
        %244 = vmatpush.bf16.msra.mxu0 %v231
        %245 = vmatpush.bf16.msra.mxu0 %v230
        %246 = vmatpush.bf16.msra.mxu0 %v229
        %247 = vmatpush.bf16.msra.mxu0 %v228
        %248 = vmatpush.bf16.msra.mxu0 %v227
        %249 = vmatpush.bf16.msra.mxu0 %v226
        %250 = vmatmul.bf16.gmra.mxu0 %v177
        %v251 = vpop.f32.mrf.mxu0
        %v252 = vadd.f32 0.0, %v251
        %v253 = vpop.f32.mrf.mxu0
        %254 = vdwg.mxu0
        %v255 = vpack.c.bf16 %v252, %v252
        %v257 = vunpack.c.h.b16 %v177
        %v258 = vpack.c.b16 %v257, %v257
        %260 = vmatpush.bf16.xpose.msra.mxu0 0
        %261 = vmatpush.bf16.xpose.msra.mxu0 0
        %262 = vmatpush.bf16.xpose.msra.mxu0 0
        %263 = vmatpush.bf16.xpose.msra.mxu0 0
        %264 = vmatpush.bf16.xpose.msra.mxu0 0
        %265 = vmatpush.bf16.xpose.msra.mxu0 0
        %266 = vmatpush.bf16.xpose.msra.mxu0 0
        %267 = vmatpush.bf16.xpose.msra.mxu0 %v258
        %268 = vmatmul.bf16.gmra.mxu0 %v255
        %v269 = vpop.f32.mrf.mxu0
        %v270 = vadd.f32 0.0, %v269
        %v271 = vpop.f32.mrf.mxu0
        %272 = vdwg.mxu0
        %v273 = vmul.f32 %v270, 0.17677669
        %vm274 = vcmask 64512
        %275 = vst.msk [vmem:[%s165] sm:$0xff] %vm274, %v273
        %s276 = sand.u32 %s90, 1
        %s277 = scalar_lea.sflag [#allocation3], %s276
        %s278 = sand.u32 %s90, 1
        %s279 = smul.addr %s278, 8
        %s280 = scalar_lea.vmem [#allocation2], %s279
        // Predicated region
        $region29: #{mf_second_order_dp_scorer.4} parent=27 // pred_check
          %p281 = pneg %p100
        $region30: #{mf_second_order_dp_scorer.4} parent=27 // pred_check_branch
          %283 = sbr.rel (%p281) target = $region32
        $region31: #{mf_second_order_dp_scorer.4} parent=27 // pred_region
          %285 = vsyncadd %s277, 0
          %s286 = smul.addr %s20, 4
          %s287 = sadd.s32 %s21, %s286
          %s288 = smul.addr %s287, 8
          %s289 = scalar_lea.hbm %s2, %s288
          %s291 = sshll.u32 %s280, 4
          %s292 = int_to_ptr.vmem [resolvable:$true] %s291
          %s293 = sshll.u32 %s289, 4
          %s294 = int_to_ptr.hbm [resolvable:$true] %s293
          %296 = dma.vmem_to_hbm [thread:$0]  %s292, 128, %s294, %s277
        $region32: #{mf_second_order_dp_scorer.4} parent=27 // pred_fallthru
          _
      $region28: #{mf_second_order_dp_scorer.4} parent=5 // pred_fallthru
        _
      %p297 = scmp.le.s32.totalorder 2, %s11
      // Predicated region
      $region33: #{mf_second_order_dp_scorer.4} parent=5 // pred_check
        %p298 = pneg %p297
      $region34: #{mf_second_order_dp_scorer.4} parent=5 // pred_check_branch
        %300 = sbr.rel (%p298) target = $region36
      $region35: #{mf_second_order_dp_scorer.4} parent=5 // pred_region
        %s301 = ssub.s32 %s11, 2
        // Predicated region
        $region37: #{mf_second_order_dp_scorer.4} parent=35 // pred_check
          %p302 = pneg %p106
        $region38: #{mf_second_order_dp_scorer.4} parent=35 // pred_check_branch
          %304 = sbr.rel (%p302) target = $region40
        $region39: #{mf_second_order_dp_scorer.4} parent=35 // pred_region
          %s305 = sand.u32 %s91, 1
          %s306 = scalar_lea.sflag [#allocation3], %s305
          %s307 = sand.u32 %s91, 1
          %s308 = smul.addr %s307, 8
          %s309 = scalar_lea.vmem [#allocation2], %s308
          %311 = dma.done %s306, 128
        $region40: #{mf_second_order_dp_scorer.4} parent=35 // pred_fallthru
          _
      $region36: #{mf_second_order_dp_scorer.4} parent=5 // pred_fallthru
        _
    $region6: #{mf_second_order_dp_scorer.4} parent=1 // loop_footer
      %s15 = sadd.s32 1, %s11
    $region7: #{mf_second_order_dp_scorer.4} parent=1 // loop_footer_branch
      %10 = sbr.rel target = $region3
    $region8: #{mf_second_order_dp_scorer.4} parent=1 // loop_exit
      _
    %312 = vsyncpa [#allocation3], 1
    %s313 = scalar_lea.sflag [#allocation3], 1
    %314 = vsyncpa %s313, 1

// kernel: mf_second_order_dp_scorer.5
$region0: #{mf_second_order_dp_scorer.5}
  #allocation0 [shape = 'u32[]', space=smem, size = 0x4, offset = 0x4, fixed_abs, tag = 'smem constant byte address 0x4 - core index']
  #allocation1 [shape = 'u32[72,128]{1,0:T(1,128)}', space=vmem, size = 0x9000, scoped, tag = 'internal scratch']
  %s0 = inlined_call_operand.vmem [shape: bf16[2,8,256], index: 0, kind: input, shape index: {}]
  %s1 = inlined_call_operand.vmem [shape: bf16[1,128,128], index: 1, kind: input, shape index: {}]
  %s2 = inlined_call_operand.hbm [shape: f32[2,1,8,8], index: 2, kind: output, shape index: {}]
  %s3 = sld [smem:[#allocation0]]
  $region41: #{mf_second_order_dp_scorer.5} parent=0
    _
  %s5 = ssub.s32 1, %s3
  %s6 = scalar_select 0, %s5, %s3
  $region1: #{mf_second_order_dp_scorer.5} parent=0
    #allocation2 [shape = 'u8[8192]{0}', space=vmem, size = 0x2000, scoped, tag = 'output window, operand 0']
    #allocation3 [shape = 's32[2]{0}', space=sflag, size = 0x8, scoped, tag = 'scoped memory for mf_second_order_dp_scorer.5']
    %7 = vsyncpa [#allocation3], 0
    %s8 = scalar_lea.sflag [#allocation3], 1
    %9 = vsyncpa %s8, 0
    loop: start=0, step=1, limit=4
    $region2: #{mf_second_order_dp_scorer.5} parent=1 // loop_pre_header
      _
    $region3: #{mf_second_order_dp_scorer.5} parent=1 // loop_header
      %s11 = sphi 0, %s15
      %p12 = scmp.ge.s32.totalorder %s11, 4
      %s18 = sphi 0, %s30
      %s19 = sphi 0, %s26
      %s20 = sphi 0, %s18
      %s21 = sphi 0, %s19
      %s22 = sphi 0, %s20
      %s23 = sphi 0, %s21
      %s33 = sphi 0, %s35
      %s36 = sphi 0, %s33
      %s37 = sphi 0, %s36
      %s53 = sphi 0, %s37
      %s59 = sphi 0, %s61
      %s62 = sphi 0, %s59
      %s63 = sphi 0, %s62
      %s79 = sphi 0, %s63
      %s87 = sphi 0, %s89
      %s90 = sphi 0, %s87
      %s91 = sphi 0, %s90
      %s107 = sphi 0, %s91
    $region4: #{mf_second_order_dp_scorer.5} parent=1 // loop_header_branch
      %14 = sbr.rel (%p12) target = $region8
    $region5: #{mf_second_order_dp_scorer.5} parent=1 // loop_body
      %s16 = ssub.s32 %s11, 1
      %s17 = ssub.s32 %s11, 2
      %s24 = sadd.s32 1, %s19
      %p25 = scmp.ge.s32.totalorder %s24, 1
      %s26 = scalar_select %p25, 0, %s24
      %s27 = sadd.s32 1, %s18
      %s28 = scalar_select %p25, %s27, %s18
      %p29 = scmp.ge.s32.totalorder %s28, 2
      %s30 = scalar_select %p29, 0, %s28
      %s31 = ssub.s32 %s18, %s30
      %p32 = scmp.eq.s32.totalorder %s31, 0
      %s34 = sadd.s32 %s33, 1
      %s35 = scalar_select %p32, %s33, %s34
      %p38 = pneg %p32
      %p39 = scmp.eq.s32.totalorder %s11, 1
      %p40 = por %p38, %p39
      %p41 = scmp.ne.s32.totalorder %s33, %s36
      %p42 = scmp.eq.s32.totalorder %s11, 0
      %p43 = por %p41, %p42
      %p44 = scmp.ne.s32.totalorder %s33, %s36
      %p45 = scmp.eq.s32.totalorder %s16, 1
      %p46 = por %p44, %p45
      %p47 = scmp.ne.s32.totalorder %s36, %s37
      %p48 = scmp.eq.s32.totalorder %s16, 0
      %p49 = por %p47, %p48
      %p50 = scmp.ne.s32.totalorder %s36, %s37
      %p51 = scmp.eq.s32.totalorder %s17, 1
      %p52 = por %p50, %p51
      %p54 = scmp.ne.s32.totalorder %s37, %s53
      %p55 = scmp.eq.s32.totalorder %s17, 0
      %p56 = por %p54, %p55
      %s57 = ssub.s32 %s19, %s26
      %p58 = scmp.eq.s32.totalorder %s57, 0
      %s60 = sadd.s32 %s59, 1
      %s61 = scalar_select %p58, %s59, %s60
      %p64 = pneg %p58
      %p65 = scmp.eq.s32.totalorder %s11, 1
      %p66 = por %p64, %p65
      %p67 = scmp.ne.s32.totalorder %s59, %s62
      %p68 = scmp.eq.s32.totalorder %s11, 0
      %p69 = por %p67, %p68
      %p70 = scmp.ne.s32.totalorder %s59, %s62
      %p71 = scmp.eq.s32.totalorder %s16, 1
      %p72 = por %p70, %p71
      %p73 = scmp.ne.s32.totalorder %s62, %s63
      %p74 = scmp.eq.s32.totalorder %s16, 0
      %p75 = por %p73, %p74
      %p76 = scmp.ne.s32.totalorder %s62, %s63
      %p77 = scmp.eq.s32.totalorder %s17, 1
      %p78 = por %p76, %p77
      %p80 = scmp.ne.s32.totalorder %s63, %s79
      %p81 = scmp.eq.s32.totalorder %s17, 0
      %p82 = por %p80, %p81
      %s83 = ssub.s32 %s18, %s30
      %s84 = ssub.s32 %s19, %s26
      %s85 = sor.u32 %s83, %s84
      %p86 = scmp.eq.s32.totalorder %s85, 0
      %s88 = sadd.s32 %s87, 1
      %s89 = scalar_select %p86, %s87, %s88
      %p92 = pneg %p86
      %p93 = scmp.eq.s32.totalorder %s11, 1
      %p94 = por %p92, %p93
      %p95 = scmp.ne.s32.totalorder %s87, %s90
      %p96 = scmp.eq.s32.totalorder %s11, 0
      %p97 = por %p95, %p96
      %p98 = scmp.ne.s32.totalorder %s87, %s90
      %p99 = scmp.eq.s32.totalorder %s16, 1
      %p100 = por %p98, %p99
      %p101 = scmp.ne.s32.totalorder %s90, %s91
      %p102 = scmp.eq.s32.totalorder %s16, 0
      %p103 = por %p101, %p102
      %p104 = scmp.ne.s32.totalorder %s90, %s91
      %p105 = scmp.eq.s32.totalorder %s17, 1
      %p106 = por %p104, %p105
      %p108 = scmp.ne.s32.totalorder %s91, %s107
      %p109 = scmp.eq.s32.totalorder %s17, 0
      %p110 = por %p108, %p109
      %p111 = scmp.le.s32.totalorder 1, %s11
      %p112 = scmp.lt.s32.totalorder %s11, 3
      %p113 = pnand %p111, %p112
      %p114 = pneg %p113
      // Predicated region
      $region9: #{mf_second_order_dp_scorer.5} parent=5 // pred_check
        _
      $region10: #{mf_second_order_dp_scorer.5} parent=5 // pred_check_branch
        %116 = sbr.rel (%p113) target = $region12
      $region11: #{mf_second_order_dp_scorer.5} parent=5 // pred_region
        %s117 = ssub.s32 %s11, 1
        // Predicated region
        $region13: #{mf_second_order_dp_scorer.5} parent=11 // pred_check
          %p118 = pneg %p75
        $region14: #{mf_second_order_dp_scorer.5} parent=11 // pred_check_branch
          %120 = sbr.rel (%p118) target = $region16
        $region15: #{mf_second_order_dp_scorer.5} parent=11 // pred_region
          %p121 = scmp.lt.s32.totalorder %s21, 0
          %s122 = scalar_select %p121, %s21, 0
          %s123 = smul.addr %s122, 16
          %s124 = smul.addr %s123, 4
          %s125 = scalar_lea.vmem %s1, %s124
        $region16: #{mf_second_order_dp_scorer.5} parent=11 // pred_fallthru
          _
      $region12: #{mf_second_order_dp_scorer.5} parent=5 // pred_fallthru
        _
      %p126 = scmp.lt.s32.totalorder %s11, 2
      // Predicated region
      $region17: #{mf_second_order_dp_scorer.5} parent=5 // pred_check
        %p127 = pneg %p126
      $region18: #{mf_second_order_dp_scorer.5} parent=5 // pred_check_branch
        %129 = sbr.rel (%p127) target = $region20
      $region19: #{mf_second_order_dp_scorer.5} parent=5 // pred_region
        // Predicated region
        $region21: #{mf_second_order_dp_scorer.5} parent=19 // pred_check
          %p130 = pneg %p43
        $region22: #{mf_second_order_dp_scorer.5} parent=19 // pred_check_branch
          %132 = sbr.rel (%p130) target = $region24
        $region23: #{mf_second_order_dp_scorer.5} parent=19 // pred_region
          %p133 = scmp.lt.s32.totalorder %s18, 1
          %s134 = scalar_select %p133, %s18, 1
          %s135 = smul.addr %s134, 2
          %s136 = smul.addr %s135, 4
          %s137 = scalar_lea.vmem %s0, %s136
        $region24: #{mf_second_order_dp_scorer.5} parent=19 // pred_fallthru
          _
      $region20: #{mf_second_order_dp_scorer.5} parent=5 // pred_fallthru
        _
      %p138 = scmp.le.s32.totalorder 1, %s11
      %p139 = scmp.lt.s32.totalorder %s11, 3
      %p140 = pnand %p138, %p139
      %p141 = pneg %p140
      // Predicated region
      $region25: #{mf_second_order_dp_scorer.5} parent=5 // pred_check
        _
      $region26: #{mf_second_order_dp_scorer.5} parent=5 // pred_check_branch
        %143 = sbr.rel (%p140) target = $region28
      $region27: #{mf_second_order_dp_scorer.5} parent=5 // pred_region
        %s144 = ssub.s32 %s11, 1
        %p145 = scmp.lt.s32.totalorder %s20, 1
        %s146 = scalar_select %p145, %s20, 1
        %s147 = smul.addr %s146, 2
        %s148 = smul.addr %s147, 4
        %s149 = scalar_lea.vmem %s0, %s148
        %p150 = pneg %p49
        %p151 = pneg %p46
        %p152 = scmp.lt.s32.totalorder %s21, 0
        %s153 = scalar_select %p152, %s21, 0
        %s154 = smul.addr %s153, 16
        %s155 = smul.addr %s154, 4
        %s156 = scalar_lea.vmem %s1, %s155
        %p157 = pneg %p75
        %p158 = pneg %p72
        %p159 = pneg %p103
        %p160 = pneg %p100
        %s161 = sand.u32 %s90, 1
        %s162 = scalar_lea.sflag [#allocation3], %s161
        %s163 = sand.u32 %s90, 1
        %s164 = smul.addr %s163, 8
        %s165 = scalar_lea.vmem [#allocation2], %s164
        %p166 = scmp.lt.s32.totalorder %s20, 1
        %s167 = scalar_select %p166, %s20, 1
        %s168 = smul.addr %s167, 2
        %s169 = smul.addr %s168, 4
        %s170 = scalar_lea.vmem %s0, %s169
        %p171 = scmp.lt.s32.totalorder %s21, 0
        %s172 = scalar_select %p171, %s21, 0
        %s173 = smul.addr %s172, 16
        %s174 = smul.addr %s173, 4
        %s175 = scalar_lea.vmem %s1, %s174
        %v177 = vld [vmem:[%s170] sm:$0xff]
        %v178 = vld [vmem:[%s175] sm:$0xf]
        %v179 = vld [vmem:[%s175 + $0x4] sm:$0xf]
        %v180 = vld [vmem:[%s175 + $0x8] sm:$0xf]
        %v181 = vld [vmem:[%s175 + $0xc] sm:$0xf]
        %v182 = vld [vmem:[%s175 + $0x10] sm:$0xf]
        %v183 = vld [vmem:[%s175 + $0x14] sm:$0xf]
        %v184 = vld [vmem:[%s175 + $0x18] sm:$0xf]
        %v185 = vld [vmem:[%s175 + $0x1c] sm:$0xf]
        %v186 = vld [vmem:[%s175 + $0x20] sm:$0xf]
        %v187 = vld [vmem:[%s175 + $0x24] sm:$0xf]
        %v188 = vld [vmem:[%s175 + $0x28] sm:$0xf]
        %v189 = vld [vmem:[%s175 + $0x2c] sm:$0xf]
        %v190 = vld [vmem:[%s175 + $0x30] sm:$0xf]
        %v191 = vld [vmem:[%s175 + $0x34] sm:$0xf]
        %v192 = vld [vmem:[%s175 + $0x38] sm:$0xf]
        %v193 = vld [vmem:[%s175 + $0x3c] sm:$0xf]
        %v210 = vunpack.c.l.b16 %v178
        %v211 = vunpack.c.l.b16 %v179
        %v212 = vunpack.c.l.b16 %v180
        %v213 = vunpack.c.l.b16 %v181
        %v214 = vunpack.c.l.b16 %v182
        %v215 = vunpack.c.l.b16 %v183
        %v216 = vunpack.c.l.b16 %v184
        %v217 = vunpack.c.l.b16 %v185
        %v218 = vunpack.c.l.b16 %v186
        %v219 = vunpack.c.l.b16 %v187
        %v220 = vunpack.c.l.b16 %v188
        %v221 = vunpack.c.l.b16 %v189
        %v222 = vunpack.c.l.b16 %v190
        %v223 = vunpack.c.l.b16 %v191
        %v224 = vunpack.c.l.b16 %v192
        %v225 = vunpack.c.l.b16 %v193
        %v226 = vpack.c.b16 %v211, %v210
        %v227 = vpack.c.b16 %v213, %v212
        %v228 = vpack.c.b16 %v215, %v214
        %v229 = vpack.c.b16 %v217, %v216
        %v230 = vpack.c.b16 %v219, %v218
        %v231 = vpack.c.b16 %v221, %v220
        %v232 = vpack.c.b16 %v223, %v222
        %v233 = vpack.c.b16 %v225, %v224
        %242 = vmatpush.bf16.msra.mxu0 %v233
        %243 = vmatpush.bf16.msra.mxu0 %v232
        %244 = vmatpush.bf16.msra.mxu0 %v231
        %245 = vmatpush.bf16.msra.mxu0 %v230
        %246 = vmatpush.bf16.msra.mxu0 %v229
        %247 = vmatpush.bf16.msra.mxu0 %v228
        %248 = vmatpush.bf16.msra.mxu0 %v227
        %249 = vmatpush.bf16.msra.mxu0 %v226
        %250 = vmatmul.bf16.gmra.mxu0 %v177
        %v251 = vpop.f32.mrf.mxu0
        %v252 = vadd.f32 0.0, %v251
        %v253 = vpop.f32.mrf.mxu0
        %254 = vdwg.mxu0
        %v255 = vpack.c.bf16 %v252, %v252
        %v257 = vunpack.c.h.b16 %v177
        %v258 = vpack.c.b16 %v257, %v257
        %260 = vmatpush.bf16.xpose.msra.mxu0 0
        %261 = vmatpush.bf16.xpose.msra.mxu0 0
        %262 = vmatpush.bf16.xpose.msra.mxu0 0
        %263 = vmatpush.bf16.xpose.msra.mxu0 0
        %264 = vmatpush.bf16.xpose.msra.mxu0 0
        %265 = vmatpush.bf16.xpose.msra.mxu0 0
        %266 = vmatpush.bf16.xpose.msra.mxu0 0
        %267 = vmatpush.bf16.xpose.msra.mxu0 %v258
        %268 = vmatmul.bf16.gmra.mxu0 %v255
        %v269 = vpop.f32.mrf.mxu0
        %v270 = vadd.f32 0.0, %v269
        %v271 = vpop.f32.mrf.mxu0
        %272 = vdwg.mxu0
        %v273 = vmul.f32 %v270, 0.17677669
        %vm274 = vcmask 64512
        %275 = vst.msk [vmem:[%s165] sm:$0xff] %vm274, %v273
        %s276 = sand.u32 %s90, 1
        %s277 = scalar_lea.sflag [#allocation3], %s276
        %s278 = sand.u32 %s90, 1
        %s279 = smul.addr %s278, 8
        %s280 = scalar_lea.vmem [#allocation2], %s279
        // Predicated region
        $region29: #{mf_second_order_dp_scorer.5} parent=27 // pred_check
          %p281 = pneg %p100
        $region30: #{mf_second_order_dp_scorer.5} parent=27 // pred_check_branch
          %283 = sbr.rel (%p281) target = $region32
        $region31: #{mf_second_order_dp_scorer.5} parent=27 // pred_region
          %285 = vsyncadd %s277, 0
          %s286 = sadd.s32 %s21, %s20
          %s287 = smul.addr %s286, 8
          %s288 = scalar_lea.hbm %s2, %s287
          %s290 = sshll.u32 %s280, 4
          %s291 = int_to_ptr.vmem [resolvable:$true] %s290
          %s292 = sshll.u32 %s288, 4
          %s293 = int_to_ptr.hbm [resolvable:$true] %s292
          %295 = dma.vmem_to_hbm [thread:$0]  %s291, 128, %s293, %s277
        $region32: #{mf_second_order_dp_scorer.5} parent=27 // pred_fallthru
          _
      $region28: #{mf_second_order_dp_scorer.5} parent=5 // pred_fallthru
        _
      %p296 = scmp.le.s32.totalorder 2, %s11
      // Predicated region
      $region33: #{mf_second_order_dp_scorer.5} parent=5 // pred_check
        %p297 = pneg %p296
      $region34: #{mf_second_order_dp_scorer.5} parent=5 // pred_check_branch
        %299 = sbr.rel (%p297) target = $region36
      $region35: #{mf_second_order_dp_scorer.5} parent=5 // pred_region
        %s300 = ssub.s32 %s11, 2
        // Predicated region
        $region37: #{mf_second_order_dp_scorer.5} parent=35 // pred_check
          %p301 = pneg %p106
        $region38: #{mf_second_order_dp_scorer.5} parent=35 // pred_check_branch
          %303 = sbr.rel (%p301) target = $region40
        $region39: #{mf_second_order_dp_scorer.5} parent=35 // pred_region
          %s304 = sand.u32 %s91, 1
          %s305 = scalar_lea.sflag [#allocation3], %s304
          %s306 = sand.u32 %s91, 1
          %s307 = smul.addr %s306, 8
          %s308 = scalar_lea.vmem [#allocation2], %s307
          %310 = dma.done %s305, 128
        $region40: #{mf_second_order_dp_scorer.5} parent=35 // pred_fallthru
          _
      $region36: #{mf_second_order_dp_scorer.5} parent=5 // pred_fallthru
        _
    $region6: #{mf_second_order_dp_scorer.5} parent=1 // loop_footer
      %s15 = sadd.s32 1, %s11
    $region7: #{mf_second_order_dp_scorer.5} parent=1 // loop_footer_branch
      %10 = sbr.rel target = $region3
    $region8: #{mf_second_order_dp_scorer.5} parent=1 // loop_exit
      _
    %311 = vsyncpa [#allocation3], 1
    %s312 = scalar_lea.sflag [#allocation3], 1
    %313 = vsyncpa %s312, 1

// kernel: mf_second_order_dp_scorer.3
$region0: #{mf_second_order_dp_scorer.3}
  #allocation0 [shape = 'u32[]', space=smem, size = 0x4, offset = 0x4, fixed_abs, tag = 'smem constant byte address 0x4 - core index']
  #allocation1 [shape = 'u32[72,128]{1,0:T(1,128)}', space=vmem, size = 0x9000, scoped, tag = 'internal scratch']
  %s0 = inlined_call_operand.vmem [shape: f32[16,32], index: 0, kind: input, shape index: {}]
  %s1 = inlined_call_operand.vmem [shape: bf16[32,1664], index: 1, kind: input, shape index: {}]
  %s2 = inlined_call_operand.vmem [shape: f32[1,1664], index: 2, kind: input, shape index: {}]
  %s3 = inlined_call_operand.vmem [shape: bf16[9,128,8], index: 3, kind: input, shape index: {}]
  %s4 = inlined_call_operand.vmem [shape: bf16[16,256], index: 4, kind: output, shape index: {0}]
  %s5 = inlined_call_operand.vmem [shape: bf16[16,256], index: 5, kind: output, shape index: {1}]
  %s6 = inlined_call_operand.vmem [shape: f32[16,72], index: 6, kind: output, shape index: {2}]
  %7 = xla_tuple %s4, %s5, %s6
  %s8 = sld [smem:[#allocation0]]
  $region65: #{mf_second_order_dp_scorer.3} parent=0
    _
  %s10 = ssub.s32 1, %s8
  %s11 = scalar_select 0, %s10, %s8
  loop: start=0, step=1, limit=4
  $region2: #{mf_second_order_dp_scorer.3} parent=0 // loop_pre_header
    _
  $region3: #{mf_second_order_dp_scorer.3} parent=0 // loop_header
    %s13 = sphi 0, %s17
    %p14 = scmp.ge.s32.totalorder %s13, 4
    %s23 = sphi 0, %s25
    %s26 = sphi 0, %s23
    %s27 = sphi 0, %s26
    %s43 = sphi 0, %s27
    %s47 = sphi 0, %s47
    %s49 = sphi 0, %s47
    %s50 = sphi 0, %s49
    %s64 = sphi 0, %s50
    %s68 = sphi 0, %s68
    %s70 = sphi 0, %s68
    %s71 = sphi 0, %s70
    %s85 = sphi 0, %s71
    %s89 = sphi 0, %s89
    %s91 = sphi 0, %s89
    %s92 = sphi 0, %s91
    %s106 = sphi 0, %s92
    %s112 = sphi 0, %s114
    %s115 = sphi 0, %s112
    %s116 = sphi 0, %s115
    %s132 = sphi 0, %s116
    %s138 = sphi 0, %s140
    %s141 = sphi 0, %s138
    %s142 = sphi 0, %s141
    %s158 = sphi 0, %s142
    %s164 = sphi 0, %s166
    %s167 = sphi 0, %s164
    %s168 = sphi 0, %s167
    %s184 = sphi 0, %s168
  $region4: #{mf_second_order_dp_scorer.3} parent=0 // loop_header_branch
    %16 = sbr.rel (%p14) target = $region8
  $region5: #{mf_second_order_dp_scorer.3} parent=0 // loop_body
    %s18 = ssub.s32 %s13, 1
    %s19 = ssub.s32 %s13, 2
    %s20 = sadd.s32 %s13, 1
    %s21 = ssub.s32 %s13, %s20
    %p22 = scmp.eq.s32.totalorder %s21, 0
    %s24 = sadd.s32 %s23, 1
    %s25 = scalar_select %p22, %s23, %s24
    %p28 = pneg %p22
    %p29 = scmp.eq.s32.totalorder %s13, 1
    %p30 = por %p28, %p29
    %p31 = scmp.ne.s32.totalorder %s23, %s26
    %p32 = scmp.eq.s32.totalorder %s13, 0
    %p33 = por %p31, %p32
    %p34 = scmp.ne.s32.totalorder %s23, %s26
    %p35 = scmp.eq.s32.totalorder %s18, 1
    %p36 = por %p34, %p35
    %p37 = scmp.ne.s32.totalorder %s26, %s27
    %p38 = scmp.eq.s32.totalorder %s18, 0
    %p39 = por %p37, %p38
    %p40 = scmp.ne.s32.totalorder %s26, %s27
    %p41 = scmp.eq.s32.totalorder %s19, 1
    %p42 = por %p40, %p41
    %p44 = scmp.ne.s32.totalorder %s27, %s43
    %p45 = scmp.eq.s32.totalorder %s19, 0
    %p46 = por %p44, %p45
    %s48 = sadd.s32 %s47, 1
    %p51 = scmp.eq.s32.totalorder %s13, 1
    %p52 = scmp.ne.s32.totalorder %s47, %s49
    %p53 = scmp.eq.s32.totalorder %s13, 0
    %p54 = por %p52, %p53
    %p55 = scmp.ne.s32.totalorder %s47, %s49
    %p56 = scmp.eq.s32.totalorder %s18, 1
    %p57 = por %p55, %p56
    %p58 = scmp.ne.s32.totalorder %s49, %s50
    %p59 = scmp.eq.s32.totalorder %s18, 0
    %p60 = por %p58, %p59
    %p61 = scmp.ne.s32.totalorder %s49, %s50
    %p62 = scmp.eq.s32.totalorder %s19, 1
    %p63 = por %p61, %p62
    %p65 = scmp.ne.s32.totalorder %s50, %s64
    %p66 = scmp.eq.s32.totalorder %s19, 0
    %p67 = por %p65, %p66
    %s69 = sadd.s32 %s68, 1
    %p72 = scmp.eq.s32.totalorder %s13, 1
    %p73 = scmp.ne.s32.totalorder %s68, %s70
    %p74 = scmp.eq.s32.totalorder %s13, 0
    %p75 = por %p73, %p74
    %p76 = scmp.ne.s32.totalorder %s68, %s70
    %p77 = scmp.eq.s32.totalorder %s18, 1
    %p78 = por %p76, %p77
    %p79 = scmp.ne.s32.totalorder %s70, %s71
    %p80 = scmp.eq.s32.totalorder %s18, 0
    %p81 = por %p79, %p80
    %p82 = scmp.ne.s32.totalorder %s70, %s71
    %p83 = scmp.eq.s32.totalorder %s19, 1
    %p84 = por %p82, %p83
    %p86 = scmp.ne.s32.totalorder %s71, %s85
    %p87 = scmp.eq.s32.totalorder %s19, 0
    %p88 = por %p86, %p87
    %s90 = sadd.s32 %s89, 1
    %p93 = scmp.eq.s32.totalorder %s13, 1
    %p94 = scmp.ne.s32.totalorder %s89, %s91
    %p95 = scmp.eq.s32.totalorder %s13, 0
    %p96 = por %p94, %p95
    %p97 = scmp.ne.s32.totalorder %s89, %s91
    %p98 = scmp.eq.s32.totalorder %s18, 1
    %p99 = por %p97, %p98
    %p100 = scmp.ne.s32.totalorder %s91, %s92
    %p101 = scmp.eq.s32.totalorder %s18, 0
    %p102 = por %p100, %p101
    %p103 = scmp.ne.s32.totalorder %s91, %s92
    %p104 = scmp.eq.s32.totalorder %s19, 1
    %p105 = por %p103, %p104
    %p107 = scmp.ne.s32.totalorder %s92, %s106
    %p108 = scmp.eq.s32.totalorder %s19, 0
    %p109 = por %p107, %p108
    %s110 = ssub.s32 %s13, %s20
    %p111 = scmp.eq.s32.totalorder %s110, 0
    %s113 = sadd.s32 %s112, 1
    %s114 = scalar_select %p111, %s112, %s113
    %p117 = pneg %p111
    %p118 = scmp.eq.s32.totalorder %s13, 1
    %p119 = por %p117, %p118
    %p120 = scmp.ne.s32.totalorder %s112, %s115
    %p121 = scmp.eq.s32.totalorder %s13, 0
    %p122 = por %p120, %p121
    %p123 = scmp.ne.s32.totalorder %s112, %s115
    %p124 = scmp.eq.s32.totalorder %s18, 1
    %p125 = por %p123, %p124
    %p126 = scmp.ne.s32.totalorder %s115, %s116
    %p127 = scmp.eq.s32.totalorder %s18, 0
    %p128 = por %p126, %p127
    %p129 = scmp.ne.s32.totalorder %s115, %s116
    %p130 = scmp.eq.s32.totalorder %s19, 1
    %p131 = por %p129, %p130
    %p133 = scmp.ne.s32.totalorder %s116, %s132
    %p134 = scmp.eq.s32.totalorder %s19, 0
    %p135 = por %p133, %p134
    %s136 = ssub.s32 %s13, %s20
    %p137 = scmp.eq.s32.totalorder %s136, 0
    %s139 = sadd.s32 %s138, 1
    %s140 = scalar_select %p137, %s138, %s139
    %p143 = pneg %p137
    %p144 = scmp.eq.s32.totalorder %s13, 1
    %p145 = por %p143, %p144
    %p146 = scmp.ne.s32.totalorder %s138, %s141
    %p147 = scmp.eq.s32.totalorder %s13, 0
    %p148 = por %p146, %p147
    %p149 = scmp.ne.s32.totalorder %s138, %s141
    %p150 = scmp.eq.s32.totalorder %s18, 1
    %p151 = por %p149, %p150
    %p152 = scmp.ne.s32.totalorder %s141, %s142
    %p153 = scmp.eq.s32.totalorder %s18, 0
    %p154 = por %p152, %p153
    %p155 = scmp.ne.s32.totalorder %s141, %s142
    %p156 = scmp.eq.s32.totalorder %s19, 1
    %p157 = por %p155, %p156
    %p159 = scmp.ne.s32.totalorder %s142, %s158
    %p160 = scmp.eq.s32.totalorder %s19, 0
    %p161 = por %p159, %p160
    %s162 = ssub.s32 %s13, %s20
    %p163 = scmp.eq.s32.totalorder %s162, 0
    %s165 = sadd.s32 %s164, 1
    %s166 = scalar_select %p163, %s164, %s165
    %p169 = pneg %p163
    %p170 = scmp.eq.s32.totalorder %s13, 1
    %p171 = por %p169, %p170
    %p172 = scmp.ne.s32.totalorder %s164, %s167
    %p173 = scmp.eq.s32.totalorder %s13, 0
    %p174 = por %p172, %p173
    %p175 = scmp.ne.s32.totalorder %s164, %s167
    %p176 = scmp.eq.s32.totalorder %s18, 1
    %p177 = por %p175, %p176
    %p178 = scmp.ne.s32.totalorder %s167, %s168
    %p179 = scmp.eq.s32.totalorder %s18, 0
    %p180 = por %p178, %p179
    %p181 = scmp.ne.s32.totalorder %s167, %s168
    %p182 = scmp.eq.s32.totalorder %s19, 1
    %p183 = por %p181, %p182
    %p185 = scmp.ne.s32.totalorder %s168, %s184
    %p186 = scmp.eq.s32.totalorder %s19, 0
    %p187 = por %p185, %p186
    %p188 = scmp.le.s32.totalorder 1, %s13
    %p189 = scmp.lt.s32.totalorder %s13, 3
    %p190 = pnand %p188, %p189
    %p191 = pneg %p190
    // Predicated region
    $region9: #{mf_second_order_dp_scorer.3} parent=5 // pred_check
      _
    $region10: #{mf_second_order_dp_scorer.3} parent=5 // pred_check_branch
      %193 = sbr.rel (%p190) target = $region12
    $region11: #{mf_second_order_dp_scorer.3} parent=5 // pred_region
      %s194 = ssub.s32 %s13, 1
      // Predicated region
      $region13: #{mf_second_order_dp_scorer.3} parent=11 // pred_check
        %p195 = pneg %p60
      $region14: #{mf_second_order_dp_scorer.3} parent=11 // pred_check_branch
        %197 = sbr.rel (%p195) target = $region16
      $region15: #{mf_second_order_dp_scorer.3} parent=11 // pred_region
        _
      $region16: #{mf_second_order_dp_scorer.3} parent=11 // pred_fallthru
        _
      // Predicated region
      $region17: #{mf_second_order_dp_scorer.3} parent=11 // pred_check
        %p198 = pneg %p81
      $region18: #{mf_second_order_dp_scorer.3} parent=11 // pred_check_branch
        %200 = sbr.rel (%p198) target = $region20
      $region19: #{mf_second_order_dp_scorer.3} parent=11 // pred_region
        _
      $region20: #{mf_second_order_dp_scorer.3} parent=11 // pred_fallthru
        _
      // Predicated region
      $region21: #{mf_second_order_dp_scorer.3} parent=11 // pred_check
        %p201 = pneg %p102
      $region22: #{mf_second_order_dp_scorer.3} parent=11 // pred_check_branch
        %203 = sbr.rel (%p201) target = $region24
      $region23: #{mf_second_order_dp_scorer.3} parent=11 // pred_region
        _
      $region24: #{mf_second_order_dp_scorer.3} parent=11 // pred_fallthru
        _
    $region12: #{mf_second_order_dp_scorer.3} parent=5 // pred_fallthru
      _
    %p204 = scmp.lt.s32.totalorder %s13, 2
    // Predicated region
    $region25: #{mf_second_order_dp_scorer.3} parent=5 // pred_check
      %p205 = pneg %p204
    $region26: #{mf_second_order_dp_scorer.3} parent=5 // pred_check_branch
      %207 = sbr.rel (%p205) target = $region28
    $region27: #{mf_second_order_dp_scorer.3} parent=5 // pred_region
      // Predicated region
      $region29: #{mf_second_order_dp_scorer.3} parent=27 // pred_check
        %p208 = pneg %p33
      $region30: #{mf_second_order_dp_scorer.3} parent=27 // pred_check_branch
        %210 = sbr.rel (%p208) target = $region32
      $region31: #{mf_second_order_dp_scorer.3} parent=27 // pred_region
        %p211 = scmp.lt.s32.totalorder %s13, 1
        %s212 = scalar_select %p211, %s13, 1
        %s213 = smul.addr %s212, 8
        %s214 = scalar_lea.vmem %s0, %s213
      $region32: #{mf_second_order_dp_scorer.3} parent=27 // pred_fallthru
        _
    $region28: #{mf_second_order_dp_scorer.3} parent=5 // pred_fallthru
      _
    %p215 = scmp.le.s32.totalorder 1, %s13
    %p216 = scmp.lt.s32.totalorder %s13, 3
    %p217 = pnand %p215, %p216
    %p218 = pneg %p217
    // Predicated region
    $region33: #{mf_second_order_dp_scorer.3} parent=5 // pred_check
      _
    $region34: #{mf_second_order_dp_scorer.3} parent=5 // pred_check_branch
      %220 = sbr.rel (%p217) target = $region36
    $region35: #{mf_second_order_dp_scorer.3} parent=5 // pred_region
      %s221 = ssub.s32 %s13, 1
      %p222 = scmp.lt.s32.totalorder %s18, 1
      %s223 = scalar_select %p222, %s18, 1
      %s224 = smul.addr %s223, 8
      %s225 = scalar_lea.vmem %s0, %s224
      %p226 = pneg %p39
      %p227 = pneg %p36
      %p228 = pneg %p60
      %p229 = pneg %p57
      %p230 = pneg %p81
      %p231 = pneg %p78
      %p232 = pneg %p102
      %p233 = pneg %p99
      %p234 = pneg %p128
      %p235 = pneg %p125
      %p236 = scmp.lt.s32.totalorder %s18, 1
      %s237 = scalar_select %p236, %s18, 1
      %s238 = smul.addr %s237, 2
      %s239 = smul.addr %s238, 4
      %s240 = scalar_lea.vmem %s4, %s239
      %p241 = pneg %p154
      %p242 = pneg %p151
      %p243 = scmp.lt.s32.totalorder %s18, 1
      %s244 = scalar_select %p243, %s18, 1
      %s245 = smul.addr %s244, 2
      %s246 = smul.addr %s245, 4
      %s247 = scalar_lea.vmem %s5, %s246
      %p248 = pneg %p180
      %p249 = pneg %p177
      %p250 = scmp.lt.s32.totalorder %s18, 1
      %s251 = scalar_select %p250, %s18, 1
      %s252 = smul.addr %s251, 8
      %s253 = scalar_lea.vmem %s6, %s252
      %p254 = scmp.lt.s32.totalorder %s18, 1
      %s255 = scalar_select %p254, %s18, 1
      %s256 = smul.addr %s255, 8
      %s257 = scalar_lea.vmem %s0, %s256
      %p258 = scmp.lt.s32.totalorder %s18, 1
      %s259 = scalar_select %p258, %s18, 1
      %s260 = smul.addr %s259, 2
      %s261 = smul.addr %s260, 4
      %s262 = scalar_lea.vmem %s4, %s261
      %p263 = scmp.lt.s32.totalorder %s18, 1
      %s264 = scalar_select %p263, %s18, 1
      %s265 = smul.addr %s264, 2
      %s266 = smul.addr %s265, 4
      %s267 = scalar_lea.vmem %s5, %s266
      %p268 = scmp.lt.s32.totalorder %s18, 1
      %s269 = scalar_select %p268, %s18, 1
      %s270 = smul.addr %s269, 8
      %s271 = scalar_lea.vmem %s6, %s270
      %v273 = vld [vmem:[%s257] sm:$0xff]
      %v274 = vpack.c.bf16 %v273, %v273
      %v275 = vld [vmem:[%s1] sm:$0xff]
      %v276 = vld [vmem:[%s1 + $0x8] sm:$0xff]
      %v277 = vld [vmem:[%s1 + $0x10] sm:$0xff]
      %v278 = vld [vmem:[%s1 + $0x18] sm:$0xff]
      %v279 = vld [vmem:[%s1 + $0x20] sm:$0xff]
      %v280 = vld [vmem:[%s1 + $0x28] sm:$0xff]
      %v281 = vld [vmem:[%s1 + $0x30] sm:$0xf]
      %v282 = vld [vmem:[%s1 + $0x34] sm:$0xff]
      %v283 = vld [vmem:[%s1 + $0x3c] sm:$0xff]
      %v284 = vld [vmem:[%s1 + $0x44] sm:$0xff]
      %v285 = vld [vmem:[%s1 + $0x4c] sm:$0xff]
      %v286 = vld [vmem:[%s1 + $0x54] sm:$0xff]
      %v287 = vld [vmem:[%s1 + $0x5c] sm:$0xff]
      %v288 = vld [vmem:[%s1 + $0x64] sm:$0xf]
      %v289 = vld [vmem:[%s1 + $0x68] sm:$0xff]
      %v290 = vld [vmem:[%s1 + $0x70] sm:$0xff]
      %v291 = vld [vmem:[%s1 + $0x78] sm:$0xff]
      %v292 = vld [vmem:[%s1 + $0x80] sm:$0xff]
      %v293 = vld [vmem:[%s1 + $0x88] sm:$0xff]
      %v294 = vld [vmem:[%s1 + $0x90] sm:$0xff]
      %v295 = vld [vmem:[%s1 + $0x98] sm:$0xf]
      %v296 = vld [vmem:[%s1 + $0x9c] sm:$0xff]
      %v297 = vld [vmem:[%s1 + $0xa4] sm:$0xff]
      %v298 = vld [vmem:[%s1 + $0xac] sm:$0xff]
      %v299 = vld [vmem:[%s1 + $0xb4] sm:$0xff]
      %v300 = vld [vmem:[%s1 + $0xbc] sm:$0xff]
      %v301 = vld [vmem:[%s1 + $0xc4] sm:$0xff]
      %v302 = vld [vmem:[%s1 + $0xcc] sm:$0xf]
      %v303 = vld [vmem:[%s2] sm:$0xff]
      %v304 = vld [vmem:[%s2 + $0x8] sm:$0x1f]
      %v307 = vperm.slane %v303, 0
      %v308 = vperm.slane %v303, 1
      %v309 = vperm.slane %v303, 2
      %v310 = vperm.slane %v303, 3
      %v311 = vperm.slane %v303, 4
      %v312 = vperm.slane %v303, 5
      %v313 = vperm.slane %v303, 6
      %v314 = vperm.slane %v303, 7
      %v315 = vperm.slane %v304, 0
      %v316 = vperm.slane %v304, 1
      %v317 = vperm.slane %v304, 2
      %v318 = vperm.slane %v304, 3
      %v319 = vperm.slane %v304, 4
      %v361 = vunpack.c.l.b16 %v275
      %v362 = vunpack.c.h.b16 %v275
      %v363 = vunpack.c.l.b16 %v276
      %v364 = vunpack.c.h.b16 %v276
      %v365 = vunpack.c.l.b16 %v277
      %v366 = vunpack.c.h.b16 %v277
      %v367 = vunpack.c.l.b16 %v278
      %v368 = vunpack.c.h.b16 %v278
      %v369 = vunpack.c.l.b16 %v279
      %v370 = vunpack.c.h.b16 %v279
      %v371 = vunpack.c.l.b16 %v280
      %v372 = vunpack.c.h.b16 %v280
      %v373 = vunpack.c.l.b16 %v281
      %v374 = vunpack.c.l.b16 %v282
      %v375 = vunpack.c.h.b16 %v282
      %v376 = vunpack.c.l.b16 %v283
      %v377 = vunpack.c.h.b16 %v283
      %v378 = vunpack.c.l.b16 %v284
      %v379 = vunpack.c.h.b16 %v284
      %v380 = vunpack.c.l.b16 %v285
      %v381 = vunpack.c.h.b16 %v285
      %v382 = vunpack.c.l.b16 %v286
      %v383 = vunpack.c.h.b16 %v286
      %v384 = vunpack.c.l.b16 %v287
      %v385 = vunpack.c.h.b16 %v287
      %v386 = vunpack.c.l.b16 %v288
      %v387 = vunpack.c.l.b16 %v289
      %v388 = vunpack.c.h.b16 %v289
      %v389 = vunpack.c.l.b16 %v290
      %v390 = vunpack.c.h.b16 %v290
      %v391 = vunpack.c.l.b16 %v291
      %v392 = vunpack.c.h.b16 %v291
      %v393 = vunpack.c.l.b16 %v292
      %v394 = vunpack.c.h.b16 %v292
      %v395 = vunpack.c.l.b16 %v293
      %v396 = vunpack.c.h.b16 %v293
      %v397 = vunpack.c.l.b16 %v294
      %v398 = vunpack.c.h.b16 %v294
      %v399 = vunpack.c.l.b16 %v295
      %v400 = vunpack.c.l.b16 %v296
      %v401 = vunpack.c.h.b16 %v296
      %v402 = vunpack.c.l.b16 %v297
      %v403 = vunpack.c.h.b16 %v297
      %v404 = vunpack.c.l.b16 %v298
      %v405 = vunpack.c.h.b16 %v298
      %v406 = vunpack.c.l.b16 %v299
      %v407 = vunpack.c.h.b16 %v299
      %v408 = vunpack.c.l.b16 %v300
      %v409 = vunpack.c.h.b16 %v300
      %v410 = vunpack.c.l.b16 %v301
      %v411 = vunpack.c.h.b16 %v301
      %v412 = vunpack.c.l.b16 %v302
      %v413 = vpack.c.b16 %v374, %v361
      %v414 = vpack.c.b16 %v375, %v362
      %v415 = vpack.c.b16 %v376, %v363
      %v416 = vpack.c.b16 %v377, %v364
      %v417 = vpack.c.b16 %v378, %v365
      %v418 = vpack.c.b16 %v379, %v366
      %v419 = vpack.c.b16 %v380, %v367
      %v420 = vpack.c.b16 %v381, %v368
      %v421 = vpack.c.b16 %v382, %v369
      %v422 = vpack.c.b16 %v383, %v370
      %v423 = vpack.c.b16 %v384, %v371
      %v424 = vpack.c.b16 %v385, %v372
      %v425 = vpack.c.b16 %v386, %v373
      %v426 = vpack.c.b16 %v400, %v387
      %v427 = vpack.c.b16 %v401, %v388
      %v428 = vpack.c.b16 %v402, %v389
      %v429 = vpack.c.b16 %v403, %v390
      %v430 = vpack.c.b16 %v404, %v391
      %v431 = vpack.c.b16 %v405, %v392
      %v432 = vpack.c.b16 %v406, %v393
      %v433 = vpack.c.b16 %v407, %v394
      %v434 = vpack.c.b16 %v408, %v395
      %v435 = vpack.c.b16 %v409, %v396
      %v436 = vpack.c.b16 %v410, %v397
      %v437 = vpack.c.b16 %v411, %v398
      %v438 = vpack.c.b16 %v412, %v399
      %vm465 = vcmask 261120
      %v467 = vsel %vm465, %v274, 0
      %469 = vmatpush.bf16.msra.mxu0 0
      %470 = vmatpush.bf16.msra.mxu0 0
      %471 = vmatpush.bf16.msra.mxu0 0
      %472 = vmatpush.bf16.msra.mxu0 0
      %473 = vmatpush.bf16.msra.mxu0 0
      %474 = vmatpush.bf16.msra.mxu0 0
      %475 = vmatpush.bf16.msra.mxu0 %v426
      %476 = vmatpush.bf16.msra.mxu0 %v413
      %477 = vmatmul.bf16.gmra.mxu0 %v467
      %v478 = vpop.f32.mrf.mxu0
      %v479 = vadd.f32 %v307, %v478
      %v480 = vpop.f32.mrf.mxu0
      %481 = vdwg.mxu0
      %482 = vmatpush.bf16.msra.mxu0 0
      %483 = vmatpush.bf16.msra.mxu0 0
      %484 = vmatpush.bf16.msra.mxu0 0
      %485 = vmatpush.bf16.msra.mxu0 0
      %486 = vmatpush.bf16.msra.mxu0 0
      %487 = vmatpush.bf16.msra.mxu0 0
      %488 = vmatpush.bf16.msra.mxu0 %v427
      %489 = vmatpush.bf16.msra.mxu0 %v414
      %490 = vmatmul.bf16.gmra.mxu0 %v467
      %v491 = vpop.f32.mrf.mxu0
      %v492 = vadd.f32 %v308, %v491
      %v493 = vpop.f32.mrf.mxu0
      %494 = vdwg.mxu0
      %495 = vmatpush.bf16.msra.mxu0 0
      %496 = vmatpush.bf16.msra.mxu0 0
      %497 = vmatpush.bf16.msra.mxu0 0
      %498 = vmatpush.bf16.msra.mxu0 0
      %499 = vmatpush.bf16.msra.mxu0 0
      %500 = vmatpush.bf16.msra.mxu0 0
      %501 = vmatpush.bf16.msra.mxu0 %v428
      %502 = vmatpush.bf16.msra.mxu0 %v415
      %503 = vmatmul.bf16.gmra.mxu0 %v467
      %v504 = vpop.f32.mrf.mxu0
      %v505 = vadd.f32 %v309, %v504
      %v506 = vpop.f32.mrf.mxu0
      %507 = vdwg.mxu0
      %508 = vmatpush.bf16.msra.mxu0 0
      %509 = vmatpush.bf16.msra.mxu0 0
      %510 = vmatpush.bf16.msra.mxu0 0
      %511 = vmatpush.bf16.msra.mxu0 0
      %512 = vmatpush.bf16.msra.mxu0 0
      %513 = vmatpush.bf16.msra.mxu0 0
      %514 = vmatpush.bf16.msra.mxu0 %v429
      %515 = vmatpush.bf16.msra.mxu0 %v416
      %516 = vmatmul.bf16.gmra.mxu0 %v467
      %v517 = vpop.f32.mrf.mxu0
      %v518 = vadd.f32 %v310, %v517
      %v519 = vpop.f32.mrf.mxu0
      %520 = vdwg.mxu0
      %521 = vmatpush.bf16.msra.mxu0 0
      %522 = vmatpush.bf16.msra.mxu0 0
      %523 = vmatpush.bf16.msra.mxu0 0
      %524 = vmatpush.bf16.msra.mxu0 0
      %525 = vmatpush.bf16.msra.mxu0 0
      %526 = vmatpush.bf16.msra.mxu0 0
      %527 = vmatpush.bf16.msra.mxu0 %v430
      %528 = vmatpush.bf16.msra.mxu0 %v417
      %529 = vmatmul.bf16.gmra.mxu0 %v467
      %v530 = vpop.f32.mrf.mxu0
      %v531 = vadd.f32 %v311, %v530
      %v532 = vpop.f32.mrf.mxu0
      %533 = vdwg.mxu0
      %534 = vmatpush.bf16.msra.mxu0 0
      %535 = vmatpush.bf16.msra.mxu0 0
      %536 = vmatpush.bf16.msra.mxu0 0
      %537 = vmatpush.bf16.msra.mxu0 0
      %538 = vmatpush.bf16.msra.mxu0 0
      %539 = vmatpush.bf16.msra.mxu0 0
      %540 = vmatpush.bf16.msra.mxu0 %v431
      %541 = vmatpush.bf16.msra.mxu0 %v418
      %542 = vmatmul.bf16.gmra.mxu0 %v467
      %v543 = vpop.f32.mrf.mxu0
      %v544 = vadd.f32 %v312, %v543
      %v545 = vpop.f32.mrf.mxu0
      %546 = vdwg.mxu0
      %547 = vmatpush.bf16.msra.mxu0 0
      %548 = vmatpush.bf16.msra.mxu0 0
      %549 = vmatpush.bf16.msra.mxu0 0
      %550 = vmatpush.bf16.msra.mxu0 0
      %551 = vmatpush.bf16.msra.mxu0 0
      %552 = vmatpush.bf16.msra.mxu0 0
      %553 = vmatpush.bf16.msra.mxu0 %v432
      %554 = vmatpush.bf16.msra.mxu0 %v419
      %555 = vmatmul.bf16.gmra.mxu0 %v467
      %v556 = vpop.f32.mrf.mxu0
      %v557 = vadd.f32 %v313, %v556
      %v558 = vpop.f32.mrf.mxu0
      %559 = vdwg.mxu0
      %560 = vmatpush.bf16.msra.mxu0 0
      %561 = vmatpush.bf16.msra.mxu0 0
      %562 = vmatpush.bf16.msra.mxu0 0
      %563 = vmatpush.bf16.msra.mxu0 0
      %564 = vmatpush.bf16.msra.mxu0 0
      %565 = vmatpush.bf16.msra.mxu0 0
      %566 = vmatpush.bf16.msra.mxu0 %v433
      %567 = vmatpush.bf16.msra.mxu0 %v420
      %568 = vmatmul.bf16.gmra.mxu0 %v467
      %v569 = vpop.f32.mrf.mxu0
      %v570 = vadd.f32 %v314, %v569
      %v571 = vpop.f32.mrf.mxu0
      %572 = vdwg.mxu0
      %573 = vmatpush.bf16.msra.mxu0 0
      %574 = vmatpush.bf16.msra.mxu0 0
      %575 = vmatpush.bf16.msra.mxu0 0
      %576 = vmatpush.bf16.msra.mxu0 0
      %577 = vmatpush.bf16.msra.mxu0 0
      %578 = vmatpush.bf16.msra.mxu0 0
      %579 = vmatpush.bf16.msra.mxu0 %v434
      %580 = vmatpush.bf16.msra.mxu0 %v421
      %581 = vmatmul.bf16.gmra.mxu0 %v467
      %v582 = vpop.f32.mrf.mxu0
      %v583 = vadd.f32 %v315, %v582
      %v584 = vpop.f32.mrf.mxu0
      %585 = vdwg.mxu0
      %586 = vmatpush.bf16.msra.mxu0 0
      %587 = vmatpush.bf16.msra.mxu0 0
      %588 = vmatpush.bf16.msra.mxu0 0
      %589 = vmatpush.bf16.msra.mxu0 0
      %590 = vmatpush.bf16.msra.mxu0 0
      %591 = vmatpush.bf16.msra.mxu0 0
      %592 = vmatpush.bf16.msra.mxu0 %v435
      %593 = vmatpush.bf16.msra.mxu0 %v422
      %594 = vmatmul.bf16.gmra.mxu0 %v467
      %v595 = vpop.f32.mrf.mxu0
      %v596 = vadd.f32 %v316, %v595
      %v597 = vpop.f32.mrf.mxu0
      %598 = vdwg.mxu0
      %599 = vmatpush.bf16.msra.mxu0 0
      %600 = vmatpush.bf16.msra.mxu0 0
      %601 = vmatpush.bf16.msra.mxu0 0
      %602 = vmatpush.bf16.msra.mxu0 0
      %603 = vmatpush.bf16.msra.mxu0 0
      %604 = vmatpush.bf16.msra.mxu0 0
      %605 = vmatpush.bf16.msra.mxu0 %v436
      %606 = vmatpush.bf16.msra.mxu0 %v423
      %607 = vmatmul.bf16.gmra.mxu0 %v467
      %v608 = vpop.f32.mrf.mxu0
      %v609 = vadd.f32 %v317, %v608
      %v610 = vpop.f32.mrf.mxu0
      %611 = vdwg.mxu0
      %612 = vmatpush.bf16.msra.mxu0 0
      %613 = vmatpush.bf16.msra.mxu0 0
      %614 = vmatpush.bf16.msra.mxu0 0
      %615 = vmatpush.bf16.msra.mxu0 0
      %616 = vmatpush.bf16.msra.mxu0 0
      %617 = vmatpush.bf16.msra.mxu0 0
      %618 = vmatpush.bf16.msra.mxu0 %v437
      %619 = vmatpush.bf16.msra.mxu0 %v424
      %620 = vmatmul.bf16.gmra.mxu0 %v467
      %v621 = vpop.f32.mrf.mxu0
      %v622 = vadd.f32 %v318, %v621
      %v623 = vpop.f32.mrf.mxu0
      %624 = vdwg.mxu0
      %625 = vmatpush.bf16.msra.mxu0 0
      %626 = vmatpush.bf16.msra.mxu0 0
      %627 = vmatpush.bf16.msra.mxu0 0
      %628 = vmatpush.bf16.msra.mxu0 0
      %629 = vmatpush.bf16.msra.mxu0 0
      %630 = vmatpush.bf16.msra.mxu0 0
      %631 = vmatpush.bf16.msra.mxu0 %v438
      %632 = vmatpush.bf16.msra.mxu0 %v425
      %633 = vmatmul.bf16.gmra.mxu0 %v467
      %v634 = vpop.f32.mrf.mxu0
      %v635 = vadd.f32 %v319, %v634
      %v636 = vpop.f32.mrf.mxu0
      %637 = vdwg.mxu0
      %vm638 = vcmp.gt.f32.partialorder %v479, 0.0
      %vm639 = vcmp.gt.f32.partialorder %v492, 0.0
      %vm640 = vcmp.gt.f32.partialorder %v505, 0.0
      %vm641 = vcmp.gt.f32.partialorder %v518, 0.0
      %vm642 = vcmp.gt.f32.partialorder %v531, 0.0
      %vm643 = vcmp.gt.f32.partialorder %v544, 0.0
      %vm644 = vcmp.gt.f32.partialorder %v557, 0.0
      %vm645 = vcmp.gt.f32.partialorder %v570, 0.0
      %vm646 = vcmp.gt.f32.partialorder %v583, 0.0
      %vm647 = vcmp.gt.f32.partialorder %v596, 0.0
      %vm648 = vcmp.gt.f32.partialorder %v609, 0.0
      %vm649 = vcmp.gt.f32.partialorder %v622, 0.0
      %vm650 = vcmp.gt.f32.partialorder %v635, 0.0
      %v651 = vmul.f32 %v479, 0.1
      %v652 = vmul.f32 %v492, 0.1
      %v653 = vmul.f32 %v505, 0.1
      %v654 = vmul.f32 %v518, 0.1
      %v655 = vmul.f32 %v531, 0.1
      %v656 = vmul.f32 %v544, 0.1
      %v657 = vmul.f32 %v557, 0.1
      %v658 = vmul.f32 %v570, 0.1
      %v659 = vmul.f32 %v583, 0.1
      %v660 = vmul.f32 %v596, 0.1
      %v661 = vmul.f32 %v609, 0.1
      %v662 = vmul.f32 %v622, 0.1
      %v663 = vmul.f32 %v635, 0.1
      %v664 = vsel %vm638, %v479, %v651
      %v665 = vsel %vm639, %v492, %v652
      %v666 = vsel %vm640, %v505, %v653
      %v667 = vsel %vm641, %v518, %v654
      %v668 = vsel %vm642, %v531, %v655
      %v669 = vsel %vm643, %v544, %v656
      %v670 = vsel %vm644, %v557, %v657
      %v671 = vsel %vm645, %v570, %v658
      %v672 = vsel %vm646, %v583, %v659
      %v673 = vsel %vm647, %v596, %v660
      %v674 = vsel %vm648, %v609, %v661
      %v675 = vsel %vm649, %v622, %v662
      %v676 = vsel %vm650, %v635, %v663
      %v677 = vpack.c.bf16 %v665, %v664
      %678 = vst [vmem:[%s262] sm:$0xff] %v677
      %v679 = vpack.c.bf16 %v667, %v666
      %680 = vst [vmem:[%s267] sm:$0xff] %v679
      %v681 = vpack.c.bf16 %v668, %v668
      %v682 = vld [vmem:[%s3] sm:$0xf]
      %v683 = vld [vmem:[%s3 + $0x4] sm:$0xf]
      %v684 = vld [vmem:[%s3 + $0x8] sm:$0xf]
      %v685 = vld [vmem:[%s3 + $0xc] sm:$0xf]
      %v686 = vld [vmem:[%s3 + $0x10] sm:$0xf]
      %v687 = vld [vmem:[%s3 + $0x14] sm:$0xf]
      %v688 = vld [vmem:[%s3 + $0x18] sm:$0xf]
      %v689 = vld [vmem:[%s3 + $0x1c] sm:$0xf]
      %v690 = vld [vmem:[%s3 + $0x20] sm:$0xf]
      %v691 = vld [vmem:[%s3 + $0x24] sm:$0xf]
      %v692 = vld [vmem:[%s3 + $0x28] sm:$0xf]
      %v693 = vld [vmem:[%s3 + $0x2c] sm:$0xf]
      %v694 = vld [vmem:[%s3 + $0x30] sm:$0xf]
      %v695 = vld [vmem:[%s3 + $0x34] sm:$0xf]
      %v696 = vld [vmem:[%s3 + $0x38] sm:$0xf]
      %v697 = vld [vmem:[%s3 + $0x3c] sm:$0xf]
      %v714 = vunpack.c.l.b16 %v682
      %v715 = vunpack.c.l.b16 %v683
      %v716 = vunpack.c.l.b16 %v684
      %v717 = vunpack.c.l.b16 %v685
      %v718 = vunpack.c.l.b16 %v686
      %v719 = vunpack.c.l.b16 %v687
      %v720 = vunpack.c.l.b16 %v688
      %v721 = vunpack.c.l.b16 %v689
      %v722 = vunpack.c.l.b16 %v690
      %v723 = vunpack.c.l.b16 %v691
      %v724 = vunpack.c.l.b16 %v692
      %v725 = vunpack.c.l.b16 %v693
      %v726 = vunpack.c.l.b16 %v694
      %v727 = vunpack.c.l.b16 %v695
      %v728 = vunpack.c.l.b16 %v696
      %v729 = vunpack.c.l.b16 %v697
      %v730 = vpack.c.b16 %v715, %v714
      %v731 = vpack.c.b16 %v717, %v716
      %v732 = vpack.c.b16 %v719, %v718
      %v733 = vpack.c.b16 %v721, %v720
      %v734 = vpack.c.b16 %v723, %v722
      %v735 = vpack.c.b16 %v725, %v724
      %v736 = vpack.c.b16 %v727, %v726
      %v737 = vpack.c.b16 %v729, %v728
      %746 = vmatpush.bf16.msra.mxu0 %v737
      %747 = vmatpush.bf16.msra.mxu0 %v736
      %748 = vmatpush.bf16.msra.mxu0 %v735
      %749 = vmatpush.bf16.msra.mxu0 %v734
      %750 = vmatpush.bf16.msra.mxu0 %v733
      %751 = vmatpush.bf16.msra.mxu0 %v732
      %752 = vmatpush.bf16.msra.mxu0 %v731
      %753 = vmatpush.bf16.msra.mxu0 %v730
      %754 = vmatmul.bf16.gmra.mxu0 %v681
      %v755 = vpop.f32.mrf.mxu0
      %v756 = vadd.f32 0.0, %v755
      %v757 = vpop.f32.mrf.mxu0
      %758 = vdwg.mxu0
      %v759 = vpack.c.bf16 %v669, %v669
      %s760 = scalar_lea.vmem %s3, 64
      %v761 = vld [vmem:[%s760] sm:$0xf]
      %v762 = vld [vmem:[%s760 + $0x4] sm:$0xf]
      %v763 = vld [vmem:[%s760 + $0x8] sm:$0xf]
      %v764 = vld [vmem:[%s760 + $0xc] sm:$0xf]
      %v765 = vld [vmem:[%s760 + $0x10] sm:$0xf]
      %v766 = vld [vmem:[%s760 + $0x14] sm:$0xf]
      %v767 = vld [vmem:[%s760 + $0x18] sm:$0xf]
      %v768 = vld [vmem:[%s760 + $0x1c] sm:$0xf]
      %v769 = vld [vmem:[%s760 + $0x20] sm:$0xf]
      %v770 = vld [vmem:[%s760 + $0x24] sm:$0xf]
      %v771 = vld [vmem:[%s760 + $0x28] sm:$0xf]
      %v772 = vld [vmem:[%s760 + $0x2c] sm:$0xf]
      %v773 = vld [vmem:[%s760 + $0x30] sm:$0xf]
      %v774 = vld [vmem:[%s760 + $0x34] sm:$0xf]
      %v775 = vld [vmem:[%s760 + $0x38] sm:$0xf]
      %v776 = vld [vmem:[%s760 + $0x3c] sm:$0xf]
      %v793 = vunpack.c.l.b16 %v761
      %v794 = vunpack.c.l.b16 %v762
      %v795 = vunpack.c.l.b16 %v763
      %v796 = vunpack.c.l.b16 %v764
      %v797 = vunpack.c.l.b16 %v765
      %v798 = vunpack.c.l.b16 %v766
      %v799 = vunpack.c.l.b16 %v767
      %v800 = vunpack.c.l.b16 %v768
      %v801 = vunpack.c.l.b16 %v769
      %v802 = vunpack.c.l.b16 %v770
      %v803 = vunpack.c.l.b16 %v771
      %v804 = vunpack.c.l.b16 %v772
      %v805 = vunpack.c.l.b16 %v773
      %v806 = vunpack.c.l.b16 %v774
      %v807 = vunpack.c.l.b16 %v775
      %v808 = vunpack.c.l.b16 %v776
      %v809 = vpack.c.b16 %v794, %v793
      %v810 = vpack.c.b16 %v796, %v795
      %v811 = vpack.c.b16 %v798, %v797
      %v812 = vpack.c.b16 %v800, %v799
      %v813 = vpack.c.b16 %v802, %v801
      %v814 = vpack.c.b16 %v804, %v803
      %v815 = vpack.c.b16 %v806, %v805
      %v816 = vpack.c.b16 %v808, %v807
      %825 = vmatpush.bf16.msra.mxu0 %v816
      %826 = vmatpush.bf16.msra.mxu0 %v815
      %827 = vmatpush.bf16.msra.mxu0 %v814
      %828 = vmatpush.bf16.msra.mxu0 %v813
      %829 = vmatpush.bf16.msra.mxu0 %v812
      %830 = vmatpush.bf16.msra.mxu0 %v811
      %831 = vmatpush.bf16.msra.mxu0 %v810
      %832 = vmatpush.bf16.msra.mxu0 %v809
      %833 = vmatmul.bf16.gmra.mxu0 %v759
      %v834 = vpop.f32.mrf.mxu0
      %v835 = vadd.f32 0.0, %v834
      %v836 = vpop.f32.mrf.mxu0
      %837 = vdwg.mxu0
      %v838 = vpack.c.bf16 %v670, %v670
      %s839 = scalar_lea.vmem %s3, 128
      %v840 = vld [vmem:[%s839] sm:$0xf]
      %v841 = vld [vmem:[%s839 + $0x4] sm:$0xf]
      %v842 = vld [vmem:[%s839 + $0x8] sm:$0xf]
      %v843 = vld [vmem:[%s839 + $0xc] sm:$0xf]
      %v844 = vld [vmem:[%s839 + $0x10] sm:$0xf]
      %v845 = vld [vmem:[%s839 + $0x14] sm:$0xf]
      %v846 = vld [vmem:[%s839 + $0x18] sm:$0xf]
      %v847 = vld [vmem:[%s839 + $0x1c] sm:$0xf]
      %v848 = vld [vmem:[%s839 + $0x20] sm:$0xf]
      %v849 = vld [vmem:[%s839 + $0x24] sm:$0xf]
      %v850 = vld [vmem:[%s839 + $0x28] sm:$0xf]
      %v851 = vld [vmem:[%s839 + $0x2c] sm:$0xf]
      %v852 = vld [vmem:[%s839 + $0x30] sm:$0xf]
      %v853 = vld [vmem:[%s839 + $0x34] sm:$0xf]
      %v854 = vld [vmem:[%s839 + $0x38] sm:$0xf]
      %v855 = vld [vmem:[%s839 + $0x3c] sm:$0xf]
      %v872 = vunpack.c.l.b16 %v840
      %v873 = vunpack.c.l.b16 %v841
      %v874 = vunpack.c.l.b16 %v842
      %v875 = vunpack.c.l.b16 %v843
      %v876 = vunpack.c.l.b16 %v844
      %v877 = vunpack.c.l.b16 %v845
      %v878 = vunpack.c.l.b16 %v846
      %v879 = vunpack.c.l.b16 %v847
      %v880 = vunpack.c.l.b16 %v848
      %v881 = vunpack.c.l.b16 %v849
      %v882 = vunpack.c.l.b16 %v850
      %v883 = vunpack.c.l.b16 %v851
      %v884 = vunpack.c.l.b16 %v852
      %v885 = vunpack.c.l.b16 %v853
      %v886 = vunpack.c.l.b16 %v854
      %v887 = vunpack.c.l.b16 %v855
      %v888 = vpack.c.b16 %v873, %v872
      %v889 = vpack.c.b16 %v875, %v874
      %v890 = vpack.c.b16 %v877, %v876
      %v891 = vpack.c.b16 %v879, %v878
      %v892 = vpack.c.b16 %v881, %v880
      %v893 = vpack.c.b16 %v883, %v882
      %v894 = vpack.c.b16 %v885, %v884
      %v895 = vpack.c.b16 %v887, %v886
      %904 = vmatpush.bf16.msra.mxu0 %v895
      %905 = vmatpush.bf16.msra.mxu0 %v894
      %906 = vmatpush.bf16.msra.mxu0 %v893
      %907 = vmatpush.bf16.msra.mxu0 %v892
      %908 = vmatpush.bf16.msra.mxu0 %v891
      %909 = vmatpush.bf16.msra.mxu0 %v890
      %910 = vmatpush.bf16.msra.mxu0 %v889
      %911 = vmatpush.bf16.msra.mxu0 %v888
      %912 = vmatmul.bf16.gmra.mxu0 %v838
      %v913 = vpop.f32.mrf.mxu0
      %v914 = vadd.f32 0.0, %v913
      %v915 = vpop.f32.mrf.mxu0
      %916 = vdwg.mxu0
      %v917 = vpack.c.bf16 %v671, %v671
      %s918 = scalar_lea.vmem %s3, 192
      %v919 = vld [vmem:[%s918] sm:$0xf]
      %v920 = vld [vmem:[%s918 + $0x4] sm:$0xf]
      %v921 = vld [vmem:[%s918 + $0x8] sm:$0xf]
      %v922 = vld [vmem:[%s918 + $0xc] sm:$0xf]
      %v923 = vld [vmem:[%s918 + $0x10] sm:$0xf]
      %v924 = vld [vmem:[%s918 + $0x14] sm:$0xf]
      %v925 = vld [vmem:[%s918 + $0x18] sm:$0xf]
      %v926 = vld [vmem:[%s918 + $0x1c] sm:$0xf]
      %v927 = vld [vmem:[%s918 + $0x20] sm:$0xf]
      %v928 = vld [vmem:[%s918 + $0x24] sm:$0xf]
      %v929 = vld [vmem:[%s918 + $0x28] sm:$0xf]
      %v930 = vld [vmem:[%s918 + $0x2c] sm:$0xf]
      %v931 = vld [vmem:[%s918 + $0x30] sm:$0xf]
      %v932 = vld [vmem:[%s918 + $0x34] sm:$0xf]
      %v933 = vld [vmem:[%s918 + $0x38] sm:$0xf]
      %v934 = vld [vmem:[%s918 + $0x3c] sm:$0xf]
      %v951 = vunpack.c.l.b16 %v919
      %v952 = vunpack.c.l.b16 %v920
      %v953 = vunpack.c.l.b16 %v921
      %v954 = vunpack.c.l.b16 %v922
      %v955 = vunpack.c.l.b16 %v923
      %v956 = vunpack.c.l.b16 %v924
      %v957 = vunpack.c.l.b16 %v925
      %v958 = vunpack.c.l.b16 %v926
      %v959 = vunpack.c.l.b16 %v927
      %v960 = vunpack.c.l.b16 %v928
      %v961 = vunpack.c.l.b16 %v929
      %v962 = vunpack.c.l.b16 %v930
      %v963 = vunpack.c.l.b16 %v931
      %v964 = vunpack.c.l.b16 %v932
      %v965 = vunpack.c.l.b16 %v933
      %v966 = vunpack.c.l.b16 %v934
      %v967 = vpack.c.b16 %v952, %v951
      %v968 = vpack.c.b16 %v954, %v953
      %v969 = vpack.c.b16 %v956, %v955
      %v970 = vpack.c.b16 %v958, %v957
      %v971 = vpack.c.b16 %v960, %v959
      %v972 = vpack.c.b16 %v962, %v961
      %v973 = vpack.c.b16 %v964, %v963
      %v974 = vpack.c.b16 %v966, %v965
      %983 = vmatpush.bf16.msra.mxu0 %v974
      %984 = vmatpush.bf16.msra.mxu0 %v973
      %985 = vmatpush.bf16.msra.mxu0 %v972
      %986 = vmatpush.bf16.msra.mxu0 %v971
      %987 = vmatpush.bf16.msra.mxu0 %v970
      %988 = vmatpush.bf16.msra.mxu0 %v969
      %989 = vmatpush.bf16.msra.mxu0 %v968
      %990 = vmatpush.bf16.msra.mxu0 %v967
      %991 = vmatmul.bf16.gmra.mxu0 %v917
      %v992 = vpop.f32.mrf.mxu0
      %v993 = vadd.f32 0.0, %v992
      %v994 = vpop.f32.mrf.mxu0
      %995 = vdwg.mxu0
      %v996 = vpack.c.bf16 %v672, %v672
      %s997 = scalar_lea.vmem %s3, 256
      %v998 = vld [vmem:[%s997] sm:$0xf]
      %v999 = vld [vmem:[%s997 + $0x4] sm:$0xf]
      %v1000 = vld [vmem:[%s997 + $0x8] sm:$0xf]
      %v1001 = vld [vmem:[%s997 + $0xc] sm:$0xf]
      %v1002 = vld [vmem:[%s997 + $0x10] sm:$0xf]
      %v1003 = vld [vmem:[%s997 + $0x14] sm:$0xf]
      %v1004 = vld [vmem:[%s997 + $0x18] sm:$0xf]
      %v1005 = vld [vmem:[%s997 + $0x1c] sm:$0xf]
      %v1006 = vld [vmem:[%s997 + $0x20] sm:$0xf]
      %v1007 = vld [vmem:[%s997 + $0x24] sm:$0xf]
      %v1008 = vld [vmem:[%s997 + $0x28] sm:$0xf]
      %v1009 = vld [vmem:[%s997 + $0x2c] sm:$0xf]
      %v1010 = vld [vmem:[%s997 + $0x30] sm:$0xf]
      %v1011 = vld [vmem:[%s997 + $0x34] sm:$0xf]
      %v1012 = vld [vmem:[%s997 + $0x38] sm:$0xf]
      %v1013 = vld [vmem:[%s997 + $0x3c] sm:$0xf]
      %v1030 = vunpack.c.l.b16 %v998
      %v1031 = vunpack.c.l.b16 %v999
      %v1032 = vunpack.c.l.b16 %v1000
      %v1033 = vunpack.c.l.b16 %v1001
      %v1034 = vunpack.c.l.b16 %v1002
      %v1035 = vunpack.c.l.b16 %v1003
      %v1036 = vunpack.c.l.b16 %v1004
      %v1037 = vunpack.c.l.b16 %v1005
      %v1038 = vunpack.c.l.b16 %v1006
      %v1039 = vunpack.c.l.b16 %v1007
      %v1040 = vunpack.c.l.b16 %v1008
      %v1041 = vunpack.c.l.b16 %v1009
      %v1042 = vunpack.c.l.b16 %v1010
      %v1043 = vunpack.c.l.b16 %v1011
      %v1044 = vunpack.c.l.b16 %v1012
      %v1045 = vunpack.c.l.b16 %v1013
      %v1046 = vpack.c.b16 %v1031, %v1030
      %v1047 = vpack.c.b16 %v1033, %v1032
      %v1048 = vpack.c.b16 %v1035, %v1034
      %v1049 = vpack.c.b16 %v1037, %v1036
      %v1050 = vpack.c.b16 %v1039, %v1038
      %v1051 = vpack.c.b16 %v1041, %v1040
      %v1052 = vpack.c.b16 %v1043, %v1042
      %v1053 = vpack.c.b16 %v1045, %v1044
      %1062 = vmatpush.bf16.msra.mxu0 %v1053
      %1063 = vmatpush.bf16.msra.mxu0 %v1052
      %1064 = vmatpush.bf16.msra.mxu0 %v1051
      %1065 = vmatpush.bf16.msra.mxu0 %v1050
      %1066 = vmatpush.bf16.msra.mxu0 %v1049
      %1067 = vmatpush.bf16.msra.mxu0 %v1048
      %1068 = vmatpush.bf16.msra.mxu0 %v1047
      %1069 = vmatpush.bf16.msra.mxu0 %v1046
      %1070 = vmatmul.bf16.gmra.mxu0 %v996
      %v1071 = vpop.f32.mrf.mxu0
      %v1072 = vadd.f32 0.0, %v1071
      %v1073 = vpop.f32.mrf.mxu0
      %1074 = vdwg.mxu0
      %v1075 = vpack.c.bf16 %v673, %v673
      %s1076 = scalar_lea.vmem %s3, 320
      %v1077 = vld [vmem:[%s1076] sm:$0xf]
      %v1078 = vld [vmem:[%s1076 + $0x4] sm:$0xf]
      %v1079 = vld [vmem:[%s1076 + $0x8] sm:$0xf]
      %v1080 = vld [vmem:[%s1076 + $0xc] sm:$0xf]
      %v1081 = vld [vmem:[%s1076 + $0x10] sm:$0xf]
      %v1082 = vld [vmem:[%s1076 + $0x14] sm:$0xf]
      %v1083 = vld [vmem:[%s1076 + $0x18] sm:$0xf]
      %v1084 = vld [vmem:[%s1076 + $0x1c] sm:$0xf]
      %v1085 = vld [vmem:[%s1076 + $0x20] sm:$0xf]
      %v1086 = vld [vmem:[%s1076 + $0x24] sm:$0xf]
      %v1087 = vld [vmem:[%s1076 + $0x28] sm:$0xf]
      %v1088 = vld [vmem:[%s1076 + $0x2c] sm:$0xf]
      %v1089 = vld [vmem:[%s1076 + $0x30] sm:$0xf]
      %v1090 = vld [vmem:[%s1076 + $0x34] sm:$0xf]
      %v1091 = vld [vmem:[%s1076 + $0x38] sm:$0xf]
      %v1092 = vld [vmem:[%s1076 + $0x3c] sm:$0xf]
      %v1109 = vunpack.c.l.b16 %v1077
      %v1110 = vunpack.c.l.b16 %v1078
      %v1111 = vunpack.c.l.b16 %v1079
      %v1112 = vunpack.c.l.b16 %v1080
      %v1113 = vunpack.c.l.b16 %v1081
      %v1114 = vunpack.c.l.b16 %v1082
      %v1115 = vunpack.c.l.b16 %v1083
      %v1116 = vunpack.c.l.b16 %v1084
      %v1117 = vunpack.c.l.b16 %v1085
      %v1118 = vunpack.c.l.b16 %v1086
      %v1119 = vunpack.c.l.b16 %v1087
      %v1120 = vunpack.c.l.b16 %v1088
      %v1121 = vunpack.c.l.b16 %v1089
      %v1122 = vunpack.c.l.b16 %v1090
      %v1123 = vunpack.c.l.b16 %v1091
      %v1124 = vunpack.c.l.b16 %v1092
      %v1125 = vpack.c.b16 %v1110, %v1109
      %v1126 = vpack.c.b16 %v1112, %v1111
      %v1127 = vpack.c.b16 %v1114, %v1113
      %v1128 = vpack.c.b16 %v1116, %v1115
      %v1129 = vpack.c.b16 %v1118, %v1117
      %v1130 = vpack.c.b16 %v1120, %v1119
      %v1131 = vpack.c.b16 %v1122, %v1121
      %v1132 = vpack.c.b16 %v1124, %v1123
      %1141 = vmatpush.bf16.msra.mxu0 %v1132
      %1142 = vmatpush.bf16.msra.mxu0 %v1131
      %1143 = vmatpush.bf16.msra.mxu0 %v1130
      %1144 = vmatpush.bf16.msra.mxu0 %v1129
      %1145 = vmatpush.bf16.msra.mxu0 %v1128
      %1146 = vmatpush.bf16.msra.mxu0 %v1127
      %1147 = vmatpush.bf16.msra.mxu0 %v1126
      %1148 = vmatpush.bf16.msra.mxu0 %v1125
      %1149 = vmatmul.bf16.gmra.mxu0 %v1075
      %v1150 = vpop.f32.mrf.mxu0
      %v1151 = vadd.f32 0.0, %v1150
      %v1152 = vpop.f32.mrf.mxu0
      %1153 = vdwg.mxu0
      %v1154 = vpack.c.bf16 %v674, %v674
      %s1155 = scalar_lea.vmem %s3, 384
      %v1156 = vld [vmem:[%s1155] sm:$0xf]
      %v1157 = vld [vmem:[%s1155 + $0x4] sm:$0xf]
      %v1158 = vld [vmem:[%s1155 + $0x8] sm:$0xf]
      %v1159 = vld [vmem:[%s1155 + $0xc] sm:$0xf]
      %v1160 = vld [vmem:[%s1155 + $0x10] sm:$0xf]
      %v1161 = vld [vmem:[%s1155 + $0x14] sm:$0xf]
      %v1162 = vld [vmem:[%s1155 + $0x18] sm:$0xf]
      %v1163 = vld [vmem:[%s1155 + $0x1c] sm:$0xf]
      %v1164 = vld [vmem:[%s1155 + $0x20] sm:$0xf]
      %v1165 = vld [vmem:[%s1155 + $0x24] sm:$0xf]
      %v1166 = vld [vmem:[%s1155 + $0x28] sm:$0xf]
      %v1167 = vld [vmem:[%s1155 + $0x2c] sm:$0xf]
      %v1168 = vld [vmem:[%s1155 + $0x30] sm:$0xf]
      %v1169 = vld [vmem:[%s1155 + $0x34] sm:$0xf]
      %v1170 = vld [vmem:[%s1155 + $0x38] sm:$0xf]
      %v1171 = vld [vmem:[%s1155 + $0x3c] sm:$0xf]
      %v1188 = vunpack.c.l.b16 %v1156
      %v1189 = vunpack.c.l.b16 %v1157
      %v1190 = vunpack.c.l.b16 %v1158
      %v1191 = vunpack.c.l.b16 %v1159
      %v1192 = vunpack.c.l.b16 %v1160
      %v1193 = vunpack.c.l.b16 %v1161
      %v1194 = vunpack.c.l.b16 %v1162
      %v1195 = vunpack.c.l.b16 %v1163
      %v1196 = vunpack.c.l.b16 %v1164
      %v1197 = vunpack.c.l.b16 %v1165
      %v1198 = vunpack.c.l.b16 %v1166
      %v1199 = vunpack.c.l.b16 %v1167
      %v1200 = vunpack.c.l.b16 %v1168
      %v1201 = vunpack.c.l.b16 %v1169
      %v1202 = vunpack.c.l.b16 %v1170
      %v1203 = vunpack.c.l.b16 %v1171
      %v1204 = vpack.c.b16 %v1189, %v1188
      %v1205 = vpack.c.b16 %v1191, %v1190
      %v1206 = vpack.c.b16 %v1193, %v1192
      %v1207 = vpack.c.b16 %v1195, %v1194
      %v1208 = vpack.c.b16 %v1197, %v1196
      %v1209 = vpack.c.b16 %v1199, %v1198
      %v1210 = vpack.c.b16 %v1201, %v1200
      %v1211 = vpack.c.b16 %v1203, %v1202
      %1220 = vmatpush.bf16.msra.mxu0 %v1211
      %1221 = vmatpush.bf16.msra.mxu0 %v1210
      %1222 = vmatpush.bf16.msra.mxu0 %v1209
      %1223 = vmatpush.bf16.msra.mxu0 %v1208
      %1224 = vmatpush.bf16.msra.mxu0 %v1207
      %1225 = vmatpush.bf16.msra.mxu0 %v1206
      %1226 = vmatpush.bf16.msra.mxu0 %v1205
      %1227 = vmatpush.bf16.msra.mxu0 %v1204
      %1228 = vmatmul.bf16.gmra.mxu0 %v1154
      %v1229 = vpop.f32.mrf.mxu0
      %v1230 = vadd.f32 0.0, %v1229
      %v1231 = vpop.f32.mrf.mxu0
      %1232 = vdwg.mxu0
      %v1233 = vpack.c.bf16 %v675, %v675
      %s1234 = scalar_lea.vmem %s3, 448
      %v1235 = vld [vmem:[%s1234] sm:$0xf]
      %v1236 = vld [vmem:[%s1234 + $0x4] sm:$0xf]
      %v1237 = vld [vmem:[%s1234 + $0x8] sm:$0xf]
      %v1238 = vld [vmem:[%s1234 + $0xc] sm:$0xf]
      %v1239 = vld [vmem:[%s1234 + $0x10] sm:$0xf]
      %v1240 = vld [vmem:[%s1234 + $0x14] sm:$0xf]
      %v1241 = vld [vmem:[%s1234 + $0x18] sm:$0xf]
      %v1242 = vld [vmem:[%s1234 + $0x1c] sm:$0xf]
      %v1243 = vld [vmem:[%s1234 + $0x20] sm:$0xf]
      %v1244 = vld [vmem:[%s1234 + $0x24] sm:$0xf]
      %v1245 = vld [vmem:[%s1234 + $0x28] sm:$0xf]
      %v1246 = vld [vmem:[%s1234 + $0x2c] sm:$0xf]
      %v1247 = vld [vmem:[%s1234 + $0x30] sm:$0xf]
      %v1248 = vld [vmem:[%s1234 + $0x34] sm:$0xf]
      %v1249 = vld [vmem:[%s1234 + $0x38] sm:$0xf]
      %v1250 = vld [vmem:[%s1234 + $0x3c] sm:$0xf]
      %v1267 = vunpack.c.l.b16 %v1235
      %v1268 = vunpack.c.l.b16 %v1236
      %v1269 = vunpack.c.l.b16 %v1237
      %v1270 = vunpack.c.l.b16 %v1238
      %v1271 = vunpack.c.l.b16 %v1239
      %v1272 = vunpack.c.l.b16 %v1240
      %v1273 = vunpack.c.l.b16 %v1241
      %v1274 = vunpack.c.l.b16 %v1242
      %v1275 = vunpack.c.l.b16 %v1243
      %v1276 = vunpack.c.l.b16 %v1244
      %v1277 = vunpack.c.l.b16 %v1245
      %v1278 = vunpack.c.l.b16 %v1246
      %v1279 = vunpack.c.l.b16 %v1247
      %v1280 = vunpack.c.l.b16 %v1248
      %v1281 = vunpack.c.l.b16 %v1249
      %v1282 = vunpack.c.l.b16 %v1250
      %v1283 = vpack.c.b16 %v1268, %v1267
      %v1284 = vpack.c.b16 %v1270, %v1269
      %v1285 = vpack.c.b16 %v1272, %v1271
      %v1286 = vpack.c.b16 %v1274, %v1273
      %v1287 = vpack.c.b16 %v1276, %v1275
      %v1288 = vpack.c.b16 %v1278, %v1277
      %v1289 = vpack.c.b16 %v1280, %v1279
      %v1290 = vpack.c.b16 %v1282, %v1281
      %1299 = vmatpush.bf16.msra.mxu0 %v1290
      %1300 = vmatpush.bf16.msra.mxu0 %v1289
      %1301 = vmatpush.bf16.msra.mxu0 %v1288
      %1302 = vmatpush.bf16.msra.mxu0 %v1287
      %1303 = vmatpush.bf16.msra.mxu0 %v1286
      %1304 = vmatpush.bf16.msra.mxu0 %v1285
      %1305 = vmatpush.bf16.msra.mxu0 %v1284
      %1306 = vmatpush.bf16.msra.mxu0 %v1283
      %1307 = vmatmul.bf16.gmra.mxu0 %v1233
      %v1308 = vpop.f32.mrf.mxu0
      %v1309 = vadd.f32 0.0, %v1308
      %v1310 = vpop.f32.mrf.mxu0
      %1311 = vdwg.mxu0
      %v1312 = vpack.c.bf16 %v676, %v676
      %s1313 = scalar_lea.vmem %s3, 512
      %v1314 = vld [vmem:[%s1313] sm:$0xf]
      %v1315 = vld [vmem:[%s1313 + $0x4] sm:$0xf]
      %v1316 = vld [vmem:[%s1313 + $0x8] sm:$0xf]
      %v1317 = vld [vmem:[%s1313 + $0xc] sm:$0xf]
      %v1318 = vld [vmem:[%s1313 + $0x10] sm:$0xf]
      %v1319 = vld [vmem:[%s1313 + $0x14] sm:$0xf]
      %v1320 = vld [vmem:[%s1313 + $0x18] sm:$0xf]
      %v1321 = vld [vmem:[%s1313 + $0x1c] sm:$0xf]
      %v1322 = vld [vmem:[%s1313 + $0x20] sm:$0xf]
      %v1323 = vld [vmem:[%s1313 + $0x24] sm:$0xf]
      %v1324 = vld [vmem:[%s1313 + $0x28] sm:$0xf]
      %v1325 = vld [vmem:[%s1313 + $0x2c] sm:$0xf]
      %v1326 = vld [vmem:[%s1313 + $0x30] sm:$0xf]
      %v1327 = vld [vmem:[%s1313 + $0x34] sm:$0xf]
      %v1328 = vld [vmem:[%s1313 + $0x38] sm:$0xf]
      %v1329 = vld [vmem:[%s1313 + $0x3c] sm:$0xf]
      %v1346 = vunpack.c.l.b16 %v1314
      %v1347 = vunpack.c.l.b16 %v1315
      %v1348 = vunpack.c.l.b16 %v1316
      %v1349 = vunpack.c.l.b16 %v1317
      %v1350 = vunpack.c.l.b16 %v1318
      %v1351 = vunpack.c.l.b16 %v1319
      %v1352 = vunpack.c.l.b16 %v1320
      %v1353 = vunpack.c.l.b16 %v1321
      %v1354 = vunpack.c.l.b16 %v1322
      %v1355 = vunpack.c.l.b16 %v1323
      %v1356 = vunpack.c.l.b16 %v1324
      %v1357 = vunpack.c.l.b16 %v1325
      %v1358 = vunpack.c.l.b16 %v1326
      %v1359 = vunpack.c.l.b16 %v1327
      %v1360 = vunpack.c.l.b16 %v1328
      %v1361 = vunpack.c.l.b16 %v1329
      %v1362 = vpack.c.b16 %v1347, %v1346
      %v1363 = vpack.c.b16 %v1349, %v1348
      %v1364 = vpack.c.b16 %v1351, %v1350
      %v1365 = vpack.c.b16 %v1353, %v1352
      %v1366 = vpack.c.b16 %v1355, %v1354
      %v1367 = vpack.c.b16 %v1357, %v1356
      %v1368 = vpack.c.b16 %v1359, %v1358
      %v1369 = vpack.c.b16 %v1361, %v1360
      %1378 = vmatpush.bf16.msra.mxu0 %v1369
      %1379 = vmatpush.bf16.msra.mxu0 %v1368
      %1380 = vmatpush.bf16.msra.mxu0 %v1367
      %1381 = vmatpush.bf16.msra.mxu0 %v1366
      %1382 = vmatpush.bf16.msra.mxu0 %v1365
      %1383 = vmatpush.bf16.msra.mxu0 %v1364
      %1384 = vmatpush.bf16.msra.mxu0 %v1363
      %1385 = vmatpush.bf16.msra.mxu0 %v1362
      %1386 = vmatmul.bf16.gmra.mxu0 %v1312
      %v1387 = vpop.f32.mrf.mxu0
      %v1388 = vadd.f32 0.0, %v1387
      %v1389 = vpop.f32.mrf.mxu0
      %1390 = vdwg.mxu0
      %1392 = vrot.lane.b32.xlu0 %v835, 8
      %v1393 = vpop.permute.xlu0 %1392
      %1396 = vrot.lane.b32.xlu0 %v914, 16
      %v1397 = vpop.permute.xlu0 %1396
      %1400 = vrot.lane.b32.xlu0 %v993, 24
      %v1401 = vpop.permute.xlu0 %1400
      %1404 = vrot.lane.b32.xlu0 %v1072, 32
      %v1405 = vpop.permute.xlu0 %1404
      %1408 = vrot.lane.b32.xlu0 %v1151, 40
      %v1409 = vpop.permute.xlu0 %1408
      %1412 = vrot.lane.b32.xlu0 %v1230, 48
      %v1413 = vpop.permute.xlu0 %1412
      %1416 = vrot.lane.b32.xlu0 %v1309, 56
      %v1417 = vpop.permute.xlu0 %1416
      %1420 = vrot.lane.b32.xlu0 %v1388, 64
      %v1421 = vpop.permute.xlu0 %1420
      %vm1423 = vcmask 64512
      %v1424 = vsel %vm1423, %v756, %v1393
      %vm1425 = vcmask 130048
      %v1426 = vsel %vm1425, %v1424, %v1397
      %vm1427 = vcmask 195584
      %v1428 = vsel %vm1427, %v1426, %v1401
      %v1429 = vsel %vm465, %v1428, %v1405
      %vm1430 = vcmask 326656
      %v1431 = vsel %vm1430, %v1429, %v1409
      %vm1432 = vcmask 392192
      %v1433 = vsel %vm1432, %v1431, %v1413
      %vm1434 = vcmask 457728
      %v1435 = vsel %vm1434, %v1433, %v1417
      %vm1436 = vcmask 523264
      %v1437 = vsel %vm1436, %v1435, %v1421
      %v1438 = vmul.f32 %v1437, 0.561231
      %vm1439 = vcmask 588800
      %1440 = vst.msk [vmem:[%s271] sm:$0xff] %vm1439, %v1438
      %p1441 = scmp.lt.s32.totalorder %s18, 1
      %s1442 = scalar_select %p1441, %s18, 1
      %s1443 = smul.addr %s1442, 2
      %s1444 = smul.addr %s1443, 4
      %s1445 = scalar_lea.vmem %s4, %s1444
      %p1446 = scmp.lt.s32.totalorder %s18, 1
      %s1447 = scalar_select %p1446, %s18, 1
      %s1448 = smul.addr %s1447, 2
      %s1449 = smul.addr %s1448, 4
      %s1450 = scalar_lea.vmem %s5, %s1449
      %p1451 = scmp.lt.s32.totalorder %s18, 1
      %s1452 = scalar_select %p1451, %s18, 1
      %s1453 = smul.addr %s1452, 8
      %s1454 = scalar_lea.vmem %s6, %s1453
      // Predicated region
      $region37: #{mf_second_order_dp_scorer.3} parent=35 // pred_check
        %p1455 = pneg %p125
      $region38: #{mf_second_order_dp_scorer.3} parent=35 // pred_check_branch
        %1457 = sbr.rel (%p1455) target = $region40
      $region39: #{mf_second_order_dp_scorer.3} parent=35 // pred_region
        _
      $region40: #{mf_second_order_dp_scorer.3} parent=35 // pred_fallthru
        _
      // Predicated region
      $region41: #{mf_second_order_dp_scorer.3} parent=35 // pred_check
        %p1458 = pneg %p151
      $region42: #{mf_second_order_dp_scorer.3} parent=35 // pred_check_branch
        %1460 = sbr.rel (%p1458) target = $region44
      $region43: #{mf_second_order_dp_scorer.3} parent=35 // pred_region
        _
      $region44: #{mf_second_order_dp_scorer.3} parent=35 // pred_fallthru
        _
      // Predicated region
      $region45: #{mf_second_order_dp_scorer.3} parent=35 // pred_check
        %p1461 = pneg %p177
      $region46: #{mf_second_order_dp_scorer.3} parent=35 // pred_check_branch
        %1463 = sbr.rel (%p1461) target = $region48
      $region47: #{mf_second_order_dp_scorer.3} parent=35 // pred_region
        _
      $region48: #{mf_second_order_dp_scorer.3} parent=35 // pred_fallthru
        _
    $region36: #{mf_second_order_dp_scorer.3} parent=5 // pred_fallthru
      _
    %p1464 = scmp.le.s32.totalorder 2, %s13
    // Predicated region
    $region49: #{mf_second_order_dp_scorer.3} parent=5 // pred_check
      %p1465 = pneg %p1464
    $region50: #{mf_second_order_dp_scorer.3} parent=5 // pred_check_branch
      %1467 = sbr.rel (%p1465) target = $region52
    $region51: #{mf_second_order_dp_scorer.3} parent=5 // pred_region
      %s1468 = ssub.s32 %s13, 2
      // Predicated region
      $region53: #{mf_second_order_dp_scorer.3} parent=51 // pred_check
        %p1469 = pneg %p131
      $region54: #{mf_second_order_dp_scorer.3} parent=51 // pred_check_branch
        %1471 = sbr.rel (%p1469) target = $region56
      $region55: #{mf_second_order_dp_scorer.3} parent=51 // pred_region
        %p1472 = scmp.lt.s32.totalorder %s19, 1
        %s1473 = scalar_select %p1472, %s19, 1
        %s1474 = smul.addr %s1473, 2
        %s1475 = smul.addr %s1474, 4
        %s1476 = scalar_lea.vmem %s4, %s1475
      $region56: #{mf_second_order_dp_scorer.3} parent=51 // pred_fallthru
        _
      // Predicated region
      $region57: #{mf_second_order_dp_scorer.3} parent=51 // pred_check
        %p1477 = pneg %p157
      $region58: #{mf_second_order_dp_scorer.3} parent=51 // pred_check_branch
        %1479 = sbr.rel (%p1477) target = $region60
      $region59: #{mf_second_order_dp_scorer.3} parent=51 // pred_region
        %p1480 = scmp.lt.s32.totalorder %s19, 1
        %s1481 = scalar_select %p1480, %s19, 1
        %s1482 = smul.addr %s1481, 2
        %s1483 = smul.addr %s1482, 4
        %s1484 = scalar_lea.vmem %s5, %s1483
      $region60: #{mf_second_order_dp_scorer.3} parent=51 // pred_fallthru
        _
      // Predicated region
      $region61: #{mf_second_order_dp_scorer.3} parent=51 // pred_check
        %p1485 = pneg %p183
      $region62: #{mf_second_order_dp_scorer.3} parent=51 // pred_check_branch
        %1487 = sbr.rel (%p1485) target = $region64
      $region63: #{mf_second_order_dp_scorer.3} parent=51 // pred_region
        %p1488 = scmp.lt.s32.totalorder %s19, 1
        %s1489 = scalar_select %p1488, %s19, 1
        %s1490 = smul.addr %s1489, 8
        %s1491 = scalar_lea.vmem %s6, %s1490
      $region64: #{mf_second_order_dp_scorer.3} parent=51 // pred_fallthru
        _
    $region52: #{mf_second_order_dp_scorer.3} parent=5 // pred_fallthru
      _
  $region6: #{mf_second_order_dp_scorer.3} parent=0 // loop_footer
    %s17 = sadd.s32 1, %s13
  $region7: #{mf_second_order_dp_scorer.3} parent=0 // loop_footer_branch
    %12 = sbr.rel target = $region3
  $region8: #{mf_second_order_dp_scorer.3} parent=0 // loop_exit
    _

// kernel: custom-call.1
$region0: #{custom-call.1}
  %s0 = inlined_call_operand.vmem [shape: f32[1664], index: 0, kind: output, shape index: {}]

// kernel: mf_second_order_dp_scorer.5
$region0: #{mf_second_order_dp_scorer.5}
  #allocation0 [shape = 'u32[]', space=smem, size = 0x4, offset = 0x4, fixed_abs, tag = 'smem constant byte address 0x4 - core index']
  #allocation1 [shape = 'u32[72,128]{1,0:T(1,128)}', space=vmem, size = 0x9000, scoped, tag = 'internal scratch']
  %s0 = inlined_call_operand.vmem [shape: bf16[2,8,256], index: 0, kind: input, shape index: {}]
  %s1 = inlined_call_operand.vmem [shape: bf16[1,128,128], index: 1, kind: input, shape index: {}]
  %s2 = inlined_call_operand.hbm [shape: f32[2,1,8,8], index: 2, kind: output, shape index: {}]
  %s3 = sld [smem:[#allocation0]]
  $region41: #{mf_second_order_dp_scorer.5} parent=0
    _
  %s5 = ssub.s32 1, %s3
  %s6 = scalar_select 0, %s5, %s3
  $region1: #{mf_second_order_dp_scorer.5} parent=0
    #allocation2 [shape = 'u8[8192]{0}', space=vmem, size = 0x2000, scoped, tag = 'output window, operand 0']
    #allocation3 [shape = 's32[2]{0}', space=sflag, size = 0x8, scoped, tag = 'scoped memory for mf_second_order_dp_scorer.5']
    %7 = vsyncpa [#allocation3], 0
    %s8 = scalar_lea.sflag [#allocation3], 1
    %9 = vsyncpa %s8, 0
    loop: start=0, step=1, limit=4
    $region2: #{mf_second_order_dp_scorer.5} parent=1 // loop_pre_header
      _
    $region3: #{mf_second_order_dp_scorer.5} parent=1 // loop_header
      %s11 = sphi 0, %s15
      %p12 = scmp.ge.s32.totalorder %s11, 4
      %s18 = sphi 0, %s30
      %s19 = sphi 0, %s26
      %s20 = sphi 0, %s18
      %s21 = sphi 0, %s19
      %s22 = sphi 0, %s20
      %s23 = sphi 0, %s21
      %s33 = sphi 0, %s35
      %s36 = sphi 0, %s33
      %s37 = sphi 0, %s36
      %s53 = sphi 0, %s37
      %s59 = sphi 0, %s61
      %s62 = sphi 0, %s59
      %s63 = sphi 0, %s62
      %s79 = sphi 0, %s63
      %s87 = sphi 0, %s89
      %s90 = sphi 0, %s87
      %s91 = sphi 0, %s90
      %s107 = sphi 0, %s91
    $region4: #{mf_second_order_dp_scorer.5} parent=1 // loop_header_branch
      %14 = sbr.rel (%p12) target = $region8
    $region5: #{mf_second_order_dp_scorer.5} parent=1 // loop_body
      %s16 = ssub.s32 %s11, 1
      %s17 = ssub.s32 %s11, 2
      %s24 = sadd.s32 1, %s19
      %p25 = scmp.ge.s32.totalorder %s24, 1
      %s26 = scalar_select %p25, 0, %s24
      %s27 = sadd.s32 1, %s18
      %s28 = scalar_select %p25, %s27, %s18
      %p29 = scmp.ge.s32.totalorder %s28, 2
      %s30 = scalar_select %p29, 0, %s28
      %s31 = ssub.s32 %s18, %s30
      %p32 = scmp.eq.s32.totalorder %s31, 0
      %s34 = sadd.s32 %s33, 1
      %s35 = scalar_select %p32, %s33, %s34
      %p38 = pneg %p32
      %p39 = scmp.eq.s32.totalorder %s11, 1
      %p40 = por %p38, %p39
      %p41 = scmp.ne.s32.totalorder %s33, %s36
      %p42 = scmp.eq.s32.totalorder %s11, 0
      %p43 = por %p41, %p42
      %p44 = scmp.ne.s32.totalorder %s33, %s36
      %p45 = scmp.eq.s32.totalorder %s16, 1
      %p46 = por %p44, %p45
      %p47 = scmp.ne.s32.totalorder %s36, %s37
      %p48 = scmp.eq.s32.totalorder %s16, 0
      %p49 = por %p47, %p48
      %p50 = scmp.ne.s32.totalorder %s36, %s37
      %p51 = scmp.eq.s32.totalorder %s17, 1
      %p52 = por %p50, %p51
      %p54 = scmp.ne.s32.totalorder %s37, %s53
      %p55 = scmp.eq.s32.totalorder %s17, 0
      %p56 = por %p54, %p55
      %s57 = ssub.s32 %s19, %s26
      %p58 = scmp.eq.s32.totalorder %s57, 0
      %s60 = sadd.s32 %s59, 1
      %s61 = scalar_select %p58, %s59, %s60
      %p64 = pneg %p58
      %p65 = scmp.eq.s32.totalorder %s11, 1
      %p66 = por %p64, %p65
      %p67 = scmp.ne.s32.totalorder %s59, %s62
      %p68 = scmp.eq.s32.totalorder %s11, 0
      %p69 = por %p67, %p68
      %p70 = scmp.ne.s32.totalorder %s59, %s62
      %p71 = scmp.eq.s32.totalorder %s16, 1
      %p72 = por %p70, %p71
      %p73 = scmp.ne.s32.totalorder %s62, %s63
      %p74 = scmp.eq.s32.totalorder %s16, 0
      %p75 = por %p73, %p74
      %p76 = scmp.ne.s32.totalorder %s62, %s63
      %p77 = scmp.eq.s32.totalorder %s17, 1
      %p78 = por %p76, %p77
      %p80 = scmp.ne.s32.totalorder %s63, %s79
      %p81 = scmp.eq.s32.totalorder %s17, 0
      %p82 = por %p80, %p81
      %s83 = ssub.s32 %s18, %s30
      %s84 = ssub.s32 %s19, %s26
      %s85 = sor.u32 %s83, %s84
      %p86 = scmp.eq.s32.totalorder %s85, 0
      %s88 = sadd.s32 %s87, 1
      %s89 = scalar_select %p86, %s87, %s88
      %p92 = pneg %p86
      %p93 = scmp.eq.s32.totalorder %s11, 1
      %p94 = por %p92, %p93
      %p95 = scmp.ne.s32.totalorder %s87, %s90
      %p96 = scmp.eq.s32.totalorder %s11, 0
      %p97 = por %p95, %p96
      %p98 = scmp.ne.s32.totalorder %s87, %s90
      %p99 = scmp.eq.s32.totalorder %s16, 1
      %p100 = por %p98, %p99
      %p101 = scmp.ne.s32.totalorder %s90, %s91
      %p102 = scmp.eq.s32.totalorder %s16, 0
      %p103 = por %p101, %p102
      %p104 = scmp.ne.s32.totalorder %s90, %s91
      %p105 = scmp.eq.s32.totalorder %s17, 1
      %p106 = por %p104, %p105
      %p108 = scmp.ne.s32.totalorder %s91, %s107
      %p109 = scmp.eq.s32.totalorder %s17, 0
      %p110 = por %p108, %p109
      %p111 = scmp.le.s32.totalorder 1, %s11
      %p112 = scmp.lt.s32.totalorder %s11, 3
      %p113 = pnand %p111, %p112
      %p114 = pneg %p113
      // Predicated region
      $region9: #{mf_second_order_dp_scorer.5} parent=5 // pred_check
        _
      $region10: #{mf_second_order_dp_scorer.5} parent=5 // pred_check_branch
        %116 = sbr.rel (%p113) target = $region12
      $region11: #{mf_second_order_dp_scorer.5} parent=5 // pred_region
        %s117 = ssub.s32 %s11, 1
        // Predicated region
        $region13: #{mf_second_order_dp_scorer.5} parent=11 // pred_check
          %p118 = pneg %p75
        $region14: #{mf_second_order_dp_scorer.5} parent=11 // pred_check_branch
          %120 = sbr.rel (%p118) target = $region16
        $region15: #{mf_second_order_dp_scorer.5} parent=11 // pred_region
          %p121 = scmp.lt.s32.totalorder %s21, 0
          %s122 = scalar_select %p121, %s21, 0
          %s123 = smul.addr %s122, 16
          %s124 = smul.addr %s123, 4
          %s125 = scalar_lea.vmem %s1, %s124
        $region16: #{mf_second_order_dp_scorer.5} parent=11 // pred_fallthru
          _
      $region12: #{mf_second_order_dp_scorer.5} parent=5 // pred_fallthru
        _
      %p126 = scmp.lt.s32.totalorder %s11, 2
      // Predicated region
      $region17: #{mf_second_order_dp_scorer.5} parent=5 // pred_check
        %p127 = pneg %p126
      $region18: #{mf_second_order_dp_scorer.5} parent=5 // pred_check_branch
        %129 = sbr.rel (%p127) target = $region20
      $region19: #{mf_second_order_dp_scorer.5} parent=5 // pred_region
        // Predicated region
        $region21: #{mf_second_order_dp_scorer.5} parent=19 // pred_check
          %p130 = pneg %p43
        $region22: #{mf_second_order_dp_scorer.5} parent=19 // pred_check_branch
          %132 = sbr.rel (%p130) target = $region24
        $region23: #{mf_second_order_dp_scorer.5} parent=19 // pred_region
          %p133 = scmp.lt.s32.totalorder %s18, 1
          %s134 = scalar_select %p133, %s18, 1
          %s135 = smul.addr %s134, 2
          %s136 = smul.addr %s135, 4
          %s137 = scalar_lea.vmem %s0, %s136
        $region24: #{mf_second_order_dp_scorer.5} parent=19 // pred_fallthru
          _
      $region20: #{mf_second_order_dp_scorer.5} parent=5 // pred_fallthru
        _
      %p138 = scmp.le.s32.totalorder 1, %s11
      %p139 = scmp.lt.s32.totalorder %s11, 3
      %p140 = pnand %p138, %p139
      %p141 = pneg %p140
      // Predicated region
      $region25: #{mf_second_order_dp_scorer.5} parent=5 // pred_check
        _
      $region26: #{mf_second_order_dp_scorer.5} parent=5 // pred_check_branch
        %143 = sbr.rel (%p140) target = $region28
      $region27: #{mf_second_order_dp_scorer.5} parent=5 // pred_region
        %s144 = ssub.s32 %s11, 1
        %p145 = scmp.lt.s32.totalorder %s20, 1
        %s146 = scalar_select %p145, %s20, 1
        %s147 = smul.addr %s146, 2
        %s148 = smul.addr %s147, 4
        %s149 = scalar_lea.vmem %s0, %s148
        %p150 = pneg %p49
        %p151 = pneg %p46
        %p152 = scmp.lt.s32.totalorder %s21, 0
        %s153 = scalar_select %p152, %s21, 0
        %s154 = smul.addr %s153, 16
        %s155 = smul.addr %s154, 4
        %s156 = scalar_lea.vmem %s1, %s155
        %p157 = pneg %p75
        %p158 = pneg %p72
        %p159 = pneg %p103
        %p160 = pneg %p100
        %s161 = sand.u32 %s90, 1
        %s162 = scalar_lea.sflag [#allocation3], %s161
        %s163 = sand.u32 %s90, 1
        %s164 = smul.addr %s163, 8
        %s165 = scalar_lea.vmem [#allocation2], %s164
        %p166 = scmp.lt.s32.totalorder %s20, 1
        %s167 = scalar_select %p166, %s20, 1
        %s168 = smul.addr %s167, 2
        %s169 = smul.addr %s168, 4
        %s170 = scalar_lea.vmem %s0, %s169
        %p171 = scmp.lt.s32.totalorder %s21, 0
        %s172 = scalar_select %p171, %s21, 0
        %s173 = smul.addr %s172, 16
        %s174 = smul.addr %s173, 4
        %s175 = scalar_lea.vmem %s1, %s174
        %v177 = vld [vmem:[%s170] sm:$0xff]
        %v178 = vld [vmem:[%s175] sm:$0xf]
        %v179 = vld [vmem:[%s175 + $0x4] sm:$0xf]
        %v180 = vld [vmem:[%s175 + $0x8] sm:$0xf]
        %v181 = vld [vmem:[%s175 + $0xc] sm:$0xf]
        %v182 = vld [vmem:[%s175 + $0x10] sm:$0xf]
        %v183 = vld [vmem:[%s175 + $0x14] sm:$0xf]
        %v184 = vld [vmem:[%s175 + $0x18] sm:$0xf]
        %v185 = vld [vmem:[%s175 + $0x1c] sm:$0xf]
        %v186 = vld [vmem:[%s175 + $0x20] sm:$0xf]
        %v187 = vld [vmem:[%s175 + $0x24] sm:$0xf]
        %v188 = vld [vmem:[%s175 + $0x28] sm:$0xf]
        %v189 = vld [vmem:[%s175 + $0x2c] sm:$0xf]
        %v190 = vld [vmem:[%s175 + $0x30] sm:$0xf]
        %v191 = vld [vmem:[%s175 + $0x34] sm:$0xf]
        %v192 = vld [vmem:[%s175 + $0x38] sm:$0xf]
        %v193 = vld [vmem:[%s175 + $0x3c] sm:$0xf]
        %v210 = vunpack.c.l.b16 %v178
        %v211 = vunpack.c.l.b16 %v179
        %v212 = vunpack.c.l.b16 %v180
        %v213 = vunpack.c.l.b16 %v181
        %v214 = vunpack.c.l.b16 %v182
        %v215 = vunpack.c.l.b16 %v183
        %v216 = vunpack.c.l.b16 %v184
        %v217 = vunpack.c.l.b16 %v185
        %v218 = vunpack.c.l.b16 %v186
        %v219 = vunpack.c.l.b16 %v187
        %v220 = vunpack.c.l.b16 %v188
        %v221 = vunpack.c.l.b16 %v189
        %v222 = vunpack.c.l.b16 %v190
        %v223 = vunpack.c.l.b16 %v191
        %v224 = vunpack.c.l.b16 %v192
        %v225 = vunpack.c.l.b16 %v193
        %v226 = vpack.c.b16 %v211, %v210
        %v227 = vpack.c.b16 %v213, %v212
        %v228 = vpack.c.b16 %v215, %v214
        %v229 = vpack.c.b16 %v217, %v216
        %v230 = vpack.c.b16 %v219, %v218
        %v231 = vpack.c.b16 %v221, %v220
        %v232 = vpack.c.b16 %v223, %v222
        %v233 = vpack.c.b16 %v225, %v224
        %242 = vmatpush.bf16.msra.mxu0 %v233
        %243 = vmatpush.bf16.msra.mxu0 %v232
        %244 = vmatpush.bf16.msra.mxu0 %v231
        %245 = vmatpush.bf16.msra.mxu0 %v230
        %246 = vmatpush.bf16.msra.mxu0 %v229
        %247 = vmatpush.bf16.msra.mxu0 %v228
        %248 = vmatpush.bf16.msra.mxu0 %v227
        %249 = vmatpush.bf16.msra.mxu0 %v226
        %250 = vmatmul.bf16.gmra.mxu0 %v177
        %v251 = vpop.f32.mrf.mxu0
        %v252 = vadd.f32 0.0, %v251
        %v253 = vpop.f32.mrf.mxu0
        %254 = vdwg.mxu0
        %v255 = vpack.c.bf16 %v252, %v252
        %v257 = vunpack.c.h.b16 %v177
        %v258 = vpack.c.b16 %v257, %v257
        %260 = vmatpush.bf16.xpose.msra.mxu0 0
        %261 = vmatpush.bf16.xpose.msra.mxu0 0
        %262 = vmatpush.bf16.xpose.msra.mxu0 0
        %263 = vmatpush.bf16.xpose.msra.mxu0 0
        %264 = vmatpush.bf16.xpose.msra.mxu0 0
        %265 = vmatpush.bf16.xpose.msra.mxu0 0
        %266 = vmatpush.bf16.xpose.msra.mxu0 0
        %267 = vmatpush.bf16.xpose.msra.mxu0 %v258
        %268 = vmatmul.bf16.gmra.mxu0 %v255
        %v269 = vpop.f32.mrf.mxu0
        %v270 = vadd.f32 0.0, %v269
        %v271 = vpop.f32.mrf.mxu0
        %272 = vdwg.mxu0
        %v273 = vmul.f32 %v270, 0.17677669
        %vm274 = vcmask 64512
        %275 = vst.msk [vmem:[%s165] sm:$0xff] %vm274, %v273
        %s276 = sand.u32 %s90, 1
        %s277 = scalar_lea.sflag [#allocation3], %s276
        %s278 = sand.u32 %s90, 1
        %s279 = smul.addr %s278, 8
        %s280 = scalar_lea.vmem [#allocation2], %s279
        // Predicated region
        $region29: #{mf_second_order_dp_scorer.5} parent=27 // pred_check
          %p281 = pneg %p100
        $region30: #{mf_second_order_dp_scorer.5} parent=27 // pred_check_branch
          %283 = sbr.rel (%p281) target = $region32
        $region31: #{mf_second_order_dp_scorer.5} parent=27 // pred_region
          %285 = vsyncadd %s277, 0
          %s286 = sadd.s32 %s21, %s20
          %s287 = smul.addr %s286, 8
          %s288 = scalar_lea.hbm %s2, %s287
          %s290 = sshll.u32 %s280, 4
          %s291 = int_to_ptr.vmem [resolvable:$true] %s290
          %s292 = sshll.u32 %s288, 4
          %s293 = int_to_ptr.hbm [resolvable:$true] %s292
          %295 = dma.vmem_to_hbm [thread:$0]  %s291, 128, %s293, %s277
        $region32: #{mf_second_order_dp_scorer.5} parent=27 // pred_fallthru
          _
      $region28: #{mf_second_order_dp_scorer.5} parent=5 // pred_fallthru
        _
      %p296 = scmp.le.s32.totalorder 2, %s11
      // Predicated region
      $region33: #{mf_second_order_dp_scorer.5} parent=5 // pred_check
        %p297 = pneg %p296
      $region34: #{mf_second_order_dp_scorer.5} parent=5 // pred_check_branch
        %299 = sbr.rel (%p297) target = $region36
      $region35: #{mf_second_order_dp_scorer.5} parent=5 // pred_region
        %s300 = ssub.s32 %s11, 2
        // Predicated region
        $region37: #{mf_second_order_dp_scorer.5} parent=35 // pred_check
          %p301 = pneg %p106
        $region38: #{mf_second_order_dp_scorer.5} parent=35 // pred_check_branch
          %303 = sbr.rel (%p301) target = $region40
        $region39: #{mf_second_order_dp_scorer.5} parent=35 // pred_region
          %s304 = sand.u32 %s91, 1
          %s305 = scalar_lea.sflag [#allocation3], %s304
          %s306 = sand.u32 %s91, 1
          %s307 = smul.addr %s306, 8
          %s308 = scalar_lea.vmem [#allocation2], %s307
          %310 = dma.done %s305, 128
        $region40: #{mf_second_order_dp_scorer.5} parent=35 // pred_fallthru
          _
      $region36: #{mf_second_order_dp_scorer.5} parent=5 // pred_fallthru
        _
    $region6: #{mf_second_order_dp_scorer.5} parent=1 // loop_footer
      %s15 = sadd.s32 1, %s11
    $region7: #{mf_second_order_dp_scorer.5} parent=1 // loop_footer_branch
      %10 = sbr.rel target = $region3
    $region8: #{mf_second_order_dp_scorer.5} parent=1 // loop_exit
      _
    %311 = vsyncpa [#allocation3], 1
    %s312 = scalar_lea.sflag [#allocation3], 1
    %313 = vsyncpa %s312, 1

// kernel: mf_second_order_dp_scorer.4
$region0: #{mf_second_order_dp_scorer.4}
  #allocation0 [shape = 'u32[]', space=smem, size = 0x4, offset = 0x4, fixed_abs, tag = 'smem constant byte address 0x4 - core index']
  #allocation1 [shape = 'u32[72,128]{1,0:T(1,128)}', space=vmem, size = 0x9000, scoped, tag = 'internal scratch']
  %s0 = inlined_call_operand.vmem [shape: bf16[2,8,256], index: 0, kind: input, shape index: {}]
  %s1 = inlined_call_operand.vmem [shape: bf16[4,128,128], index: 1, kind: input, shape index: {}]
  %s2 = inlined_call_operand.hbm [shape: f32[2,4,8,8], index: 2, kind: output, shape index: {}]
  %s3 = sld [smem:[#allocation0]]
  $region41: #{mf_second_order_dp_scorer.4} parent=0
    _
  %s5 = ssub.s32 1, %s3
  %s6 = scalar_select 0, %s5, %s3
  $region1: #{mf_second_order_dp_scorer.4} parent=0
    #allocation2 [shape = 'u8[8192]{0}', space=vmem, size = 0x2000, scoped, tag = 'output window, operand 0']
    #allocation3 [shape = 's32[2]{0}', space=sflag, size = 0x8, scoped, tag = 'scoped memory for mf_second_order_dp_scorer.4']
    %7 = vsyncpa [#allocation3], 0
    %s8 = scalar_lea.sflag [#allocation3], 1
    %9 = vsyncpa %s8, 0
    loop: start=0, step=1, limit=10
    $region2: #{mf_second_order_dp_scorer.4} parent=1 // loop_pre_header
      _
    $region3: #{mf_second_order_dp_scorer.4} parent=1 // loop_header
      %s11 = sphi 0, %s15
      %p12 = scmp.ge.s32.totalorder %s11, 10
      %s18 = sphi 0, %s30
      %s19 = sphi 0, %s26
      %s20 = sphi 0, %s18
      %s21 = sphi 0, %s19
      %s22 = sphi 0, %s20
      %s23 = sphi 0, %s21
      %s33 = sphi 0, %s35
      %s36 = sphi 0, %s33
      %s37 = sphi 0, %s36
      %s53 = sphi 0, %s37
      %s59 = sphi 0, %s61
      %s62 = sphi 0, %s59
      %s63 = sphi 0, %s62
      %s79 = sphi 0, %s63
      %s87 = sphi 0, %s89
      %s90 = sphi 0, %s87
      %s91 = sphi 0, %s90
      %s107 = sphi 0, %s91
    $region4: #{mf_second_order_dp_scorer.4} parent=1 // loop_header_branch
      %14 = sbr.rel (%p12) target = $region8
    $region5: #{mf_second_order_dp_scorer.4} parent=1 // loop_body
      %s16 = ssub.s32 %s11, 1
      %s17 = ssub.s32 %s11, 2
      %s24 = sadd.s32 1, %s19
      %p25 = scmp.ge.s32.totalorder %s24, 4
      %s26 = scalar_select %p25, 0, %s24
      %s27 = sadd.s32 1, %s18
      %s28 = scalar_select %p25, %s27, %s18
      %p29 = scmp.ge.s32.totalorder %s28, 2
      %s30 = scalar_select %p29, 0, %s28
      %s31 = ssub.s32 %s18, %s30
      %p32 = scmp.eq.s32.totalorder %s31, 0
      %s34 = sadd.s32 %s33, 1
      %s35 = scalar_select %p32, %s33, %s34
      %p38 = pneg %p32
      %p39 = scmp.eq.s32.totalorder %s11, 7
      %p40 = por %p38, %p39
      %p41 = scmp.ne.s32.totalorder %s33, %s36
      %p42 = scmp.eq.s32.totalorder %s11, 0
      %p43 = por %p41, %p42
      %p44 = scmp.ne.s32.totalorder %s33, %s36
      %p45 = scmp.eq.s32.totalorder %s16, 7
      %p46 = por %p44, %p45
      %p47 = scmp.ne.s32.totalorder %s36, %s37
      %p48 = scmp.eq.s32.totalorder %s16, 0
      %p49 = por %p47, %p48
      %p50 = scmp.ne.s32.totalorder %s36, %s37
      %p51 = scmp.eq.s32.totalorder %s17, 7
      %p52 = por %p50, %p51
      %p54 = scmp.ne.s32.totalorder %s37, %s53
      %p55 = scmp.eq.s32.totalorder %s17, 0
      %p56 = por %p54, %p55
      %s57 = ssub.s32 %s19, %s26
      %p58 = scmp.eq.s32.totalorder %s57, 0
      %s60 = sadd.s32 %s59, 1
      %s61 = scalar_select %p58, %s59, %s60
      %p64 = pneg %p58
      %p65 = scmp.eq.s32.totalorder %s11, 7
      %p66 = por %p64, %p65
      %p67 = scmp.ne.s32.totalorder %s59, %s62
      %p68 = scmp.eq.s32.totalorder %s11, 0
      %p69 = por %p67, %p68
      %p70 = scmp.ne.s32.totalorder %s59, %s62
      %p71 = scmp.eq.s32.totalorder %s16, 7
      %p72 = por %p70, %p71
      %p73 = scmp.ne.s32.totalorder %s62, %s63
      %p74 = scmp.eq.s32.totalorder %s16, 0
      %p75 = por %p73, %p74
      %p76 = scmp.ne.s32.totalorder %s62, %s63
      %p77 = scmp.eq.s32.totalorder %s17, 7
      %p78 = por %p76, %p77
      %p80 = scmp.ne.s32.totalorder %s63, %s79
      %p81 = scmp.eq.s32.totalorder %s17, 0
      %p82 = por %p80, %p81
      %s83 = ssub.s32 %s18, %s30
      %s84 = ssub.s32 %s19, %s26
      %s85 = sor.u32 %s83, %s84
      %p86 = scmp.eq.s32.totalorder %s85, 0
      %s88 = sadd.s32 %s87, 1
      %s89 = scalar_select %p86, %s87, %s88
      %p92 = pneg %p86
      %p93 = scmp.eq.s32.totalorder %s11, 7
      %p94 = por %p92, %p93
      %p95 = scmp.ne.s32.totalorder %s87, %s90
      %p96 = scmp.eq.s32.totalorder %s11, 0
      %p97 = por %p95, %p96
      %p98 = scmp.ne.s32.totalorder %s87, %s90
      %p99 = scmp.eq.s32.totalorder %s16, 7
      %p100 = por %p98, %p99
      %p101 = scmp.ne.s32.totalorder %s90, %s91
      %p102 = scmp.eq.s32.totalorder %s16, 0
      %p103 = por %p101, %p102
      %p104 = scmp.ne.s32.totalorder %s90, %s91
      %p105 = scmp.eq.s32.totalorder %s17, 7
      %p106 = por %p104, %p105
      %p108 = scmp.ne.s32.totalorder %s91, %s107
      %p109 = scmp.eq.s32.totalorder %s17, 0
      %p110 = por %p108, %p109
      %p111 = scmp.le.s32.totalorder 1, %s11
      %p112 = scmp.lt.s32.totalorder %s11, 9
      %p113 = pnand %p111, %p112
      %p114 = pneg %p113
      // Predicated region
      $region9: #{mf_second_order_dp_scorer.4} parent=5 // pred_check
        _
      $region10: #{mf_second_order_dp_scorer.4} parent=5 // pred_check_branch
        %116 = sbr.rel (%p113) target = $region12
      $region11: #{mf_second_order_dp_scorer.4} parent=5 // pred_region
        %s117 = ssub.s32 %s11, 1
      $region12: #{mf_second_order_dp_scorer.4} parent=5 // pred_fallthru
        _
      %p118 = scmp.lt.s32.totalorder %s11, 8
      // Predicated region
      $region13: #{mf_second_order_dp_scorer.4} parent=5 // pred_check
        %p119 = pneg %p118
      $region14: #{mf_second_order_dp_scorer.4} parent=5 // pred_check_branch
        %121 = sbr.rel (%p119) target = $region16
      $region15: #{mf_second_order_dp_scorer.4} parent=5 // pred_region
        // Predicated region
        $region17: #{mf_second_order_dp_scorer.4} parent=15 // pred_check
          %p122 = pneg %p43
        $region18: #{mf_second_order_dp_scorer.4} parent=15 // pred_check_branch
          %124 = sbr.rel (%p122) target = $region20
        $region19: #{mf_second_order_dp_scorer.4} parent=15 // pred_region
          %p125 = scmp.lt.s32.totalorder %s18, 1
          %s126 = scalar_select %p125, %s18, 1
          %s127 = smul.addr %s126, 2
          %s128 = smul.addr %s127, 4
          %s129 = scalar_lea.vmem %s0, %s128
        $region20: #{mf_second_order_dp_scorer.4} parent=15 // pred_fallthru
          _
        // Predicated region
        $region21: #{mf_second_order_dp_scorer.4} parent=15 // pred_check
          %p130 = pneg %p69
        $region22: #{mf_second_order_dp_scorer.4} parent=15 // pred_check_branch
          %132 = sbr.rel (%p130) target = $region24
        $region23: #{mf_second_order_dp_scorer.4} parent=15 // pred_region
          %p133 = scmp.lt.s32.totalorder %s19, 3
          %s134 = scalar_select %p133, %s19, 3
          %s135 = smul.addr %s134, 16
          %s136 = smul.addr %s135, 4
          %s137 = scalar_lea.vmem %s1, %s136
        $region24: #{mf_second_order_dp_scorer.4} parent=15 // pred_fallthru
          _
      $region16: #{mf_second_order_dp_scorer.4} parent=5 // pred_fallthru
        _
      %p138 = scmp.le.s32.totalorder 1, %s11
      %p139 = scmp.lt.s32.totalorder %s11, 9
      %p140 = pnand %p138, %p139
      %p141 = pneg %p140
      // Predicated region
      $region25: #{mf_second_order_dp_scorer.4} parent=5 // pred_check
        _
      $region26: #{mf_second_order_dp_scorer.4} parent=5 // pred_check_branch
        %143 = sbr.rel (%p140) target = $region28
      $region27: #{mf_second_order_dp_scorer.4} parent=5 // pred_region
        %s144 = ssub.s32 %s11, 1
        %p145 = scmp.lt.s32.totalorder %s20, 1
        %s146 = scalar_select %p145, %s20, 1
        %s147 = smul.addr %s146, 2
        %s148 = smul.addr %s147, 4
        %s149 = scalar_lea.vmem %s0, %s148
        %p150 = pneg %p49
        %p151 = pneg %p46
        %p152 = scmp.lt.s32.totalorder %s21, 3
        %s153 = scalar_select %p152, %s21, 3
        %s154 = smul.addr %s153, 16
        %s155 = smul.addr %s154, 4
        %s156 = scalar_lea.vmem %s1, %s155
        %p157 = pneg %p75
        %p158 = pneg %p72
        %p159 = pneg %p103
        %p160 = pneg %p100
        %s161 = sand.u32 %s90, 1
        %s162 = scalar_lea.sflag [#allocation3], %s161
        %s163 = sand.u32 %s90, 1
        %s164 = smul.addr %s163, 8
        %s165 = scalar_lea.vmem [#allocation2], %s164
        %p166 = scmp.lt.s32.totalorder %s20, 1
        %s167 = scalar_select %p166, %s20, 1
        %s168 = smul.addr %s167, 2
        %s169 = smul.addr %s168, 4
        %s170 = scalar_lea.vmem %s0, %s169
        %p171 = scmp.lt.s32.totalorder %s21, 3
        %s172 = scalar_select %p171, %s21, 3
        %s173 = smul.addr %s172, 16
        %s174 = smul.addr %s173, 4
        %s175 = scalar_lea.vmem %s1, %s174
        %v177 = vld [vmem:[%s170] sm:$0xff]
        %v178 = vld [vmem:[%s175] sm:$0xf]
        %v179 = vld [vmem:[%s175 + $0x4] sm:$0xf]
        %v180 = vld [vmem:[%s175 + $0x8] sm:$0xf]
        %v181 = vld [vmem:[%s175 + $0xc] sm:$0xf]
        %v182 = vld [vmem:[%s175 + $0x10] sm:$0xf]
        %v183 = vld [vmem:[%s175 + $0x14] sm:$0xf]
        %v184 = vld [vmem:[%s175 + $0x18] sm:$0xf]
        %v185 = vld [vmem:[%s175 + $0x1c] sm:$0xf]
        %v186 = vld [vmem:[%s175 + $0x20] sm:$0xf]
        %v187 = vld [vmem:[%s175 + $0x24] sm:$0xf]
        %v188 = vld [vmem:[%s175 + $0x28] sm:$0xf]
        %v189 = vld [vmem:[%s175 + $0x2c] sm:$0xf]
        %v190 = vld [vmem:[%s175 + $0x30] sm:$0xf]
        %v191 = vld [vmem:[%s175 + $0x34] sm:$0xf]
        %v192 = vld [vmem:[%s175 + $0x38] sm:$0xf]
        %v193 = vld [vmem:[%s175 + $0x3c] sm:$0xf]
        %v210 = vunpack.c.l.b16 %v178
        %v211 = vunpack.c.l.b16 %v179
        %v212 = vunpack.c.l.b16 %v180
        %v213 = vunpack.c.l.b16 %v181
        %v214 = vunpack.c.l.b16 %v182
        %v215 = vunpack.c.l.b16 %v183
        %v216 = vunpack.c.l.b16 %v184
        %v217 = vunpack.c.l.b16 %v185
        %v218 = vunpack.c.l.b16 %v186
        %v219 = vunpack.c.l.b16 %v187
        %v220 = vunpack.c.l.b16 %v188
        %v221 = vunpack.c.l.b16 %v189
        %v222 = vunpack.c.l.b16 %v190
        %v223 = vunpack.c.l.b16 %v191
        %v224 = vunpack.c.l.b16 %v192
        %v225 = vunpack.c.l.b16 %v193
        %v226 = vpack.c.b16 %v211, %v210
        %v227 = vpack.c.b16 %v213, %v212
        %v228 = vpack.c.b16 %v215, %v214
        %v229 = vpack.c.b16 %v217, %v216
        %v230 = vpack.c.b16 %v219, %v218
        %v231 = vpack.c.b16 %v221, %v220
        %v232 = vpack.c.b16 %v223, %v222
        %v233 = vpack.c.b16 %v225, %v224
        %242 = vmatpush.bf16.msra.mxu0 %v233
        %243 = vmatpush.bf16.msra.mxu0 %v232
        %244 = vmatpush.bf16.msra.mxu0 %v231
        %245 = vmatpush.bf16.msra.mxu0 %v230
        %246 = vmatpush.bf16.msra.mxu0 %v229
        %247 = vmatpush.bf16.msra.mxu0 %v228
        %248 = vmatpush.bf16.msra.mxu0 %v227
        %249 = vmatpush.bf16.msra.mxu0 %v226
        %250 = vmatmul.bf16.gmra.mxu0 %v177
        %v251 = vpop.f32.mrf.mxu0
        %v252 = vadd.f32 0.0, %v251
        %v253 = vpop.f32.mrf.mxu0
        %254 = vdwg.mxu0
        %v255 = vpack.c.bf16 %v252, %v252
        %v257 = vunpack.c.h.b16 %v177
        %v258 = vpack.c.b16 %v257, %v257
        %260 = vmatpush.bf16.xpose.msra.mxu0 0
        %261 = vmatpush.bf16.xpose.msra.mxu0 0
        %262 = vmatpush.bf16.xpose.msra.mxu0 0
        %263 = vmatpush.bf16.xpose.msra.mxu0 0
        %264 = vmatpush.bf16.xpose.msra.mxu0 0
        %265 = vmatpush.bf16.xpose.msra.mxu0 0
        %266 = vmatpush.bf16.xpose.msra.mxu0 0
        %267 = vmatpush.bf16.xpose.msra.mxu0 %v258
        %268 = vmatmul.bf16.gmra.mxu0 %v255
        %v269 = vpop.f32.mrf.mxu0
        %v270 = vadd.f32 0.0, %v269
        %v271 = vpop.f32.mrf.mxu0
        %272 = vdwg.mxu0
        %v273 = vmul.f32 %v270, 0.17677669
        %vm274 = vcmask 64512
        %275 = vst.msk [vmem:[%s165] sm:$0xff] %vm274, %v273
        %s276 = sand.u32 %s90, 1
        %s277 = scalar_lea.sflag [#allocation3], %s276
        %s278 = sand.u32 %s90, 1
        %s279 = smul.addr %s278, 8
        %s280 = scalar_lea.vmem [#allocation2], %s279
        // Predicated region
        $region29: #{mf_second_order_dp_scorer.4} parent=27 // pred_check
          %p281 = pneg %p100
        $region30: #{mf_second_order_dp_scorer.4} parent=27 // pred_check_branch
          %283 = sbr.rel (%p281) target = $region32
        $region31: #{mf_second_order_dp_scorer.4} parent=27 // pred_region
          %285 = vsyncadd %s277, 0
          %s286 = smul.addr %s20, 4
          %s287 = sadd.s32 %s21, %s286
          %s288 = smul.addr %s287, 8
          %s289 = scalar_lea.hbm %s2, %s288
          %s291 = sshll.u32 %s280, 4
          %s292 = int_to_ptr.vmem [resolvable:$true] %s291
          %s293 = sshll.u32 %s289, 4
          %s294 = int_to_ptr.hbm [resolvable:$true] %s293
          %296 = dma.vmem_to_hbm [thread:$0]  %s292, 128, %s294, %s277
        $region32: #{mf_second_order_dp_scorer.4} parent=27 // pred_fallthru
          _
      $region28: #{mf_second_order_dp_scorer.4} parent=5 // pred_fallthru
        _
      %p297 = scmp.le.s32.totalorder 2, %s11
      // Predicated region
      $region33: #{mf_second_order_dp_scorer.4} parent=5 // pred_check
        %p298 = pneg %p297
      $region34: #{mf_second_order_dp_scorer.4} parent=5 // pred_check_branch
        %300 = sbr.rel (%p298) target = $region36
      $region35: #{mf_second_order_dp_scorer.4} parent=5 // pred_region
        %s301 = ssub.s32 %s11, 2
        // Predicated region
        $region37: #{mf_second_order_dp_scorer.4} parent=35 // pred_check
          %p302 = pneg %p106
        $region38: #{mf_second_order_dp_scorer.4} parent=35 // pred_check_branch
          %304 = sbr.rel (%p302) target = $region40
        $region39: #{mf_second_order_dp_scorer.4} parent=35 // pred_region
          %s305 = sand.u32 %s91, 1
          %s306 = scalar_lea.sflag [#allocation3], %s305
          %s307 = sand.u32 %s91, 1
          %s308 = smul.addr %s307, 8
          %s309 = scalar_lea.vmem [#allocation2], %s308
          %311 = dma.done %s306, 128
        $region40: #{mf_second_order_dp_scorer.4} parent=35 // pred_fallthru
          _
      $region36: #{mf_second_order_dp_scorer.4} parent=5 // pred_fallthru
        _
    $region6: #{mf_second_order_dp_scorer.4} parent=1 // loop_footer
      %s15 = sadd.s32 1, %s11
    $region7: #{mf_second_order_dp_scorer.4} parent=1 // loop_footer_branch
      %10 = sbr.rel target = $region3
    $region8: #{mf_second_order_dp_scorer.4} parent=1 // loop_exit
      _
    %312 = vsyncpa [#allocation3], 1
    %s313 = scalar_lea.sflag [#allocation3], 1
    %314 = vsyncpa %s313, 1

// kernel: mf_second_order_dp_scorer.3
$region0: #{mf_second_order_dp_scorer.3}
  #allocation0 [shape = 'u32[]', space=smem, size = 0x4, offset = 0x4, fixed_abs, tag = 'smem constant byte address 0x4 - core index']
  #allocation1 [shape = 'u32[72,128]{1,0:T(1,128)}', space=vmem, size = 0x9000, scoped, tag = 'internal scratch']
  %s0 = inlined_call_operand.vmem [shape: f32[16,32], index: 0, kind: input, shape index: {}]
  %s1 = inlined_call_operand.vmem [shape: bf16[32,1664], index: 1, kind: input, shape index: {}]
  %s2 = inlined_call_operand.vmem [shape: f32[1,1664], index: 2, kind: input, shape index: {}]
  %s3 = inlined_call_operand.vmem [shape: bf16[9,128,8], index: 3, kind: input, shape index: {}]
  %s4 = inlined_call_operand.vmem [shape: bf16[16,256], index: 4, kind: output, shape index: {0}]
  %s5 = inlined_call_operand.vmem [shape: bf16[16,256], index: 5, kind: output, shape index: {1}]
  %s6 = inlined_call_operand.vmem [shape: f32[16,72], index: 6, kind: output, shape index: {2}]
  %7 = xla_tuple %s4, %s5, %s6
  %s8 = sld [smem:[#allocation0]]
  $region65: #{mf_second_order_dp_scorer.3} parent=0
    _
  %s10 = ssub.s32 1, %s8
  %s11 = scalar_select 0, %s10, %s8
  loop: start=0, step=1, limit=4
  $region2: #{mf_second_order_dp_scorer.3} parent=0 // loop_pre_header
    _
  $region3: #{mf_second_order_dp_scorer.3} parent=0 // loop_header
    %s13 = sphi 0, %s17
    %p14 = scmp.ge.s32.totalorder %s13, 4
    %s23 = sphi 0, %s25
    %s26 = sphi 0, %s23
    %s27 = sphi 0, %s26
    %s43 = sphi 0, %s27
    %s47 = sphi 0, %s47
    %s49 = sphi 0, %s47
    %s50 = sphi 0, %s49
    %s64 = sphi 0, %s50
    %s68 = sphi 0, %s68
    %s70 = sphi 0, %s68
    %s71 = sphi 0, %s70
    %s85 = sphi 0, %s71
    %s89 = sphi 0, %s89
    %s91 = sphi 0, %s89
    %s92 = sphi 0, %s91
    %s106 = sphi 0, %s92
    %s112 = sphi 0, %s114
    %s115 = sphi 0, %s112
    %s116 = sphi 0, %s115
    %s132 = sphi 0, %s116
    %s138 = sphi 0, %s140
    %s141 = sphi 0, %s138
    %s142 = sphi 0, %s141
    %s158 = sphi 0, %s142
    %s164 = sphi 0, %s166
    %s167 = sphi 0, %s164
    %s168 = sphi 0, %s167
    %s184 = sphi 0, %s168
  $region4: #{mf_second_order_dp_scorer.3} parent=0 // loop_header_branch
    %16 = sbr.rel (%p14) target = $region8
  $region5: #{mf_second_order_dp_scorer.3} parent=0 // loop_body
    %s18 = ssub.s32 %s13, 1
    %s19 = ssub.s32 %s13, 2
    %s20 = sadd.s32 %s13, 1
    %s21 = ssub.s32 %s13, %s20
    %p22 = scmp.eq.s32.totalorder %s21, 0
    %s24 = sadd.s32 %s23, 1
    %s25 = scalar_select %p22, %s23, %s24
    %p28 = pneg %p22
    %p29 = scmp.eq.s32.totalorder %s13, 1
    %p30 = por %p28, %p29
    %p31 = scmp.ne.s32.totalorder %s23, %s26
    %p32 = scmp.eq.s32.totalorder %s13, 0
    %p33 = por %p31, %p32
    %p34 = scmp.ne.s32.totalorder %s23, %s26
    %p35 = scmp.eq.s32.totalorder %s18, 1
    %p36 = por %p34, %p35
    %p37 = scmp.ne.s32.totalorder %s26, %s27
    %p38 = scmp.eq.s32.totalorder %s18, 0
    %p39 = por %p37, %p38
    %p40 = scmp.ne.s32.totalorder %s26, %s27
    %p41 = scmp.eq.s32.totalorder %s19, 1
    %p42 = por %p40, %p41
    %p44 = scmp.ne.s32.totalorder %s27, %s43
    %p45 = scmp.eq.s32.totalorder %s19, 0
    %p46 = por %p44, %p45
    %s48 = sadd.s32 %s47, 1
    %p51 = scmp.eq.s32.totalorder %s13, 1
    %p52 = scmp.ne.s32.totalorder %s47, %s49
    %p53 = scmp.eq.s32.totalorder %s13, 0
    %p54 = por %p52, %p53
    %p55 = scmp.ne.s32.totalorder %s47, %s49
    %p56 = scmp.eq.s32.totalorder %s18, 1
    %p57 = por %p55, %p56
    %p58 = scmp.ne.s32.totalorder %s49, %s50
    %p59 = scmp.eq.s32.totalorder %s18, 0
    %p60 = por %p58, %p59
    %p61 = scmp.ne.s32.totalorder %s49, %s50
    %p62 = scmp.eq.s32.totalorder %s19, 1
    %p63 = por %p61, %p62
    %p65 = scmp.ne.s32.totalorder %s50, %s64
    %p66 = scmp.eq.s32.totalorder %s19, 0
    %p67 = por %p65, %p66
    %s69 = sadd.s32 %s68, 1
    %p72 = scmp.eq.s32.totalorder %s13, 1
    %p73 = scmp.ne.s32.totalorder %s68, %s70
    %p74 = scmp.eq.s32.totalorder %s13, 0
    %p75 = por %p73, %p74
    %p76 = scmp.ne.s32.totalorder %s68, %s70
    %p77 = scmp.eq.s32.totalorder %s18, 1
    %p78 = por %p76, %p77
    %p79 = scmp.ne.s32.totalorder %s70, %s71
    %p80 = scmp.eq.s32.totalorder %s18, 0
    %p81 = por %p79, %p80
    %p82 = scmp.ne.s32.totalorder %s70, %s71
    %p83 = scmp.eq.s32.totalorder %s19, 1
    %p84 = por %p82, %p83
    %p86 = scmp.ne.s32.totalorder %s71, %s85
    %p87 = scmp.eq.s32.totalorder %s19, 0
    %p88 = por %p86, %p87
    %s90 = sadd.s32 %s89, 1
    %p93 = scmp.eq.s32.totalorder %s13, 1
    %p94 = scmp.ne.s32.totalorder %s89, %s91
    %p95 = scmp.eq.s32.totalorder %s13, 0
    %p96 = por %p94, %p95
    %p97 = scmp.ne.s32.totalorder %s89, %s91
    %p98 = scmp.eq.s32.totalorder %s18, 1
    %p99 = por %p97, %p98
    %p100 = scmp.ne.s32.totalorder %s91, %s92
    %p101 = scmp.eq.s32.totalorder %s18, 0
    %p102 = por %p100, %p101
    %p103 = scmp.ne.s32.totalorder %s91, %s92
    %p104 = scmp.eq.s32.totalorder %s19, 1
    %p105 = por %p103, %p104
    %p107 = scmp.ne.s32.totalorder %s92, %s106
    %p108 = scmp.eq.s32.totalorder %s19, 0
    %p109 = por %p107, %p108
    %s110 = ssub.s32 %s13, %s20
    %p111 = scmp.eq.s32.totalorder %s110, 0
    %s113 = sadd.s32 %s112, 1
    %s114 = scalar_select %p111, %s112, %s113
    %p117 = pneg %p111
    %p118 = scmp.eq.s32.totalorder %s13, 1
    %p119 = por %p117, %p118
    %p120 = scmp.ne.s32.totalorder %s112, %s115
    %p121 = scmp.eq.s32.totalorder %s13, 0
    %p122 = por %p120, %p121
    %p123 = scmp.ne.s32.totalorder %s112, %s115
    %p124 = scmp.eq.s32.totalorder %s18, 1
    %p125 = por %p123, %p124
    %p126 = scmp.ne.s32.totalorder %s115, %s116
    %p127 = scmp.eq.s32.totalorder %s18, 0
    %p128 = por %p126, %p127
    %p129 = scmp.ne.s32.totalorder %s115, %s116
    %p130 = scmp.eq.s32.totalorder %s19, 1
    %p131 = por %p129, %p130
    %p133 = scmp.ne.s32.totalorder %s116, %s132
    %p134 = scmp.eq.s32.totalorder %s19, 0
    %p135 = por %p133, %p134
    %s136 = ssub.s32 %s13, %s20
    %p137 = scmp.eq.s32.totalorder %s136, 0
    %s139 = sadd.s32 %s138, 1
    %s140 = scalar_select %p137, %s138, %s139
    %p143 = pneg %p137
    %p144 = scmp.eq.s32.totalorder %s13, 1
    %p145 = por %p143, %p144
    %p146 = scmp.ne.s32.totalorder %s138, %s141
    %p147 = scmp.eq.s32.totalorder %s13, 0
    %p148 = por %p146, %p147
    %p149 = scmp.ne.s32.totalorder %s138, %s141
    %p150 = scmp.eq.s32.totalorder %s18, 1
    %p151 = por %p149, %p150
    %p152 = scmp.ne.s32.totalorder %s141, %s142
    %p153 = scmp.eq.s32.totalorder %s18, 0
    %p154 = por %p152, %p153
    %p155 = scmp.ne.s32.totalorder %s141, %s142
    %p156 = scmp.eq.s32.totalorder %s19, 1
    %p157 = por %p155, %p156
    %p159 = scmp.ne.s32.totalorder %s142, %s158
    %p160 = scmp.eq.s32.totalorder %s19, 0
    %p161 = por %p159, %p160
    %s162 = ssub.s32 %s13, %s20
    %p163 = scmp.eq.s32.totalorder %s162, 0
    %s165 = sadd.s32 %s164, 1
    %s166 = scalar_select %p163, %s164, %s165
    %p169 = pneg %p163
    %p170 = scmp.eq.s32.totalorder %s13, 1
    %p171 = por %p169, %p170
    %p172 = scmp.ne.s32.totalorder %s164, %s167
    %p173 = scmp.eq.s32.totalorder %s13, 0
    %p174 = por %p172, %p173
    %p175 = scmp.ne.s32.totalorder %s164, %s167
    %p176 = scmp.eq.s32.totalorder %s18, 1
    %p177 = por %p175, %p176
    %p178 = scmp.ne.s32.totalorder %s167, %s168
    %p179 = scmp.eq.s32.totalorder %s18, 0
    %p180 = por %p178, %p179
    %p181 = scmp.ne.s32.totalorder %s167, %s168
    %p182 = scmp.eq.s32.totalorder %s19, 1
    %p183 = por %p181, %p182
    %p185 = scmp.ne.s32.totalorder %s168, %s184
    %p186 = scmp.eq.s32.totalorder %s19, 0
    %p187 = por %p185, %p186
    %p188 = scmp.le.s32.totalorder 1, %s13
    %p189 = scmp.lt.s32.totalorder %s13, 3
    %p190 = pnand %p188, %p189
    %p191 = pneg %p190
    // Predicated region
    $region9: #{mf_second_order_dp_scorer.3} parent=5 // pred_check
      _
    $region10: #{mf_second_order_dp_scorer.3} parent=5 // pred_check_branch
      %193 = sbr.rel (%p190) target = $region12
    $region11: #{mf_second_order_dp_scorer.3} parent=5 // pred_region
      %s194 = ssub.s32 %s13, 1
      // Predicated region
      $region13: #{mf_second_order_dp_scorer.3} parent=11 // pred_check
        %p195 = pneg %p60
      $region14: #{mf_second_order_dp_scorer.3} parent=11 // pred_check_branch
        %197 = sbr.rel (%p195) target = $region16
      $region15: #{mf_second_order_dp_scorer.3} parent=11 // pred_region
        _
      $region16: #{mf_second_order_dp_scorer.3} parent=11 // pred_fallthru
        _
      // Predicated region
      $region17: #{mf_second_order_dp_scorer.3} parent=11 // pred_check
        %p198 = pneg %p81
      $region18: #{mf_second_order_dp_scorer.3} parent=11 // pred_check_branch
        %200 = sbr.rel (%p198) target = $region20
      $region19: #{mf_second_order_dp_scorer.3} parent=11 // pred_region
        _
      $region20: #{mf_second_order_dp_scorer.3} parent=11 // pred_fallthru
        _
      // Predicated region
      $region21: #{mf_second_order_dp_scorer.3} parent=11 // pred_check
        %p201 = pneg %p102
      $region22: #{mf_second_order_dp_scorer.3} parent=11 // pred_check_branch
        %203 = sbr.rel (%p201) target = $region24
      $region23: #{mf_second_order_dp_scorer.3} parent=11 // pred_region
        _
      $region24: #{mf_second_order_dp_scorer.3} parent=11 // pred_fallthru
        _
    $region12: #{mf_second_order_dp_scorer.3} parent=5 // pred_fallthru
      _
    %p204 = scmp.lt.s32.totalorder %s13, 2
    // Predicated region
    $region25: #{mf_second_order_dp_scorer.3} parent=5 // pred_check
      %p205 = pneg %p204
    $region26: #{mf_second_order_dp_scorer.3} parent=5 // pred_check_branch
      %207 = sbr.rel (%p205) target = $region28
    $region27: #{mf_second_order_dp_scorer.3} parent=5 // pred_region
      // Predicated region
      $region29: #{mf_second_order_dp_scorer.3} parent=27 // pred_check
        %p208 = pneg %p33
      $region30: #{mf_second_order_dp_scorer.3} parent=27 // pred_check_branch
        %210 = sbr.rel (%p208) target = $region32
      $region31: #{mf_second_order_dp_scorer.3} parent=27 // pred_region
        %p211 = scmp.lt.s32.totalorder %s13, 1
        %s212 = scalar_select %p211, %s13, 1
        %s213 = smul.addr %s212, 8
        %s214 = scalar_lea.vmem %s0, %s213
      $region32: #{mf_second_order_dp_scorer.3} parent=27 // pred_fallthru
        _
    $region28: #{mf_second_order_dp_scorer.3} parent=5 // pred_fallthru
      _
    %p215 = scmp.le.s32.totalorder 1, %s13
    %p216 = scmp.lt.s32.totalorder %s13, 3
    %p217 = pnand %p215, %p216
    %p218 = pneg %p217
    // Predicated region
    $region33: #{mf_second_order_dp_scorer.3} parent=5 // pred_check
      _
    $region34: #{mf_second_order_dp_scorer.3} parent=5 // pred_check_branch
      %220 = sbr.rel (%p217) target = $region36
    $region35: #{mf_second_order_dp_scorer.3} parent=5 // pred_region
      %s221 = ssub.s32 %s13, 1
      %p222 = scmp.lt.s32.totalorder %s18, 1
      %s223 = scalar_select %p222, %s18, 1
      %s224 = smul.addr %s223, 8
      %s225 = scalar_lea.vmem %s0, %s224
      %p226 = pneg %p39
      %p227 = pneg %p36
      %p228 = pneg %p60
      %p229 = pneg %p57
      %p230 = pneg %p81
      %p231 = pneg %p78
      %p232 = pneg %p102
      %p233 = pneg %p99
      %p234 = pneg %p128
      %p235 = pneg %p125
      %p236 = scmp.lt.s32.totalorder %s18, 1
      %s237 = scalar_select %p236, %s18, 1
      %s238 = smul.addr %s237, 2
      %s239 = smul.addr %s238, 4
      %s240 = scalar_lea.vmem %s4, %s239
      %p241 = pneg %p154
      %p242 = pneg %p151
      %p243 = scmp.lt.s32.totalorder %s18, 1
      %s244 = scalar_select %p243, %s18, 1
      %s245 = smul.addr %s244, 2
      %s246 = smul.addr %s245, 4
      %s247 = scalar_lea.vmem %s5, %s246
      %p248 = pneg %p180
      %p249 = pneg %p177
      %p250 = scmp.lt.s32.totalorder %s18, 1
      %s251 = scalar_select %p250, %s18, 1
      %s252 = smul.addr %s251, 8
      %s253 = scalar_lea.vmem %s6, %s252
      %p254 = scmp.lt.s32.totalorder %s18, 1
      %s255 = scalar_select %p254, %s18, 1
      %s256 = smul.addr %s255, 8
      %s257 = scalar_lea.vmem %s0, %s256
      %p258 = scmp.lt.s32.totalorder %s18, 1
      %s259 = scalar_select %p258, %s18, 1
      %s260 = smul.addr %s259, 2
      %s261 = smul.addr %s260, 4
      %s262 = scalar_lea.vmem %s4, %s261
      %p263 = scmp.lt.s32.totalorder %s18, 1
      %s264 = scalar_select %p263, %s18, 1
      %s265 = smul.addr %s264, 2
      %s266 = smul.addr %s265, 4
      %s267 = scalar_lea.vmem %s5, %s266
      %p268 = scmp.lt.s32.totalorder %s18, 1
      %s269 = scalar_select %p268, %s18, 1
      %s270 = smul.addr %s269, 8
      %s271 = scalar_lea.vmem %s6, %s270
      %v273 = vld [vmem:[%s257] sm:$0xff]
      %v274 = vpack.c.bf16 %v273, %v273
      %v275 = vld [vmem:[%s1] sm:$0xff]
      %v276 = vld [vmem:[%s1 + $0x8] sm:$0xff]
      %v277 = vld [vmem:[%s1 + $0x10] sm:$0xff]
      %v278 = vld [vmem:[%s1 + $0x18] sm:$0xff]
      %v279 = vld [vmem:[%s1 + $0x20] sm:$0xff]
      %v280 = vld [vmem:[%s1 + $0x28] sm:$0xff]
      %v281 = vld [vmem:[%s1 + $0x30] sm:$0xf]
      %v282 = vld [vmem:[%s1 + $0x34] sm:$0xff]
      %v283 = vld [vmem:[%s1 + $0x3c] sm:$0xff]
      %v284 = vld [vmem:[%s1 + $0x44] sm:$0xff]
      %v285 = vld [vmem:[%s1 + $0x4c] sm:$0xff]
      %v286 = vld [vmem:[%s1 + $0x54] sm:$0xff]
      %v287 = vld [vmem:[%s1 + $0x5c] sm:$0xff]
      %v288 = vld [vmem:[%s1 + $0x64] sm:$0xf]
      %v289 = vld [vmem:[%s1 + $0x68] sm:$0xff]
      %v290 = vld [vmem:[%s1 + $0x70] sm:$0xff]
      %v291 = vld [vmem:[%s1 + $0x78] sm:$0xff]
      %v292 = vld [vmem:[%s1 + $0x80] sm:$0xff]
      %v293 = vld [vmem:[%s1 + $0x88] sm:$0xff]
      %v294 = vld [vmem:[%s1 + $0x90] sm:$0xff]
      %v295 = vld [vmem:[%s1 + $0x98] sm:$0xf]
      %v296 = vld [vmem:[%s1 + $0x9c] sm:$0xff]
      %v297 = vld [vmem:[%s1 + $0xa4] sm:$0xff]
      %v298 = vld [vmem:[%s1 + $0xac] sm:$0xff]
      %v299 = vld [vmem:[%s1 + $0xb4] sm:$0xff]
      %v300 = vld [vmem:[%s1 + $0xbc] sm:$0xff]
      %v301 = vld [vmem:[%s1 + $0xc4] sm:$0xff]
      %v302 = vld [vmem:[%s1 + $0xcc] sm:$0xf]
      %v303 = vld [vmem:[%s2] sm:$0xff]
      %v304 = vld [vmem:[%s2 + $0x8] sm:$0x1f]
      %v307 = vperm.slane %v303, 0
      %v308 = vperm.slane %v303, 1
      %v309 = vperm.slane %v303, 2
      %v310 = vperm.slane %v303, 3
      %v311 = vperm.slane %v303, 4
      %v312 = vperm.slane %v303, 5
      %v313 = vperm.slane %v303, 6
      %v314 = vperm.slane %v303, 7
      %v315 = vperm.slane %v304, 0
      %v316 = vperm.slane %v304, 1
      %v317 = vperm.slane %v304, 2
      %v318 = vperm.slane %v304, 3
      %v319 = vperm.slane %v304, 4
      %v361 = vunpack.c.l.b16 %v275
      %v362 = vunpack.c.h.b16 %v275
      %v363 = vunpack.c.l.b16 %v276
      %v364 = vunpack.c.h.b16 %v276
      %v365 = vunpack.c.l.b16 %v277
      %v366 = vunpack.c.h.b16 %v277
      %v367 = vunpack.c.l.b16 %v278
      %v368 = vunpack.c.h.b16 %v278
      %v369 = vunpack.c.l.b16 %v279
      %v370 = vunpack.c.h.b16 %v279
      %v371 = vunpack.c.l.b16 %v280
      %v372 = vunpack.c.h.b16 %v280
      %v373 = vunpack.c.l.b16 %v281
      %v374 = vunpack.c.l.b16 %v282
      %v375 = vunpack.c.h.b16 %v282
      %v376 = vunpack.c.l.b16 %v283
      %v377 = vunpack.c.h.b16 %v283
      %v378 = vunpack.c.l.b16 %v284
      %v379 = vunpack.c.h.b16 %v284
      %v380 = vunpack.c.l.b16 %v285
      %v381 = vunpack.c.h.b16 %v285
      %v382 = vunpack.c.l.b16 %v286
      %v383 = vunpack.c.h.b16 %v286
      %v384 = vunpack.c.l.b16 %v287
      %v385 = vunpack.c.h.b16 %v287
      %v386 = vunpack.c.l.b16 %v288
      %v387 = vunpack.c.l.b16 %v289
      %v388 = vunpack.c.h.b16 %v289
      %v389 = vunpack.c.l.b16 %v290
      %v390 = vunpack.c.h.b16 %v290
      %v391 = vunpack.c.l.b16 %v291
      %v392 = vunpack.c.h.b16 %v291
      %v393 = vunpack.c.l.b16 %v292
      %v394 = vunpack.c.h.b16 %v292
      %v395 = vunpack.c.l.b16 %v293
      %v396 = vunpack.c.h.b16 %v293
      %v397 = vunpack.c.l.b16 %v294
      %v398 = vunpack.c.h.b16 %v294
      %v399 = vunpack.c.l.b16 %v295
      %v400 = vunpack.c.l.b16 %v296
      %v401 = vunpack.c.h.b16 %v296
      %v402 = vunpack.c.l.b16 %v297
      %v403 = vunpack.c.h.b16 %v297
      %v404 = vunpack.c.l.b16 %v298
      %v405 = vunpack.c.h.b16 %v298
      %v406 = vunpack.c.l.b16 %v299
      %v407 = vunpack.c.h.b16 %v299
      %v408 = vunpack.c.l.b16 %v300
      %v409 = vunpack.c.h.b16 %v300
      %v410 = vunpack.c.l.b16 %v301
      %v411 = vunpack.c.h.b16 %v301
      %v412 = vunpack.c.l.b16 %v302
      %v413 = vpack.c.b16 %v374, %v361
      %v414 = vpack.c.b16 %v375, %v362
      %v415 = vpack.c.b16 %v376, %v363
      %v416 = vpack.c.b16 %v377, %v364
      %v417 = vpack.c.b16 %v378, %v365
      %v418 = vpack.c.b16 %v379, %v366
      %v419 = vpack.c.b16 %v380, %v367
      %v420 = vpack.c.b16 %v381, %v368
      %v421 = vpack.c.b16 %v382, %v369
      %v422 = vpack.c.b16 %v383, %v370
      %v423 = vpack.c.b16 %v384, %v371
      %v424 = vpack.c.b16 %v385, %v372
      %v425 = vpack.c.b16 %v386, %v373
      %v426 = vpack.c.b16 %v400, %v387
      %v427 = vpack.c.b16 %v401, %v388
      %v428 = vpack.c.b16 %v402, %v389
      %v429 = vpack.c.b16 %v403, %v390
      %v430 = vpack.c.b16 %v404, %v391
      %v431 = vpack.c.b16 %v405, %v392
      %v432 = vpack.c.b16 %v406, %v393
      %v433 = vpack.c.b16 %v407, %v394
      %v434 = vpack.c.b16 %v408, %v395
      %v435 = vpack.c.b16 %v409, %v396
      %v436 = vpack.c.b16 %v410, %v397
      %v437 = vpack.c.b16 %v411, %v398
      %v438 = vpack.c.b16 %v412, %v399
      %vm465 = vcmask 261120
      %v467 = vsel %vm465, %v274, 0
      %469 = vmatpush.bf16.msra.mxu0 0
      %470 = vmatpush.bf16.msra.mxu0 0
      %471 = vmatpush.bf16.msra.mxu0 0
      %472 = vmatpush.bf16.msra.mxu0 0
      %473 = vmatpush.bf16.msra.mxu0 0
      %474 = vmatpush.bf16.msra.mxu0 0
      %475 = vmatpush.bf16.msra.mxu0 %v426
      %476 = vmatpush.bf16.msra.mxu0 %v413
      %477 = vmatmul.bf16.gmra.mxu0 %v467
      %v478 = vpop.f32.mrf.mxu0
      %v479 = vadd.f32 %v307, %v478
      %v480 = vpop.f32.mrf.mxu0
      %481 = vdwg.mxu0
      %482 = vmatpush.bf16.msra.mxu0 0
      %483 = vmatpush.bf16.msra.mxu0 0
      %484 = vmatpush.bf16.msra.mxu0 0
      %485 = vmatpush.bf16.msra.mxu0 0
      %486 = vmatpush.bf16.msra.mxu0 0
      %487 = vmatpush.bf16.msra.mxu0 0
      %488 = vmatpush.bf16.msra.mxu0 %v427
      %489 = vmatpush.bf16.msra.mxu0 %v414
      %490 = vmatmul.bf16.gmra.mxu0 %v467
      %v491 = vpop.f32.mrf.mxu0
      %v492 = vadd.f32 %v308, %v491
      %v493 = vpop.f32.mrf.mxu0
      %494 = vdwg.mxu0
      %495 = vmatpush.bf16.msra.mxu0 0
      %496 = vmatpush.bf16.msra.mxu0 0
      %497 = vmatpush.bf16.msra.mxu0 0
      %498 = vmatpush.bf16.msra.mxu0 0
      %499 = vmatpush.bf16.msra.mxu0 0
      %500 = vmatpush.bf16.msra.mxu0 0
      %501 = vmatpush.bf16.msra.mxu0 %v428
      %502 = vmatpush.bf16.msra.mxu0 %v415
      %503 = vmatmul.bf16.gmra.mxu0 %v467
      %v504 = vpop.f32.mrf.mxu0
      %v505 = vadd.f32 %v309, %v504
      %v506 = vpop.f32.mrf.mxu0
      %507 = vdwg.mxu0
      %508 = vmatpush.bf16.msra.mxu0 0
      %509 = vmatpush.bf16.msra.mxu0 0
      %510 = vmatpush.bf16.msra.mxu0 0
      %511 = vmatpush.bf16.msra.mxu0 0
      %512 = vmatpush.bf16.msra.mxu0 0
      %513 = vmatpush.bf16.msra.mxu0 0
      %514 = vmatpush.bf16.msra.mxu0 %v429
      %515 = vmatpush.bf16.msra.mxu0 %v416
      %516 = vmatmul.bf16.gmra.mxu0 %v467
      %v517 = vpop.f32.mrf.mxu0
      %v518 = vadd.f32 %v310, %v517
      %v519 = vpop.f32.mrf.mxu0
      %520 = vdwg.mxu0
      %521 = vmatpush.bf16.msra.mxu0 0
      %522 = vmatpush.bf16.msra.mxu0 0
      %523 = vmatpush.bf16.msra.mxu0 0
      %524 = vmatpush.bf16.msra.mxu0 0
      %525 = vmatpush.bf16.msra.mxu0 0
      %526 = vmatpush.bf16.msra.mxu0 0
      %527 = vmatpush.bf16.msra.mxu0 %v430
      %528 = vmatpush.bf16.msra.mxu0 %v417
      %529 = vmatmul.bf16.gmra.mxu0 %v467
      %v530 = vpop.f32.mrf.mxu0
      %v531 = vadd.f32 %v311, %v530
      %v532 = vpop.f32.mrf.mxu0
      %533 = vdwg.mxu0
      %534 = vmatpush.bf16.msra.mxu0 0
      %535 = vmatpush.bf16.msra.mxu0 0
      %536 = vmatpush.bf16.msra.mxu0 0
      %537 = vmatpush.bf16.msra.mxu0 0
      %538 = vmatpush.bf16.msra.mxu0 0
      %539 = vmatpush.bf16.msra.mxu0 0
      %540 = vmatpush.bf16.msra.mxu0 %v431
      %541 = vmatpush.bf16.msra.mxu0 %v418
      %542 = vmatmul.bf16.gmra.mxu0 %v467
      %v543 = vpop.f32.mrf.mxu0
      %v544 = vadd.f32 %v312, %v543
      %v545 = vpop.f32.mrf.mxu0
      %546 = vdwg.mxu0
      %547 = vmatpush.bf16.msra.mxu0 0
      %548 = vmatpush.bf16.msra.mxu0 0
      %549 = vmatpush.bf16.msra.mxu0 0
      %550 = vmatpush.bf16.msra.mxu0 0
      %551 = vmatpush.bf16.msra.mxu0 0
      %552 = vmatpush.bf16.msra.mxu0 0
      %553 = vmatpush.bf16.msra.mxu0 %v432
      %554 = vmatpush.bf16.msra.mxu0 %v419
      %555 = vmatmul.bf16.gmra.mxu0 %v467
      %v556 = vpop.f32.mrf.mxu0
      %v557 = vadd.f32 %v313, %v556
      %v558 = vpop.f32.mrf.mxu0
      %559 = vdwg.mxu0
      %560 = vmatpush.bf16.msra.mxu0 0
      %561 = vmatpush.bf16.msra.mxu0 0
      %562 = vmatpush.bf16.msra.mxu0 0
      %563 = vmatpush.bf16.msra.mxu0 0
      %564 = vmatpush.bf16.msra.mxu0 0
      %565 = vmatpush.bf16.msra.mxu0 0
      %566 = vmatpush.bf16.msra.mxu0 %v433
      %567 = vmatpush.bf16.msra.mxu0 %v420
      %568 = vmatmul.bf16.gmra.mxu0 %v467
      %v569 = vpop.f32.mrf.mxu0
      %v570 = vadd.f32 %v314, %v569
      %v571 = vpop.f32.mrf.mxu0
      %572 = vdwg.mxu0
      %573 = vmatpush.bf16.msra.mxu0 0
      %574 = vmatpush.bf16.msra.mxu0 0
      %575 = vmatpush.bf16.msra.mxu0 0
      %576 = vmatpush.bf16.msra.mxu0 0
      %577 = vmatpush.bf16.msra.mxu0 0
      %578 = vmatpush.bf16.msra.mxu0 0
      %579 = vmatpush.bf16.msra.mxu0 %v434
      %580 = vmatpush.bf16.msra.mxu0 %v421
      %581 = vmatmul.bf16.gmra.mxu0 %v467
      %v582 = vpop.f32.mrf.mxu0
      %v583 = vadd.f32 %v315, %v582
      %v584 = vpop.f32.mrf.mxu0
      %585 = vdwg.mxu0
      %586 = vmatpush.bf16.msra.mxu0 0
      %587 = vmatpush.bf16.msra.mxu0 0
      %588 = vmatpush.bf16.msra.mxu0 0
      %589 = vmatpush.bf16.msra.mxu0 0
      %590 = vmatpush.bf16.msra.mxu0 0
      %591 = vmatpush.bf16.msra.mxu0 0
      %592 = vmatpush.bf16.msra.mxu0 %v435
      %593 = vmatpush.bf16.msra.mxu0 %v422
      %594 = vmatmul.bf16.gmra.mxu0 %v467
      %v595 = vpop.f32.mrf.mxu0
      %v596 = vadd.f32 %v316, %v595
      %v597 = vpop.f32.mrf.mxu0
      %598 = vdwg.mxu0
      %599 = vmatpush.bf16.msra.mxu0 0
      %600 = vmatpush.bf16.msra.mxu0 0
      %601 = vmatpush.bf16.msra.mxu0 0
      %602 = vmatpush.bf16.msra.mxu0 0
      %603 = vmatpush.bf16.msra.mxu0 0
      %604 = vmatpush.bf16.msra.mxu0 0
      %605 = vmatpush.bf16.msra.mxu0 %v436
      %606 = vmatpush.bf16.msra.mxu0 %v423
      %607 = vmatmul.bf16.gmra.mxu0 %v467
      %v608 = vpop.f32.mrf.mxu0
      %v609 = vadd.f32 %v317, %v608
      %v610 = vpop.f32.mrf.mxu0
      %611 = vdwg.mxu0
      %612 = vmatpush.bf16.msra.mxu0 0
      %613 = vmatpush.bf16.msra.mxu0 0
      %614 = vmatpush.bf16.msra.mxu0 0
      %615 = vmatpush.bf16.msra.mxu0 0
      %616 = vmatpush.bf16.msra.mxu0 0
      %617 = vmatpush.bf16.msra.mxu0 0
      %618 = vmatpush.bf16.msra.mxu0 %v437
      %619 = vmatpush.bf16.msra.mxu0 %v424
      %620 = vmatmul.bf16.gmra.mxu0 %v467
      %v621 = vpop.f32.mrf.mxu0
      %v622 = vadd.f32 %v318, %v621
      %v623 = vpop.f32.mrf.mxu0
      %624 = vdwg.mxu0
      %625 = vmatpush.bf16.msra.mxu0 0
      %626 = vmatpush.bf16.msra.mxu0 0
      %627 = vmatpush.bf16.msra.mxu0 0
      %628 = vmatpush.bf16.msra.mxu0 0
      %629 = vmatpush.bf16.msra.mxu0 0
      %630 = vmatpush.bf16.msra.mxu0 0
      %631 = vmatpush.bf16.msra.mxu0 %v438
      %632 = vmatpush.bf16.msra.mxu0 %v425
      %633 = vmatmul.bf16.gmra.mxu0 %v467
      %v634 = vpop.f32.mrf.mxu0
      %v635 = vadd.f32 %v319, %v634
      %v636 = vpop.f32.mrf.mxu0
      %637 = vdwg.mxu0
      %vm638 = vcmp.gt.f32.partialorder %v479, 0.0
      %vm639 = vcmp.gt.f32.partialorder %v492, 0.0
      %vm640 = vcmp.gt.f32.partialorder %v505, 0.0
      %vm641 = vcmp.gt.f32.partialorder %v518, 0.0
      %vm642 = vcmp.gt.f32.partialorder %v531, 0.0
      %vm643 = vcmp.gt.f32.partialorder %v544, 0.0
      %vm644 = vcmp.gt.f32.partialorder %v557, 0.0
      %vm645 = vcmp.gt.f32.partialorder %v570, 0.0
      %vm646 = vcmp.gt.f32.partialorder %v583, 0.0
      %vm647 = vcmp.gt.f32.partialorder %v596, 0.0
      %vm648 = vcmp.gt.f32.partialorder %v609, 0.0
      %vm649 = vcmp.gt.f32.partialorder %v622, 0.0
      %vm650 = vcmp.gt.f32.partialorder %v635, 0.0
      %v651 = vmul.f32 %v479, 0.1
      %v652 = vmul.f32 %v492, 0.1
      %v653 = vmul.f32 %v505, 0.1
      %v654 = vmul.f32 %v518, 0.1
      %v655 = vmul.f32 %v531, 0.1
      %v656 = vmul.f32 %v544, 0.1
      %v657 = vmul.f32 %v557, 0.1
      %v658 = vmul.f32 %v570, 0.1
      %v659 = vmul.f32 %v583, 0.1
      %v660 = vmul.f32 %v596, 0.1
      %v661 = vmul.f32 %v609, 0.1
      %v662 = vmul.f32 %v622, 0.1
      %v663 = vmul.f32 %v635, 0.1
      %v664 = vsel %vm638, %v479, %v651
      %v665 = vsel %vm639, %v492, %v652
      %v666 = vsel %vm640, %v505, %v653
      %v667 = vsel %vm641, %v518, %v654
      %v668 = vsel %vm642, %v531, %v655
      %v669 = vsel %vm643, %v544, %v656
      %v670 = vsel %vm644, %v557, %v657
      %v671 = vsel %vm645, %v570, %v658
      %v672 = vsel %vm646, %v583, %v659
      %v673 = vsel %vm647, %v596, %v660
      %v674 = vsel %vm648, %v609, %v661
      %v675 = vsel %vm649, %v622, %v662
      %v676 = vsel %vm650, %v635, %v663
      %v677 = vpack.c.bf16 %v665, %v664
      %678 = vst [vmem:[%s262] sm:$0xff] %v677
      %v679 = vpack.c.bf16 %v667, %v666
      %680 = vst [vmem:[%s267] sm:$0xff] %v679
      %v681 = vpack.c.bf16 %v668, %v668
      %v682 = vld [vmem:[%s3] sm:$0xf]
      %v683 = vld [vmem:[%s3 + $0x4] sm:$0xf]
      %v684 = vld [vmem:[%s3 + $0x8] sm:$0xf]
      %v685 = vld [vmem:[%s3 + $0xc] sm:$0xf]
      %v686 = vld [vmem:[%s3 + $0x10] sm:$0xf]
      %v687 = vld [vmem:[%s3 + $0x14] sm:$0xf]
      %v688 = vld [vmem:[%s3 + $0x18] sm:$0xf]
      %v689 = vld [vmem:[%s3 + $0x1c] sm:$0xf]
      %v690 = vld [vmem:[%s3 + $0x20] sm:$0xf]
      %v691 = vld [vmem:[%s3 + $0x24] sm:$0xf]
      %v692 = vld [vmem:[%s3 + $0x28] sm:$0xf]
      %v693 = vld [vmem:[%s3 + $0x2c] sm:$0xf]
      %v694 = vld [vmem:[%s3 + $0x30] sm:$0xf]
      %v695 = vld [vmem:[%s3 + $0x34] sm:$0xf]
      %v696 = vld [vmem:[%s3 + $0x38] sm:$0xf]
      %v697 = vld [vmem:[%s3 + $0x3c] sm:$0xf]
      %v714 = vunpack.c.l.b16 %v682
      %v715 = vunpack.c.l.b16 %v683
      %v716 = vunpack.c.l.b16 %v684
      %v717 = vunpack.c.l.b16 %v685
      %v718 = vunpack.c.l.b16 %v686
      %v719 = vunpack.c.l.b16 %v687
      %v720 = vunpack.c.l.b16 %v688
      %v721 = vunpack.c.l.b16 %v689
      %v722 = vunpack.c.l.b16 %v690
      %v723 = vunpack.c.l.b16 %v691
      %v724 = vunpack.c.l.b16 %v692
      %v725 = vunpack.c.l.b16 %v693
      %v726 = vunpack.c.l.b16 %v694
      %v727 = vunpack.c.l.b16 %v695
      %v728 = vunpack.c.l.b16 %v696
      %v729 = vunpack.c.l.b16 %v697
      %v730 = vpack.c.b16 %v715, %v714
      %v731 = vpack.c.b16 %v717, %v716
      %v732 = vpack.c.b16 %v719, %v718
      %v733 = vpack.c.b16 %v721, %v720
      %v734 = vpack.c.b16 %v723, %v722
      %v735 = vpack.c.b16 %v725, %v724
      %v736 = vpack.c.b16 %v727, %v726
      %v737 = vpack.c.b16 %v729, %v728
      %746 = vmatpush.bf16.msra.mxu0 %v737
      %747 = vmatpush.bf16.msra.mxu0 %v736
      %748 = vmatpush.bf16.msra.mxu0 %v735
      %749 = vmatpush.bf16.msra.mxu0 %v734
      %750 = vmatpush.bf16.msra.mxu0 %v733
      %751 = vmatpush.bf16.msra.mxu0 %v732
      %752 = vmatpush.bf16.msra.mxu0 %v731
      %753 = vmatpush.bf16.msra.mxu0 %v730
      %754 = vmatmul.bf16.gmra.mxu0 %v681
      %v755 = vpop.f32.mrf.mxu0
      %v756 = vadd.f32 0.0, %v755
      %v757 = vpop.f32.mrf.mxu0
      %758 = vdwg.mxu0
      %v759 = vpack.c.bf16 %v669, %v669
      %s760 = scalar_lea.vmem %s3, 64
      %v761 = vld [vmem:[%s760] sm:$0xf]
      %v762 = vld [vmem:[%s760 + $0x4] sm:$0xf]
      %v763 = vld [vmem:[%s760 + $0x8] sm:$0xf]
      %v764 = vld [vmem:[%s760 + $0xc] sm:$0xf]
      %v765 = vld [vmem:[%s760 + $0x10] sm:$0xf]
      %v766 = vld [vmem:[%s760 + $0x14] sm:$0xf]
      %v767 = vld [vmem:[%s760 + $0x18] sm:$0xf]
      %v768 = vld [vmem:[%s760 + $0x1c] sm:$0xf]
      %v769 = vld [vmem:[%s760 + $0x20] sm:$0xf]
      %v770 = vld [vmem:[%s760 + $0x24] sm:$0xf]
      %v771 = vld [vmem:[%s760 + $0x28] sm:$0xf]
      %v772 = vld [vmem:[%s760 + $0x2c] sm:$0xf]
      %v773 = vld [vmem:[%s760 + $0x30] sm:$0xf]
      %v774 = vld [vmem:[%s760 + $0x34] sm:$0xf]
      %v775 = vld [vmem:[%s760 + $0x38] sm:$0xf]
      %v776 = vld [vmem:[%s760 + $0x3c] sm:$0xf]
      %v793 = vunpack.c.l.b16 %v761
      %v794 = vunpack.c.l.b16 %v762
      %v795 = vunpack.c.l.b16 %v763
      %v796 = vunpack.c.l.b16 %v764
      %v797 = vunpack.c.l.b16 %v765
      %v798 = vunpack.c.l.b16 %v766
      %v799 = vunpack.c.l.b16 %v767
      %v800 = vunpack.c.l.b16 %v768
      %v801 = vunpack.c.l.b16 %v769
      %v802 = vunpack.c.l.b16 %v770
      %v803 = vunpack.c.l.b16 %v771
      %v804 = vunpack.c.l.b16 %v772
      %v805 = vunpack.c.l.b16 %v773
      %v806 = vunpack.c.l.b16 %v774
      %v807 = vunpack.c.l.b16 %v775
      %v808 = vunpack.c.l.b16 %v776
      %v809 = vpack.c.b16 %v794, %v793
      %v810 = vpack.c.b16 %v796, %v795
      %v811 = vpack.c.b16 %v798, %v797
      %v812 = vpack.c.b16 %v800, %v799
      %v813 = vpack.c.b16 %v802, %v801
      %v814 = vpack.c.b16 %v804, %v803
      %v815 = vpack.c.b16 %v806, %v805
      %v816 = vpack.c.b16 %v808, %v807
      %825 = vmatpush.bf16.msra.mxu0 %v816
      %826 = vmatpush.bf16.msra.mxu0 %v815
      %827 = vmatpush.bf16.msra.mxu0 %v814
      %828 = vmatpush.bf16.msra.mxu0 %v813
      %829 = vmatpush.bf16.msra.mxu0 %v812
      %830 = vmatpush.bf16.msra.mxu0 %v811
      %831 = vmatpush.bf16.msra.mxu0 %v810
      %832 = vmatpush.bf16.msra.mxu0 %v809
      %833 = vmatmul.bf16.gmra.mxu0 %v759
      %v834 = vpop.f32.mrf.mxu0
      %v835 = vadd.f32 0.0, %v834
      %v836 = vpop.f32.mrf.mxu0
      %837 = vdwg.mxu0
      %v838 = vpack.c.bf16 %v670, %v670
      %s839 = scalar_lea.vmem %s3, 128
      %v840 = vld [vmem:[%s839] sm:$0xf]
      %v841 = vld [vmem:[%s839 + $0x4] sm:$0xf]
      %v842 = vld [vmem:[%s839 + $0x8] sm:$0xf]
      %v843 = vld [vmem:[%s839 + $0xc] sm:$0xf]
      %v844 = vld [vmem:[%s839 + $0x10] sm:$0xf]
      %v845 = vld [vmem:[%s839 + $0x14] sm:$0xf]
      %v846 = vld [vmem:[%s839 + $0x18] sm:$0xf]
      %v847 = vld [vmem:[%s839 + $0x1c] sm:$0xf]
      %v848 = vld [vmem:[%s839 + $0x20] sm:$0xf]
      %v849 = vld [vmem:[%s839 + $0x24] sm:$0xf]
      %v850 = vld [vmem:[%s839 + $0x28] sm:$0xf]
      %v851 = vld [vmem:[%s839 + $0x2c] sm:$0xf]
      %v852 = vld [vmem:[%s839 + $0x30] sm:$0xf]
      %v853 = vld [vmem:[%s839 + $0x34] sm:$0xf]
      %v854 = vld [vmem:[%s839 + $0x38] sm:$0xf]
      %v855 = vld [vmem:[%s839 + $0x3c] sm:$0xf]
      %v872 = vunpack.c.l.b16 %v840
      %v873 = vunpack.c.l.b16 %v841
      %v874 = vunpack.c.l.b16 %v842
      %v875 = vunpack.c.l.b16 %v843
      %v876 = vunpack.c.l.b16 %v844
      %v877 = vunpack.c.l.b16 %v845
      %v878 = vunpack.c.l.b16 %v846
      %v879 = vunpack.c.l.b16 %v847
      %v880 = vunpack.c.l.b16 %v848
      %v881 = vunpack.c.l.b16 %v849
      %v882 = vunpack.c.l.b16 %v850
      %v883 = vunpack.c.l.b16 %v851
      %v884 = vunpack.c.l.b16 %v852
      %v885 = vunpack.c.l.b16 %v853
      %v886 = vunpack.c.l.b16 %v854
      %v887 = vunpack.c.l.b16 %v855
      %v888 = vpack.c.b16 %v873, %v872
      %v889 = vpack.c.b16 %v875, %v874
      %v890 = vpack.c.b16 %v877, %v876
      %v891 = vpack.c.b16 %v879, %v878
      %v892 = vpack.c.b16 %v881, %v880
      %v893 = vpack.c.b16 %v883, %v882
      %v894 = vpack.c.b16 %v885, %v884
      %v895 = vpack.c.b16 %v887, %v886
      %904 = vmatpush.bf16.msra.mxu0 %v895
      %905 = vmatpush.bf16.msra.mxu0 %v894
      %906 = vmatpush.bf16.msra.mxu0 %v893
      %907 = vmatpush.bf16.msra.mxu0 %v892
      %908 = vmatpush.bf16.msra.mxu0 %v891
      %909 = vmatpush.bf16.msra.mxu0 %v890
      %910 = vmatpush.bf16.msra.mxu0 %v889
      %911 = vmatpush.bf16.msra.mxu0 %v888
      %912 = vmatmul.bf16.gmra.mxu0 %v838
      %v913 = vpop.f32.mrf.mxu0
      %v914 = vadd.f32 0.0, %v913
      %v915 = vpop.f32.mrf.mxu0
      %916 = vdwg.mxu0
      %v917 = vpack.c.bf16 %v671, %v671
      %s918 = scalar_lea.vmem %s3, 192
      %v919 = vld [vmem:[%s918] sm:$0xf]
      %v920 = vld [vmem:[%s918 + $0x4] sm:$0xf]
      %v921 = vld [vmem:[%s918 + $0x8] sm:$0xf]
      %v922 = vld [vmem:[%s918 + $0xc] sm:$0xf]
      %v923 = vld [vmem:[%s918 + $0x10] sm:$0xf]
      %v924 = vld [vmem:[%s918 + $0x14] sm:$0xf]
      %v925 = vld [vmem:[%s918 + $0x18] sm:$0xf]
      %v926 = vld [vmem:[%s918 + $0x1c] sm:$0xf]
      %v927 = vld [vmem:[%s918 + $0x20] sm:$0xf]
      %v928 = vld [vmem:[%s918 + $0x24] sm:$0xf]
      %v929 = vld [vmem:[%s918 + $0x28] sm:$0xf]
      %v930 = vld [vmem:[%s918 + $0x2c] sm:$0xf]
      %v931 = vld [vmem:[%s918 + $0x30] sm:$0xf]
      %v932 = vld [vmem:[%s918 + $0x34] sm:$0xf]
      %v933 = vld [vmem:[%s918 + $0x38] sm:$0xf]
      %v934 = vld [vmem:[%s918 + $0x3c] sm:$0xf]
      %v951 = vunpack.c.l.b16 %v919
      %v952 = vunpack.c.l.b16 %v920
      %v953 = vunpack.c.l.b16 %v921
      %v954 = vunpack.c.l.b16 %v922
      %v955 = vunpack.c.l.b16 %v923
      %v956 = vunpack.c.l.b16 %v924
      %v957 = vunpack.c.l.b16 %v925
      %v958 = vunpack.c.l.b16 %v926
      %v959 = vunpack.c.l.b16 %v927
      %v960 = vunpack.c.l.b16 %v928
      %v961 = vunpack.c.l.b16 %v929
      %v962 = vunpack.c.l.b16 %v930
      %v963 = vunpack.c.l.b16 %v931
      %v964 = vunpack.c.l.b16 %v932
      %v965 = vunpack.c.l.b16 %v933
      %v966 = vunpack.c.l.b16 %v934
      %v967 = vpack.c.b16 %v952, %v951
      %v968 = vpack.c.b16 %v954, %v953
      %v969 = vpack.c.b16 %v956, %v955
      %v970 = vpack.c.b16 %v958, %v957
      %v971 = vpack.c.b16 %v960, %v959
      %v972 = vpack.c.b16 %v962, %v961
      %v973 = vpack.c.b16 %v964, %v963
      %v974 = vpack.c.b16 %v966, %v965
      %983 = vmatpush.bf16.msra.mxu0 %v974
      %984 = vmatpush.bf16.msra.mxu0 %v973
      %985 = vmatpush.bf16.msra.mxu0 %v972
      %986 = vmatpush.bf16.msra.mxu0 %v971
      %987 = vmatpush.bf16.msra.mxu0 %v970
      %988 = vmatpush.bf16.msra.mxu0 %v969
      %989 = vmatpush.bf16.msra.mxu0 %v968
      %990 = vmatpush.bf16.msra.mxu0 %v967
      %991 = vmatmul.bf16.gmra.mxu0 %v917
      %v992 = vpop.f32.mrf.mxu0
      %v993 = vadd.f32 0.0, %v992
      %v994 = vpop.f32.mrf.mxu0
      %995 = vdwg.mxu0
      %v996 = vpack.c.bf16 %v672, %v672
      %s997 = scalar_lea.vmem %s3, 256
      %v998 = vld [vmem:[%s997] sm:$0xf]
      %v999 = vld [vmem:[%s997 + $0x4] sm:$0xf]
      %v1000 = vld [vmem:[%s997 + $0x8] sm:$0xf]
      %v1001 = vld [vmem:[%s997 + $0xc] sm:$0xf]
      %v1002 = vld [vmem:[%s997 + $0x10] sm:$0xf]
      %v1003 = vld [vmem:[%s997 + $0x14] sm:$0xf]
      %v1004 = vld [vmem:[%s997 + $0x18] sm:$0xf]
      %v1005 = vld [vmem:[%s997 + $0x1c] sm:$0xf]
      %v1006 = vld [vmem:[%s997 + $0x20] sm:$0xf]
      %v1007 = vld [vmem:[%s997 + $0x24] sm:$0xf]
      %v1008 = vld [vmem:[%s997 + $0x28] sm:$0xf]
      %v1009 = vld [vmem:[%s997 + $0x2c] sm:$0xf]
      %v1010 = vld [vmem:[%s997 + $0x30] sm:$0xf]
      %v1011 = vld [vmem:[%s997 + $0x34] sm:$0xf]
      %v1012 = vld [vmem:[%s997 + $0x38] sm:$0xf]
      %v1013 = vld [vmem:[%s997 + $0x3c] sm:$0xf]
      %v1030 = vunpack.c.l.b16 %v998
      %v1031 = vunpack.c.l.b16 %v999
      %v1032 = vunpack.c.l.b16 %v1000
      %v1033 = vunpack.c.l.b16 %v1001
      %v1034 = vunpack.c.l.b16 %v1002
      %v1035 = vunpack.c.l.b16 %v1003
      %v1036 = vunpack.c.l.b16 %v1004
      %v1037 = vunpack.c.l.b16 %v1005
      %v1038 = vunpack.c.l.b16 %v1006
      %v1039 = vunpack.c.l.b16 %v1007
      %v1040 = vunpack.c.l.b16 %v1008
      %v1041 = vunpack.c.l.b16 %v1009
      %v1042 = vunpack.c.l.b16 %v1010
      %v1043 = vunpack.c.l.b16 %v1011
      %v1044 = vunpack.c.l.b16 %v1012
      %v1045 = vunpack.c.l.b16 %v1013
      %v1046 = vpack.c.b16 %v1031, %v1030
      %v1047 = vpack.c.b16 %v1033, %v1032
      %v1048 = vpack.c.b16 %v1035, %v1034
      %v1049 = vpack.c.b16 %v1037, %v1036
      %v1050 = vpack.c.b16 %v1039, %v1038
      %v1051 = vpack.c.b16 %v1041, %v1040
      %v1052 = vpack.c.b16 %v1043, %v1042
      %v1053 = vpack.c.b16 %v1045, %v1044
      %1062 = vmatpush.bf16.msra.mxu0 %v1053
      %1063 = vmatpush.bf16.msra.mxu0 %v1052
      %1064 = vmatpush.bf16.msra.mxu0 %v1051
      %1065 = vmatpush.bf16.msra.mxu0 %v1050
      %1066 = vmatpush.bf16.msra.mxu0 %v1049
      %1067 = vmatpush.bf16.msra.mxu0 %v1048
      %1068 = vmatpush.bf16.msra.mxu0 %v1047
      %1069 = vmatpush.bf16.msra.mxu0 %v1046
      %1070 = vmatmul.bf16.gmra.mxu0 %v996
      %v1071 = vpop.f32.mrf.mxu0
      %v1072 = vadd.f32 0.0, %v1071
      %v1073 = vpop.f32.mrf.mxu0
      %1074 = vdwg.mxu0
      %v1075 = vpack.c.bf16 %v673, %v673
      %s1076 = scalar_lea.vmem %s3, 320
      %v1077 = vld [vmem:[%s1076] sm:$0xf]
      %v1078 = vld [vmem:[%s1076 + $0x4] sm:$0xf]
      %v1079 = vld [vmem:[%s1076 + $0x8] sm:$0xf]
      %v1080 = vld [vmem:[%s1076 + $0xc] sm:$0xf]
      %v1081 = vld [vmem:[%s1076 + $0x10] sm:$0xf]
      %v1082 = vld [vmem:[%s1076 + $0x14] sm:$0xf]
      %v1083 = vld [vmem:[%s1076 + $0x18] sm:$0xf]
      %v1084 = vld [vmem:[%s1076 + $0x1c] sm:$0xf]
      %v1085 = vld [vmem:[%s1076 + $0x20] sm:$0xf]
      %v1086 = vld [vmem:[%s1076 + $0x24] sm:$0xf]
      %v1087 = vld [vmem:[%s1076 + $0x28] sm:$0xf]
      %v1088 = vld [vmem:[%s1076 + $0x2c] sm:$0xf]
      %v1089 = vld [vmem:[%s1076 + $0x30] sm:$0xf]
      %v1090 = vld [vmem:[%s1076 + $0x34] sm:$0xf]
      %v1091 = vld [vmem:[%s1076 + $0x38] sm:$0xf]
      %v1092 = vld [vmem:[%s1076 + $0x3c] sm:$0xf]
      %v1109 = vunpack.c.l.b16 %v1077
      %v1110 = vunpack.c.l.b16 %v1078
      %v1111 = vunpack.c.l.b16 %v1079
      %v1112 = vunpack.c.l.b16 %v1080
      %v1113 = vunpack.c.l.b16 %v1081
      %v1114 = vunpack.c.l.b16 %v1082
      %v1115 = vunpack.c.l.b16 %v1083
      %v1116 = vunpack.c.l.b16 %v1084
      %v1117 = vunpack.c.l.b16 %v1085
      %v1118 = vunpack.c.l.b16 %v1086
      %v1119 = vunpack.c.l.b16 %v1087
      %v1120 = vunpack.c.l.b16 %v1088
      %v1121 = vunpack.c.l.b16 %v1089
      %v1122 = vunpack.c.l.b16 %v1090
      %v1123 = vunpack.c.l.b16 %v1091
      %v1124 = vunpack.c.l.b16 %v1092
      %v1125 = vpack.c.b16 %v1110, %v1109
      %v1126 = vpack.c.b16 %v1112, %v1111
      %v1127 = vpack.c.b16 %v1114, %v1113
      %v1128 = vpack.c.b16 %v1116, %v1115
      %v1129 = vpack.c.b16 %v1118, %v1117
      %v1130 = vpack.c.b16 %v1120, %v1119
      %v1131 = vpack.c.b16 %v1122, %v1121
      %v1132 = vpack.c.b16 %v1124, %v1123
      %1141 = vmatpush.bf16.msra.mxu0 %v1132
      %1142 = vmatpush.bf16.msra.mxu0 %v1131
      %1143 = vmatpush.bf16.msra.mxu0 %v1130
      %1144 = vmatpush.bf16.msra.mxu0 %v1129
      %1145 = vmatpush.bf16.msra.mxu0 %v1128
      %1146 = vmatpush.bf16.msra.mxu0 %v1127
      %1147 = vmatpush.bf16.msra.mxu0 %v1126
      %1148 = vmatpush.bf16.msra.mxu0 %v1125
      %1149 = vmatmul.bf16.gmra.mxu0 %v1075
      %v1150 = vpop.f32.mrf.mxu0
      %v1151 = vadd.f32 0.0, %v1150
      %v1152 = vpop.f32.mrf.mxu0
      %1153 = vdwg.mxu0
      %v1154 = vpack.c.bf16 %v674, %v674
      %s1155 = scalar_lea.vmem %s3, 384
      %v1156 = vld [vmem:[%s1155] sm:$0xf]
      %v1157 = vld [vmem:[%s1155 + $0x4] sm:$0xf]
      %v1158 = vld [vmem:[%s1155 + $0x8] sm:$0xf]
      %v1159 = vld [vmem:[%s1155 + $0xc] sm:$0xf]
      %v1160 = vld [vmem:[%s1155 + $0x10] sm:$0xf]
      %v1161 = vld [vmem:[%s1155 + $0x14] sm:$0xf]
      %v1162 = vld [vmem:[%s1155 + $0x18] sm:$0xf]
      %v1163 = vld [vmem:[%s1155 + $0x1c] sm:$0xf]
      %v1164 = vld [vmem:[%s1155 + $0x20] sm:$0xf]
      %v1165 = vld [vmem:[%s1155 + $0x24] sm:$0xf]
      %v1166 = vld [vmem:[%s1155 + $0x28] sm:$0xf]
      %v1167 = vld [vmem:[%s1155 + $0x2c] sm:$0xf]
      %v1168 = vld [vmem:[%s1155 + $0x30] sm:$0xf]
      %v1169 = vld [vmem:[%s1155 + $0x34] sm:$0xf]
      %v1170 = vld [vmem:[%s1155 + $0x38] sm:$0xf]
      %v1171 = vld [vmem:[%s1155 + $0x3c] sm:$0xf]
      %v1188 = vunpack.c.l.b16 %v1156
      %v1189 = vunpack.c.l.b16 %v1157
      %v1190 = vunpack.c.l.b16 %v1158
      %v1191 = vunpack.c.l.b16 %v1159
      %v1192 = vunpack.c.l.b16 %v1160
      %v1193 = vunpack.c.l.b16 %v1161
      %v1194 = vunpack.c.l.b16 %v1162
      %v1195 = vunpack.c.l.b16 %v1163
      %v1196 = vunpack.c.l.b16 %v1164
      %v1197 = vunpack.c.l.b16 %v1165
      %v1198 = vunpack.c.l.b16 %v1166
      %v1199 = vunpack.c.l.b16 %v1167
      %v1200 = vunpack.c.l.b16 %v1168
      %v1201 = vunpack.c.l.b16 %v1169
      %v1202 = vunpack.c.l.b16 %v1170
      %v1203 = vunpack.c.l.b16 %v1171
      %v1204 = vpack.c.b16 %v1189, %v1188
      %v1205 = vpack.c.b16 %v1191, %v1190
      %v1206 = vpack.c.b16 %v1193, %v1192
      %v1207 = vpack.c.b16 %v1195, %v1194
      %v1208 = vpack.c.b16 %v1197, %v1196
      %v1209 = vpack.c.b16 %v1199, %v1198
      %v1210 = vpack.c.b16 %v1201, %v1200
      %v1211 = vpack.c.b16 %v1203, %v1202
      %1220 = vmatpush.bf16.msra.mxu0 %v1211
      %1221 = vmatpush.bf16.msra.mxu0 %v1210
      %1222 = vmatpush.bf16.msra.mxu0 %v1209
      %1223 = vmatpush.bf16.msra.mxu0 %v1208
      %1224 = vmatpush.bf16.msra.mxu0 %v1207
      %1225 = vmatpush.bf16.msra.mxu0 %v1206
      %1226 = vmatpush.bf16.msra.mxu0 %v1205
      %1227 = vmatpush.bf16.msra.mxu0 %v1204
      %1228 = vmatmul.bf16.gmra.mxu0 %v1154
      %v1229 = vpop.f32.mrf.mxu0
      %v1230 = vadd.f32 0.0, %v1229
      %v1231 = vpop.f32.mrf.mxu0
      %1232 = vdwg.mxu0
      %v1233 = vpack.c.bf16 %v675, %v675
      %s1234 = scalar_lea.vmem %s3, 448
      %v1235 = vld [vmem:[%s1234] sm:$0xf]
      %v1236 = vld [vmem:[%s1234 + $0x4] sm:$0xf]
      %v1237 = vld [vmem:[%s1234 + $0x8] sm:$0xf]
      %v1238 = vld [vmem:[%s1234 + $0xc] sm:$0xf]
      %v1239 = vld [vmem:[%s1234 + $0x10] sm:$0xf]
      %v1240 = vld [vmem:[%s1234 + $0x14] sm:$0xf]
      %v1241 = vld [vmem:[%s1234 + $0x18] sm:$0xf]
      %v1242 = vld [vmem:[%s1234 + $0x1c] sm:$0xf]
      %v1243 = vld [vmem:[%s1234 + $0x20] sm:$0xf]
      %v1244 = vld [vmem:[%s1234 + $0x24] sm:$0xf]
      %v1245 = vld [vmem:[%s1234 + $0x28] sm:$0xf]
      %v1246 = vld [vmem:[%s1234 + $0x2c] sm:$0xf]
      %v1247 = vld [vmem:[%s1234 + $0x30] sm:$0xf]
      %v1248 = vld [vmem:[%s1234 + $0x34] sm:$0xf]
      %v1249 = vld [vmem:[%s1234 + $0x38] sm:$0xf]
      %v1250 = vld [vmem:[%s1234 + $0x3c] sm:$0xf]
      %v1267 = vunpack.c.l.b16 %v1235
      %v1268 = vunpack.c.l.b16 %v1236
      %v1269 = vunpack.c.l.b16 %v1237
      %v1270 = vunpack.c.l.b16 %v1238
      %v1271 = vunpack.c.l.b16 %v1239
      %v1272 = vunpack.c.l.b16 %v1240
      %v1273 = vunpack.c.l.b16 %v1241
      %v1274 = vunpack.c.l.b16 %v1242
      %v1275 = vunpack.c.l.b16 %v1243
      %v1276 = vunpack.c.l.b16 %v1244
      %v1277 = vunpack.c.l.b16 %v1245
      %v1278 = vunpack.c.l.b16 %v1246
      %v1279 = vunpack.c.l.b16 %v1247
      %v1280 = vunpack.c.l.b16 %v1248
      %v1281 = vunpack.c.l.b16 %v1249
      %v1282 = vunpack.c.l.b16 %v1250
      %v1283 = vpack.c.b16 %v1268, %v1267
      %v1284 = vpack.c.b16 %v1270, %v1269
      %v1285 = vpack.c.b16 %v1272, %v1271
      %v1286 = vpack.c.b16 %v1274, %v1273
      %v1287 = vpack.c.b16 %v1276, %v1275
      %v1288 = vpack.c.b16 %v1278, %v1277
      %v1289 = vpack.c.b16 %v1280, %v1279
      %v1290 = vpack.c.b16 %v1282, %v1281
      %1299 = vmatpush.bf16.msra.mxu0 %v1290
      %1300 = vmatpush.bf16.msra.mxu0 %v1289
      %1301 = vmatpush.bf16.msra.mxu0 %v1288
      %1302 = vmatpush.bf16.msra.mxu0 %v1287
      %1303 = vmatpush.bf16.msra.mxu0 %v1286
      %1304 = vmatpush.bf16.msra.mxu0 %v1285
      %1305 = vmatpush.bf16.msra.mxu0 %v1284
      %1306 = vmatpush.bf16.msra.mxu0 %v1283
      %1307 = vmatmul.bf16.gmra.mxu0 %v1233
      %v1308 = vpop.f32.mrf.mxu0
      %v1309 = vadd.f32 0.0, %v1308
      %v1310 = vpop.f32.mrf.mxu0
      %1311 = vdwg.mxu0
      %v1312 = vpack.c.bf16 %v676, %v676
      %s1313 = scalar_lea.vmem %s3, 512
      %v1314 = vld [vmem:[%s1313] sm:$0xf]
      %v1315 = vld [vmem:[%s1313 + $0x4] sm:$0xf]
      %v1316 = vld [vmem:[%s1313 + $0x8] sm:$0xf]
      %v1317 = vld [vmem:[%s1313 + $0xc] sm:$0xf]
      %v1318 = vld [vmem:[%s1313 + $0x10] sm:$0xf]
      %v1319 = vld [vmem:[%s1313 + $0x14] sm:$0xf]
      %v1320 = vld [vmem:[%s1313 + $0x18] sm:$0xf]
      %v1321 = vld [vmem:[%s1313 + $0x1c] sm:$0xf]
      %v1322 = vld [vmem:[%s1313 + $0x20] sm:$0xf]
      %v1323 = vld [vmem:[%s1313 + $0x24] sm:$0xf]
      %v1324 = vld [vmem:[%s1313 + $0x28] sm:$0xf]
      %v1325 = vld [vmem:[%s1313 + $0x2c] sm:$0xf]
      %v1326 = vld [vmem:[%s1313 + $0x30] sm:$0xf]
      %v1327 = vld [vmem:[%s1313 + $0x34] sm:$0xf]
      %v1328 = vld [vmem:[%s1313 + $0x38] sm:$0xf]
      %v1329 = vld [vmem:[%s1313 + $0x3c] sm:$0xf]
      %v1346 = vunpack.c.l.b16 %v1314
      %v1347 = vunpack.c.l.b16 %v1315
      %v1348 = vunpack.c.l.b16 %v1316
      %v1349 = vunpack.c.l.b16 %v1317
      %v1350 = vunpack.c.l.b16 %v1318
      %v1351 = vunpack.c.l.b16 %v1319
      %v1352 = vunpack.c.l.b16 %v1320
      %v1353 = vunpack.c.l.b16 %v1321
      %v1354 = vunpack.c.l.b16 %v1322
      %v1355 = vunpack.c.l.b16 %v1323
      %v1356 = vunpack.c.l.b16 %v1324
      %v1357 = vunpack.c.l.b16 %v1325
      %v1358 = vunpack.c.l.b16 %v1326
      %v1359 = vunpack.c.l.b16 %v1327
      %v1360 = vunpack.c.l.b16 %v1328
      %v1361 = vunpack.c.l.b16 %v1329
      %v1362 = vpack.c.b16 %v1347, %v1346
      %v1363 = vpack.c.b16 %v1349, %v1348
      %v1364 = vpack.c.b16 %v1351, %v1350
      %v1365 = vpack.c.b16 %v1353, %v1352
      %v1366 = vpack.c.b16 %v1355, %v1354
      %v1367 = vpack.c.b16 %v1357, %v1356
      %v1368 = vpack.c.b16 %v1359, %v1358
      %v1369 = vpack.c.b16 %v1361, %v1360
      %1378 = vmatpush.bf16.msra.mxu0 %v1369
      %1379 = vmatpush.bf16.msra.mxu0 %v1368
      %1380 = vmatpush.bf16.msra.mxu0 %v1367
      %1381 = vmatpush.bf16.msra.mxu0 %v1366
      %1382 = vmatpush.bf16.msra.mxu0 %v1365
      %1383 = vmatpush.bf16.msra.mxu0 %v1364
      %1384 = vmatpush.bf16.msra.mxu0 %v1363
      %1385 = vmatpush.bf16.msra.mxu0 %v1362
      %1386 = vmatmul.bf16.gmra.mxu0 %v1312
      %v1387 = vpop.f32.mrf.mxu0
      %v1388 = vadd.f32 0.0, %v1387
      %v1389 = vpop.f32.mrf.mxu0
      %1390 = vdwg.mxu0
      %1392 = vrot.lane.b32.xlu0 %v835, 8
      %v1393 = vpop.permute.xlu0 %1392
      %1396 = vrot.lane.b32.xlu0 %v914, 16
      %v1397 = vpop.permute.xlu0 %1396
      %1400 = vrot.lane.b32.xlu0 %v993, 24
      %v1401 = vpop.permute.xlu0 %1400
      %1404 = vrot.lane.b32.xlu0 %v1072, 32
      %v1405 = vpop.permute.xlu0 %1404
      %1408 = vrot.lane.b32.xlu0 %v1151, 40
      %v1409 = vpop.permute.xlu0 %1408
      %1412 = vrot.lane.b32.xlu0 %v1230, 48
      %v1413 = vpop.permute.xlu0 %1412
      %1416 = vrot.lane.b32.xlu0 %v1309, 56
      %v1417 = vpop.permute.xlu0 %1416
      %1420 = vrot.lane.b32.xlu0 %v1388, 64
      %v1421 = vpop.permute.xlu0 %1420
      %vm1423 = vcmask 64512
      %v1424 = vsel %vm1423, %v756, %v1393
      %vm1425 = vcmask 130048
      %v1426 = vsel %vm1425, %v1424, %v1397
      %vm1427 = vcmask 195584
      %v1428 = vsel %vm1427, %v1426, %v1401
      %v1429 = vsel %vm465, %v1428, %v1405
      %vm1430 = vcmask 326656
      %v1431 = vsel %vm1430, %v1429, %v1409
      %vm1432 = vcmask 392192
      %v1433 = vsel %vm1432, %v1431, %v1413
      %vm1434 = vcmask 457728
      %v1435 = vsel %vm1434, %v1433, %v1417
      %vm1436 = vcmask 523264
      %v1437 = vsel %vm1436, %v1435, %v1421
      %v1438 = vmul.f32 %v1437, 0.561231
      %vm1439 = vcmask 588800
      %1440 = vst.msk [vmem:[%s271] sm:$0xff] %vm1439, %v1438
      %p1441 = scmp.lt.s32.totalorder %s18, 1
      %s1442 = scalar_select %p1441, %s18, 1
      %s1443 = smul.addr %s1442, 2
      %s1444 = smul.addr %s1443, 4
      %s1445 = scalar_lea.vmem %s4, %s1444
      %p1446 = scmp.lt.s32.totalorder %s18, 1
      %s1447 = scalar_select %p1446, %s18, 1
      %s1448 = smul.addr %s1447, 2
      %s1449 = smul.addr %s1448, 4
      %s1450 = scalar_lea.vmem %s5, %s1449
      %p1451 = scmp.lt.s32.totalorder %s18, 1
      %s1452 = scalar_select %p1451, %s18, 1
      %s1453 = smul.addr %s1452, 8
      %s1454 = scalar_lea.vmem %s6, %s1453
      // Predicated region
      $region37: #{mf_second_order_dp_scorer.3} parent=35 // pred_check
        %p1455 = pneg %p125
      $region38: #{mf_second_order_dp_scorer.3} parent=35 // pred_check_branch
        %1457 = sbr.rel (%p1455) target = $region40
      $region39: #{mf_second_order_dp_scorer.3} parent=35 // pred_region
        _
      $region40: #{mf_second_order_dp_scorer.3} parent=35 // pred_fallthru
        _
      // Predicated region
      $region41: #{mf_second_order_dp_scorer.3} parent=35 // pred_check
        %p1458 = pneg %p151
      $region42: #{mf_second_order_dp_scorer.3} parent=35 // pred_check_branch
        %1460 = sbr.rel (%p1458) target = $region44
      $region43: #{mf_second_order_dp_scorer.3} parent=35 // pred_region
        _
      $region44: #{mf_second_order_dp_scorer.3} parent=35 // pred_fallthru
        _
      // Predicated region
      $region45: #{mf_second_order_dp_scorer.3} parent=35 // pred_check
        %p1461 = pneg %p177
      $region46: #{mf_second_order_dp_scorer.3} parent=35 // pred_check_branch
        %1463 = sbr.rel (%p1461) target = $region48
      $region47: #{mf_second_order_dp_scorer.3} parent=35 // pred_region
        _
      $region48: #{mf_second_order_dp_scorer.3} parent=35 // pred_fallthru
        _
    $region36: #{mf_second_order_dp_scorer.3} parent=5 // pred_fallthru
      _
    %p1464 = scmp.le.s32.totalorder 2, %s13
    // Predicated region
    $region49: #{mf_second_order_dp_scorer.3} parent=5 // pred_check
      %p1465 = pneg %p1464
    $region50: #{mf_second_order_dp_scorer.3} parent=5 // pred_check_branch
      %1467 = sbr.rel (%p1465) target = $region52
    $region51: #{mf_second_order_dp_scorer.3} parent=5 // pred_region
      %s1468 = ssub.s32 %s13, 2
      // Predicated region
      $region53: #{mf_second_order_dp_scorer.3} parent=51 // pred_check
        %p1469 = pneg %p131
      $region54: #{mf_second_order_dp_scorer.3} parent=51 // pred_check_branch
        %1471 = sbr.rel (%p1469) target = $region56
      $region55: #{mf_second_order_dp_scorer.3} parent=51 // pred_region
        %p1472 = scmp.lt.s32.totalorder %s19, 1
        %s1473 = scalar_select %p1472, %s19, 1
        %s1474 = smul.addr %s1473, 2
        %s1475 = smul.addr %s1474, 4
        %s1476 = scalar_lea.vmem %s4, %s1475
      $region56: #{mf_second_order_dp_scorer.3} parent=51 // pred_fallthru
        _
      // Predicated region
      $region57: #{mf_second_order_dp_scorer.3} parent=51 // pred_check
        %p1477 = pneg %p157
      $region58: #{mf_second_order_dp_scorer.3} parent=51 // pred_check_branch
        %1479 = sbr.rel (%p1477) target = $region60
      $region59: #{mf_second_order_dp_scorer.3} parent=51 // pred_region
        %p1480 = scmp.lt.s32.totalorder %s19, 1
        %s1481 = scalar_select %p1480, %s19, 1
        %s1482 = smul.addr %s1481, 2
        %s1483 = smul.addr %s1482, 4
        %s1484 = scalar_lea.vmem %s5, %s1483
      $region60: #{mf_second_order_dp_scorer.3} parent=51 // pred_fallthru
        _
      // Predicated region
      $region61: #{mf_second_order_dp_scorer.3} parent=51 // pred_check
        %p1485 = pneg %p183
      $region62: #{mf_second_order_dp_scorer.3} parent=51 // pred_check_branch
        %1487 = sbr.rel (%p1485) target = $region64
      $region63: #{mf_second_order_dp_scorer.3} parent=51 // pred_region
        %p1488 = scmp.lt.s32.totalorder %s19, 1
        %s1489 = scalar_select %p1488, %s19, 1
        %s1490 = smul.addr %s1489, 8
        %s1491 = scalar_lea.vmem %s6, %s1490
      $region64: #{mf_second_order_dp_scorer.3} parent=51 // pred_fallthru
        _
    $region52: #{mf_second_order_dp_scorer.3} parent=5 // pred_fallthru
      _
  $region6: #{mf_second_order_dp_scorer.3} parent=0 // loop_footer
    %s17 = sadd.s32 1, %s13
  $region7: #{mf_second_order_dp_scorer.3} parent=0 // loop_footer_branch
    %12 = sbr.rel target = $region3
  $region8: #{mf_second_order_dp_scorer.3} parent=0 // loop_exit
    _

</llo_original>
